<compile_context>
chip_gen: v6e
topology: v6e:2x2x1
jax: 0.10.0
libtpu: 0.0.40
codegen_flags: <defaults>
</compile_context>

<pallas_src>
import functools

import jax
import jax.numpy as jnp
from jax import lax
from jax.experimental import pallas as pl
from jax.experimental.pallas import tpu as pltpu


# -----------------------------------------------------------------------------
# Kernel
# -----------------------------------------------------------------------------

def _conv_h_taps(h, H):
    """h: (B*H, C) rows of B images stacked.  Returns (h[i-1], h[i], h[i+1])
    per row, with the neighbours zeroed at each image's top/bottom row (the
    3x3 conv's H halo).  Shifts use the XLU (pltpu.roll) on one aligned value
    — no sublane-unaligned slices — and image boundaries inside the batched
    block are respected via cheap VPU masks."""
    M, C = h.shape
    n_img = M // H
    g = lax.broadcasted_iota(jnp.int32, (M, C), 0)          # global row index
    top = g == 0
    bot = g == H - 1
    for b in range(1, n_img):                               # static unroll, B <= ~8
        top = jnp.logical_or(top, g == b * H)
        bot = jnp.logical_or(bot, g == b * H + H - 1)
    zero = jnp.zeros_like(h)
    up = jnp.where(top, zero, pltpu.roll(h, shift=1, axis=0))        # h[i-1]
    dn = jnp.where(bot, zero, pltpu.roll(h, shift=M - 1, axis=0))    # h[i+1]
    return up, h, dn


def basic_block_kernel(x_ref, wc1_ref, b1d_ref, wc2_ref, b2_ref, out_ref, *, H):
    # x_ref  : (B*H, 3*W*Cin) conv1 im2col rows  [row i-1 | row i | row i+1]
    # wc1_ref: (3*W*Cin, 2*W*Cp) conv1 K-stacked bands (bn1 scale folded in),
    #          with the 1x1 downsample fused into output lanes [W*Cp : 2*W*Cp)
    # b1d_ref: (1, 2*W*Cp)   [bn1 bias | downsample bias]
    # wc2_ref: (3*W*Cp, W*Cp) conv2 K-stacked bands (bn2 scale folded in)
    # b2_ref : (1, W*Cp)     bn2 bias
    # out_ref: (B*H, W*Cp)
    WCp = out_ref.shape[1]

    # conv1 + bn1 (+ fused 1x1 downsample): ONE deep matmul.
    # K = 3*W*Cin, output = 2*W*Cp lanes (fills the 256-wide MXU on v6e/v7x).
    acc1 = jnp.dot(x_ref[...], wc1_ref[...], preferred_element_type=jnp.float32)
    acc1 = acc1 + b1d_ref[...]
    h1 = jnp.maximum(acc1[:, :WCp], 0.0)           # conv1 -> bn1 -> relu
    res = acc1[:, WCp:]                            # downsample(x) residual branch

    # conv2 + bn2: build the three H-tap rows from h1 (XLU rolls, no unaligned
    # slices), lane-concat to K = 3*W*Cp, one deep matmul (in-MXU accumulation).
    up, mid, dn = _conv_h_taps(h1.astype(wc2_ref.dtype), H)
    if WCp % 128 == 0:
        l2 = jnp.concatenate([up, mid, dn], axis=-1)          # lane-tile aligned
        acc2 = jnp.dot(l2, wc2_ref[...], preferred_element_type=jnp.float32)
    else:
        # Lane-unaligned shapes: fall back to three accumulating matmuls.
        acc2 = jnp.dot(up, wc2_ref[0:WCp, :], preferred_element_type=jnp.float32)
        acc2 += jnp.dot(mid, wc2_ref[WCp:2 * WCp, :], preferred_element_type=jnp.float32)
        acc2 += jnp.dot(dn, wc2_ref[2 * WCp:, :], preferred_element_type=jnp.float32)

    out_ref[...] = jnp.maximum(acc2 + b2_ref[...] + res, 0.0).astype(out_ref.dtype)


# -----------------------------------------------------------------------------
# Weight preparation (hoisted: call ONCE per parameter set, not per forward)
# -----------------------------------------------------------------------------

def _band_conv3x3(w_hwio, W):
    """Fold the W-direction taps + W zero-padding of a 3x3 SAME conv into a
    K-stacked banded matrix (3*W*Cin, W*Cout); K rows are grouped by H-tap
    dh = 0, 1, 2 so that  out_row[i] = [xpad[i] | xpad[i+1] | xpad[i+2]] @ Wc."""
    _, _, Cin, Cout = w_hwio.shape
    jp = jnp.arange(W)[:, None]          # source (input) column
    j = jnp.arange(W)[None, :]           # destination (output) column
    dw = jp - j + 1                      # horizontal tap index
    valid = (dw >= 0) & (dw <= 2)
    dw_c = jnp.clip(dw, 0, 2)
    bands = []
    for dh in range(3):
        taps = w_hwio[dh][dw_c]                                    # (W, W, Cin, Cout)
        taps = jnp.where(valid[:, :, None, None], taps, 0.0)
        bands.append(jnp.transpose(taps, (0, 2, 1, 3)).reshape(W * Cin, W * Cout))
    return jnp.concatenate(bands, axis=0)                          # (3*W*Cin, W*Cout)


def _blockdiag_1x1(wd, W):
    """1x1 conv as a block-diagonal (W*Cin, W*Cout) matrix."""
    Cin, Cout = wd.shape
    eye = jnp.eye(W, dtype=wd.dtype)[:, None, :, None]             # (W,1,W,1)
    return (eye * wd[None, :, None, :]).reshape(W * Cin, W * Cout)


def prepare_basic_block(params, W, *, compute_dtype=jnp.float32, eps=1e-5):
    """Fold eval-mode BN into the conv weights and bake the W taps/padding into
    banded matrices.  NOTE: the module's auto downsample (inplanes != planes)
    is a plain Conv2d(1x1) WITH bias and WITHOUT BatchNorm — matched here.
    Perf note: W*Cp (output lanes) should be a multiple of 128 to avoid masked
    partial stores; non-multiples still run correctly."""
    Cin, Cp = params["w1"].shape[2], params["w1"].shape[3]
    s1 = params["g1"] / jnp.sqrt(params["v1"] + eps)
    b1 = params["beta1"] - params["m1"] * s1
    s2 = params["g2"] / jnp.sqrt(params["v2"] + eps)
    b2 = params["beta2"] - params["m2"] * s2

    B1 = _band_conv3x3(params["w1"] * s1, W)                       # (3*W*Cin, W*Cp)
    B2 = _band_conv3x3(params["w2"] * s2, W)                       # (3*W*Cp,  W*Cp)

    wd = params.get("wd")
    bd = params.get("bd")
    if wd is None:                     # identity residual (inplanes == planes)
        wd = jnp.eye(Cin, dtype=jnp.float32)
        bd = jnp.zeros((Cp,), jnp.float32)
    Bd = _blockdiag_1x1(wd, W)                                     # (W*Cin, W*Cp)

    WCin, WCp = W * Cin, W * Cp
    # Fuse the 1x1 downsample into conv1's output lanes: only the centre H-tap
    # (K rows WCin .. 2*WCin) feeds the downsample columns.
    right = jnp.zeros((3 * WCin, WCp), B1.dtype).at[WCin:2 * WCin].set(Bd)
    wc1 = jnp.concatenate([B1, right], axis=1)                     # (3*W*Cin, 2*W*Cp)

    b1d = jnp.concatenate([jnp.tile(b1, (W,)), jnp.tile(bd, (W,))]).reshape(1, 2 * WCp)
    b2t = jnp.tile(b2, (W,)).reshape(1, WCp)

    return dict(wc1=wc1.astype(compute_dtype), wc2=B2.astype(compute_dtype),
                b1d=b1d.astype(jnp.float32), b2=b2t.astype(jnp.float32),
                W=W, Cin=Cin, Cp=Cp, compute_dtype=compute_dtype)


# -----------------------------------------------------------------------------
# Forward wrappers
# -----------------------------------------------------------------------------

def _pick_batch_block(N, H):
    """Smallest divisor B of N with B*H >= 128 (fills the MXU M dimension),
    else the largest divisor that keeps >= 2 grid steps (so a v7x megacore can
    put one step on each TensorCore)."""
    best = 1
    for b in range(1, N + 1):
        if N % b:
            continue
        if N >= 2 and N // b < 2:
            continue
        best = b
        if b * H >= 128:
            break
    return best


_SINGLE_BUFFER_WEIGHTS = True   # flipped off if this JAX rejects pl.Buffered(1)


def basic_block_rowmajor(x_rm, prep, *, batch_block=None, out_dtype=jnp.float32):
    """x_rm: (N, H, W*Cin) row-major activations -> (N, H, W*Cp).
    Use this entry point when chaining blocks (no NCHW transposes)."""
    global _SINGLE_BUFFER_WEIGHTS
    N, H, WCin = x_rm.shape
    W, Cin, Cp = prep["W"], prep["Cin"], prep["Cp"]
    assert WCin == W * Cin, (WCin, W, Cin)
    WCp = W * Cp
    B = batch_block if batch_block is not None else _pick_batch_block(N, H)
    assert N % B == 0, (N, B)

    # conv1's im2col LHS, built once per call in XLA: per output row i the
    # lanes are [x_pad[i] | x_pad[i+1] | x_pad[i+2]]  (H zero-halo; the W halo
    # lives in the banded weights).  This keeps the kernel free of
    # sublane-unaligned slices and gives a deep K = 3*W*Cin contraction.
    xp = jnp.pad(x_rm, ((0, 0), (1, 1), (0, 0)))
    x2d = jnp.concatenate([xp[:, 0:H], xp[:, 1:H + 1], xp[:, 2:H + 2]], axis=-1)
    x2d = x2d.reshape(N * H, 3 * WCin).astype(prep["compute_dtype"])

    def run(single_buffer):
        pm = dict(pipeline_mode=pl.Buffered(1)) if single_buffer else {}
        wspec = lambda r, c: pl.BlockSpec((r, c), lambda n: (0, 0), **pm)
        return pl.pallas_call(
            functools.partial(basic_block_kernel, H=H),
            out_shape=jax.ShapeDtypeStruct((N * H, WCp), out_dtype),
            grid=(N // B,),
            in_specs=[
                pl.BlockSpec((B * H, 3 * WCin), lambda n: (n, 0)),
                wspec(3 * WCin, 2 * WCp),
                wspec(1, 2 * WCp),
                wspec(3 * WCp, WCp),
                wspec(1, WCp),
            ],
            out_specs=pl.BlockSpec((B * H, WCp), lambda n: (n, 0)),
            compiler_params=pltpu.CompilerParams(
                dimension_semantics=("parallel",),        # shard batch over TCs
                vmem_limit_bytes=32 * 1024 * 1024),
        )(x2d, prep["wc1"], prep["b1d"], prep["wc2"], prep["b2"])

    # TODO(synk): for large W*C the banded weights grow as 3*(W*C)^2 and need a
    # K-grid accumulator (pl.when init/finalize) before they fit v7x's 64 MiB VMEM.
    if _SINGLE_BUFFER_WEIGHTS:
        try:
            out2d = jax.block_until_ready(run(True))
            return out2d.reshape(N, H, WCp)
        except Exception:
            _SINGLE_BUFFER_WEIGHTS = False   # this JAX rejects buffer_count=1
    return run(False).reshape(N, H, WCp)


def basic_block_forward(x_nchw, prep, *, batch_block=None, out_dtype=jnp.float32):
    """NCHW boundary wrapper: (N, Cin, H, W) -> (N, Cp, H, W)."""
    # TODO(synk): only stride=1 is implemented (the module's auto 1x1 downsample
    # branch exercised here is only shape-consistent for stride=1).
    # TODO(synk): bf16 compute/out path exists but is not tolerance-tested here.
    N, Cin, H, W = x_nchw.shape
    assert Cin == prep["Cin"] and W == prep["W"]
    x_rm = jnp.transpose(x_nchw, (0, 2, 3, 1)).reshape(N, H, W * Cin).astype(jnp.float32)
    y = basic_block_rowmajor(x_rm, prep, batch_block=batch_block, out_dtype=out_dtype)
    Cp = prep["Cp"]
    return jnp.transpose(y.reshape(N, H, W, Cp), (0, 3, 1, 2))


def basic_block_reference(x_nchw, params):
    """Pure-JAX reference (same eval-mode BN semantics) for correctness check."""
    x = jnp.transpose(x_nchw, (0, 2, 3, 1)).astype(jnp.float32)
    Cin, Cp = params["w1"].shape[2], params["w1"].shape[3]
    eps = 1e-5
    dn = ("NHWC", "HWIO", "NHWC")
    s1 = params["g1"] / jnp.sqrt(params["v1"] + eps)
    b1 = params["beta1"] - params["m1"] * s1
    s2 = params["g2"] / jnp.sqrt(params["v2"] + eps)
    b2 = params["beta2"] - params["m2"] * s2
    h = lax.conv_general_dilated(x, params["w1"], (1, 1), "SAME", dimension_numbers=dn)
    h = jnp.maximum(h * s1 + b1, 0.0)
    h = lax.conv_general_dilated(h, params["w2"], (1, 1), "SAME", dimension_numbers=dn)
    h = h * s2 + b2
    res = lax.conv_general_dilated(x, params["wd"].reshape(1, 1, Cin, Cp),
                                   (1, 1), "VALID", dimension_numbers=dn) + params["bd"]
    out = jnp.maximum(h + res, 0.0)
    return jnp.transpose(out, (0, 3, 1, 2))


if __name__ == "__main__":
    # inplanes=4, planes=8 (so the module's auto 1x1-downsample branch is
    # exercised), stride=1, spatial 16x16, batch=16 so the kernel batches
    # B=8 images per grid step (M = B*H = 128 MXU rows) across 2 grid steps.
    N, Cin, Cp, H, W = 16, 4, 8, 16, 16

    keys = jax.random.split(jax.random.PRNGKey(0), 11)
    params = {
        "w1": 0.1 * jax.random.normal(keys[0], (3, 3, Cin, Cp), jnp.float32),
        "w2": 0.1 * jax.random.normal(keys[1], (3, 3, Cp, Cp), jnp.float32),
        "wd": 0.1 * jax.random.normal(keys[2], (Cin, Cp), jnp.float32),
        "bd": 0.1 * jax.random.normal(keys[3], (Cp,), jnp.float32),
        "g1": jax.random.uniform(keys[4], (Cp,), jnp.float32, 0.5, 1.5),
        "beta1": 0.1 * jax.random.normal(keys[5], (Cp,), jnp.float32),
        "m1": 0.1 * jax.random.normal(keys[6], (Cp,), jnp.float32),
        "v1": jax.random.uniform(keys[7], (Cp,), jnp.float32, 0.5, 1.5),
        "g2": jax.random.uniform(keys[8], (Cp,), jnp.float32, 0.5, 1.5),
        "beta2": 0.1 * jax.random.normal(keys[9], (Cp,), jnp.float32),
        "m2": jnp.zeros((Cp,), jnp.float32),
        "v2": jnp.ones((Cp,), jnp.float32),
    }
    x = jax.random.normal(keys[10], (N, Cin, H, W), jnp.float32)

    prep = prepare_basic_block(params, W)        # hoisted: once per parameter set
    out = jax.block_until_ready(basic_block_forward(x, prep))
    ref = jax.block_until_ready(basic_block_reference(x, params))

    assert out.shape == (N, Cp, H, W), out.shape
    max_err = float(jnp.max(jnp.abs(out - ref)))
    assert jnp.allclose(out, ref, atol=3e-3, rtol=3e-3), max_err
    print("KERNEL_OK")
</pallas_src>

<mosaic_0001>
module attributes {stable_mosaic.version = 11 : i64} {
  func.func @basic_block_kernel(%arg0: i32, %arg1: memref<128x192xf32, #tpu.memory_space<vmem>>, %arg2: memref<192x256xf32, #tpu.memory_space<vmem>>, %arg3: memref<1x256xf32, #tpu.memory_space<vmem>>, %arg4: memref<384x128xf32, #tpu.memory_space<vmem>>, %arg5: memref<1x128xf32, #tpu.memory_space<vmem>>, %arg6: memref<128x128xf32, #tpu.memory_space<vmem>>) attributes {dimension_semantics = [#tpu.dimension_semantics<parallel>], iteration_bounds = array<i64: 2>, scalar_prefetch = 0 : i64, scratch_operands = 0 : i64, tpu.core_type = #tpu.core_type<tc>, window_params = [{transform_indices = @transform_0, window_bounds = array<i64: 128, 192>}, {pipeline_mode = #tpu.pipeline_mode<synchronous>, transform_indices = @transform_1, window_bounds = array<i64: 192, 256>}, {pipeline_mode = #tpu.pipeline_mode<synchronous>, transform_indices = @transform_2, window_bounds = array<i64: 1, 256>}, {pipeline_mode = #tpu.pipeline_mode<synchronous>, transform_indices = @transform_3, window_bounds = array<i64: 384, 128>}, {pipeline_mode = #tpu.pipeline_mode<synchronous>, transform_indices = @transform_4, window_bounds = array<i64: 1, 128>}, {transform_indices = @transform_5, window_bounds = array<i64: 128, 128>}]} {
    %c0 = arith.constant 0 : index
    %c0_0 = arith.constant 0 : index
    %0 = vector.load %arg1[%c0, %c0_0] : memref<128x192xf32, #tpu.memory_space<vmem>>, vector<128x192xf32>
    %c0_1 = arith.constant 0 : index
    %c0_2 = arith.constant 0 : index
    %1 = vector.load %arg2[%c0_1, %c0_2] : memref<192x256xf32, #tpu.memory_space<vmem>>, vector<192x256xf32>
    %cst = arith.constant dense<0.000000e+00> : vector<128x256xf32>
    %2 = tpu.matmul %0, %1, %cst {dimension_numbers = #tpu.dot_dimension_numbers<[1], [0], [0], [1], [0, 0, 1, 1], [], []>} : vector<128x192xf32>, vector<192x256xf32>, vector<128x256xf32> -> vector<128x256xf32>
    %c0_3 = arith.constant 0 : index
    %c0_4 = arith.constant 0 : index
    %3 = vector.load %arg3[%c0_3, %c0_4] : memref<1x256xf32, #tpu.memory_space<vmem>>, vector<1x256xf32>
    %4 = vector.broadcast %3 : vector<1x256xf32> to vector<128x256xf32>
    %5 = arith.addf %2, %4 : vector<128x256xf32>
    %6 = vector.extract_strided_slice %5 {offsets = [0, 0], sizes = [128, 128], strides = [1, 1]} : vector<128x256xf32> to vector<128x128xf32>
    %cst_5 = arith.constant 0.000000e+00 : f32
    %7 = vector.broadcast %cst_5 : f32 to vector<128x128xf32>
    %8 = arith.maximumf %6, %7 : vector<128x128xf32>
    %9 = vector.extract_strided_slice %5 {offsets = [0, 128], sizes = [128, 128], strides = [1, 1]} : vector<128x256xf32> to vector<128x128xf32>
    %10 = tpu.iota {dimensions = array<i32: 0>} : vector<128x128xi32>
    %c0_i32 = arith.constant 0 : i32
    %11 = vector.broadcast %c0_i32 : i32 to vector<128x128xi32>
    %12 = arith.cmpi eq, %10, %11 : vector<128x128xi32>
    %c15_i32 = arith.constant 15 : i32
    %13 = vector.broadcast %c15_i32 : i32 to vector<128x128xi32>
    %14 = arith.cmpi eq, %10, %13 : vector<128x128xi32>
    %c16_i32 = arith.constant 16 : i32
    %15 = vector.broadcast %c16_i32 : i32 to vector<128x128xi32>
    %16 = arith.cmpi eq, %10, %15 : vector<128x128xi32>
    %17 = arith.ori %12, %16 : vector<128x128xi1>
    %c31_i32 = arith.constant 31 : i32
    %18 = vector.broadcast %c31_i32 : i32 to vector<128x128xi32>
    %19 = arith.cmpi eq, %10, %18 : vector<128x128xi32>
    %20 = arith.ori %14, %19 : vector<128x128xi1>
    %c32_i32 = arith.constant 32 : i32
    %21 = vector.broadcast %c32_i32 : i32 to vector<128x128xi32>
    %22 = arith.cmpi eq, %10, %21 : vector<128x128xi32>
    %23 = arith.ori %17, %22 : vector<128x128xi1>
    %c47_i32 = arith.constant 47 : i32
    %24 = vector.broadcast %c47_i32 : i32 to vector<128x128xi32>
    %25 = arith.cmpi eq, %10, %24 : vector<128x128xi32>
    %26 = arith.ori %20, %25 : vector<128x128xi1>
    %c48_i32 = arith.constant 48 : i32
    %27 = vector.broadcast %c48_i32 : i32 to vector<128x128xi32>
    %28 = arith.cmpi eq, %10, %27 : vector<128x128xi32>
    %29 = arith.ori %23, %28 : vector<128x128xi1>
    %c63_i32 = arith.constant 63 : i32
    %30 = vector.broadcast %c63_i32 : i32 to vector<128x128xi32>
    %31 = arith.cmpi eq, %10, %30 : vector<128x128xi32>
    %32 = arith.ori %26, %31 : vector<128x128xi1>
    %c64_i32 = arith.constant 64 : i32
    %33 = vector.broadcast %c64_i32 : i32 to vector<128x128xi32>
    %34 = arith.cmpi eq, %10, %33 : vector<128x128xi32>
    %35 = arith.ori %29, %34 : vector<128x128xi1>
    %c79_i32 = arith.constant 79 : i32
    %36 = vector.broadcast %c79_i32 : i32 to vector<128x128xi32>
    %37 = arith.cmpi eq, %10, %36 : vector<128x128xi32>
    %38 = arith.ori %32, %37 : vector<128x128xi1>
    %c80_i32 = arith.constant 80 : i32
    %39 = vector.broadcast %c80_i32 : i32 to vector<128x128xi32>
    %40 = arith.cmpi eq, %10, %39 : vector<128x128xi32>
    %41 = arith.ori %35, %40 : vector<128x128xi1>
    %c95_i32 = arith.constant 95 : i32
    %42 = vector.broadcast %c95_i32 : i32 to vector<128x128xi32>
    %43 = arith.cmpi eq, %10, %42 : vector<128x128xi32>
    %44 = arith.ori %38, %43 : vector<128x128xi1>
    %c96_i32 = arith.constant 96 : i32
    %45 = vector.broadcast %c96_i32 : i32 to vector<128x128xi32>
    %46 = arith.cmpi eq, %10, %45 : vector<128x128xi32>
    %47 = arith.ori %41, %46 : vector<128x128xi1>
    %c111_i32 = arith.constant 111 : i32
    %48 = vector.broadcast %c111_i32 : i32 to vector<128x128xi32>
    %49 = arith.cmpi eq, %10, %48 : vector<128x128xi32>
    %50 = arith.ori %44, %49 : vector<128x128xi1>
    %c112_i32 = arith.constant 112 : i32
    %51 = vector.broadcast %c112_i32 : i32 to vector<128x128xi32>
    %52 = arith.cmpi eq, %10, %51 : vector<128x128xi32>
    %53 = arith.ori %47, %52 : vector<128x128xi1>
    %c127_i32 = arith.constant 127 : i32
    %54 = vector.broadcast %c127_i32 : i32 to vector<128x128xi32>
    %55 = arith.cmpi eq, %10, %54 : vector<128x128xi32>
    %56 = arith.ori %50, %55 : vector<128x128xi1>
    %cst_6 = arith.constant 0.000000e+00 : f32
    %57 = vector.broadcast %cst_6 : f32 to vector<128x128xf32>
    %c1_i32 = arith.constant 1 : i32
    %58 = tpu.dynamic_rotate %8 by %c1_i32 dim 0 : vector<128x128xf32>, i32 -> vector<128x128xf32>
    %59 = arith.select %53, %57, %58 : vector<128x128xi1>, vector<128x128xf32>
    %c127_i32_7 = arith.constant 127 : i32
    %60 = tpu.dynamic_rotate %8 by %c127_i32_7 dim 0 : vector<128x128xf32>, i32 -> vector<128x128xf32>
    %61 = arith.select %56, %57, %60 : vector<128x128xi1>, vector<128x128xf32>
    %62 = tpu.concatenate %59, %8, %61 in 1 : vector<128x128xf32>, vector<128x128xf32>, vector<128x128xf32> -> vector<128x384xf32>
    %c0_8 = arith.constant 0 : index
    %c0_9 = arith.constant 0 : index
    %63 = vector.load %arg4[%c0_8, %c0_9] : memref<384x128xf32, #tpu.memory_space<vmem>>, vector<384x128xf32>
    %cst_10 = arith.constant dense<0.000000e+00> : vector<128x128xf32>
    %64 = tpu.matmul %62, %63, %cst_10 {dimension_numbers = #tpu.dot_dimension_numbers<[1], [0], [0], [1], [0, 0, 1, 1], [], []>} : vector<128x384xf32>, vector<384x128xf32>, vector<128x128xf32> -> vector<128x128xf32>
    %c0_11 = arith.constant 0 : index
    %c0_12 = arith.constant 0 : index
    %65 = vector.load %arg5[%c0_11, %c0_12] : memref<1x128xf32, #tpu.memory_space<vmem>>, vector<1x128xf32>
    %66 = vector.broadcast %65 : vector<1x128xf32> to vector<128x128xf32>
    %67 = arith.addf %64, %66 : vector<128x128xf32>
    %68 = arith.addf %67, %9 : vector<128x128xf32>
    %cst_13 = arith.constant 0.000000e+00 : f32
    %69 = vector.broadcast %cst_13 : f32 to vector<128x128xf32>
    %70 = arith.maximumf %68, %69 : vector<128x128xf32>
    %c0_14 = arith.constant 0 : index
    %c0_15 = arith.constant 0 : index
    %71 = vector.load %arg6[%c0_14, %c0_15] : memref<128x128xf32, #tpu.memory_space<vmem>>, vector<128x128xf32>
    tpu.vector_store %arg6[%c0_14, %c0_15], %70 {strides = array<i32>} : memref<128x128xf32, #tpu.memory_space<vmem>>, vector<128x128xf32>,
    return
  }
  func.func @transform_0(%arg0: i32) -> (i32, i32) {
    %c0_i32 = arith.constant 0 : i32
    %c0_i32_0 = arith.constant 0 : i32
    return %arg0, %c0_i32 : i32, i32
  }
  func.func @transform_1(%arg0: i32) -> (i32, i32) {
    %c0_i32 = arith.constant 0 : i32
    %c0_i32_0 = arith.constant 0 : i32
    %c0_i32_1 = arith.constant 0 : i32
    return %c0_i32, %c0_i32_0 : i32, i32
  }
  func.func @transform_2(%arg0: i32) -> (i32, i32) {
    %c0_i32 = arith.constant 0 : i32
    %c0_i32_0 = arith.constant 0 : i32
    %c0_i32_1 = arith.constant 0 : i32
    return %c0_i32, %c0_i32_0 : i32, i32
  }
  func.func @transform_3(%arg0: i32) -> (i32, i32) {
    %c0_i32 = arith.constant 0 : i32
    %c0_i32_0 = arith.constant 0 : i32
    %c0_i32_1 = arith.constant 0 : i32
    return %c0_i32, %c0_i32_0 : i32, i32
  }
  func.func @transform_4(%arg0: i32) -> (i32, i32) {
    %c0_i32 = arith.constant 0 : i32
    %c0_i32_0 = arith.constant 0 : i32
    %c0_i32_1 = arith.constant 0 : i32
    return %c0_i32, %c0_i32_0 : i32, i32
  }
  func.func @transform_5(%arg0: i32) -> (i32, i32) {
    %c0_i32 = arith.constant 0 : i32
    %c0_i32_0 = arith.constant 0 : i32
    return %arg0, %c0_i32 : i32, i32
  }
}

module attributes {stable_mosaic.version = 11 : i64} {
  func.func @basic_block_kernel(%arg0: i32, %arg1: memref<128x192xf32, #tpu.memory_space<vmem>>, %arg2: memref<192x256xf32, #tpu.memory_space<vmem>>, %arg3: memref<1x256xf32, #tpu.memory_space<vmem>>, %arg4: memref<384x128xf32, #tpu.memory_space<vmem>>, %arg5: memref<1x128xf32, #tpu.memory_space<vmem>>, %arg6: memref<128x128xf32, #tpu.memory_space<vmem>>) attributes {dimension_semantics = [#tpu.dimension_semantics<parallel>], iteration_bounds = array<i64: 2>, scalar_prefetch = 0 : i64, scratch_operands = 0 : i64, tpu.core_type = #tpu.core_type<tc>, window_params = [{transform_indices = @transform_0, window_bounds = array<i64: 128, 192>}, {pipeline_mode = #tpu.pipeline_mode<synchronous>, transform_indices = @transform_1, window_bounds = array<i64: 192, 256>}, {pipeline_mode = #tpu.pipeline_mode<synchronous>, transform_indices = @transform_2, window_bounds = array<i64: 1, 256>}, {pipeline_mode = #tpu.pipeline_mode<synchronous>, transform_indices = @transform_3, window_bounds = array<i64: 384, 128>}, {pipeline_mode = #tpu.pipeline_mode<synchronous>, transform_indices = @transform_4, window_bounds = array<i64: 1, 128>}, {transform_indices = @transform_5, window_bounds = array<i64: 128, 128>}]} {
    %c0 = arith.constant 0 : index
    %c0_0 = arith.constant 0 : index
    %0 = vector.load %arg1[%c0, %c0_0] : memref<128x192xf32, #tpu.memory_space<vmem>>, vector<128x192xf32>
    %c0_1 = arith.constant 0 : index
    %c0_2 = arith.constant 0 : index
    %1 = vector.load %arg2[%c0_1, %c0_2] : memref<192x256xf32, #tpu.memory_space<vmem>>, vector<192x256xf32>
    %cst = arith.constant dense<0.000000e+00> : vector<128x256xf32>
    %2 = tpu.matmul %0, %1, %cst {dimension_numbers = #tpu.dot_dimension_numbers<[1], [0], [0], [1], [0, 0, 1, 1], [], []>} : vector<128x192xf32>, vector<192x256xf32>, vector<128x256xf32> -> vector<128x256xf32>
    %c0_3 = arith.constant 0 : index
    %c0_4 = arith.constant 0 : index
    %3 = vector.load %arg3[%c0_3, %c0_4] : memref<1x256xf32, #tpu.memory_space<vmem>>, vector<1x256xf32>
    %4 = vector.broadcast %3 : vector<1x256xf32> to vector<128x256xf32>
    %5 = arith.addf %2, %4 : vector<128x256xf32>
    %6 = vector.extract_strided_slice %5 {offsets = [0, 0], sizes = [128, 128], strides = [1, 1]} : vector<128x256xf32> to vector<128x128xf32>
    %cst_5 = arith.constant 0.000000e+00 : f32
    %7 = vector.broadcast %cst_5 : f32 to vector<128x128xf32>
    %8 = arith.maximumf %6, %7 : vector<128x128xf32>
    %9 = vector.extract_strided_slice %5 {offsets = [0, 128], sizes = [128, 128], strides = [1, 1]} : vector<128x256xf32> to vector<128x128xf32>
    %10 = tpu.iota {dimensions = array<i32: 0>} : vector<128x128xi32>
    %c0_i32 = arith.constant 0 : i32
    %11 = vector.broadcast %c0_i32 : i32 to vector<128x128xi32>
    %12 = arith.cmpi eq, %10, %11 : vector<128x128xi32>
    %c15_i32 = arith.constant 15 : i32
    %13 = vector.broadcast %c15_i32 : i32 to vector<128x128xi32>
    %14 = arith.cmpi eq, %10, %13 : vector<128x128xi32>
    %c16_i32 = arith.constant 16 : i32
    %15 = vector.broadcast %c16_i32 : i32 to vector<128x128xi32>
    %16 = arith.cmpi eq, %10, %15 : vector<128x128xi32>
    %17 = arith.ori %12, %16 : vector<128x128xi1>
    %c31_i32 = arith.constant 31 : i32
    %18 = vector.broadcast %c31_i32 : i32 to vector<128x128xi32>
    %19 = arith.cmpi eq, %10, %18 : vector<128x128xi32>
    %20 = arith.ori %14, %19 : vector<128x128xi1>
    %c32_i32 = arith.constant 32 : i32
    %21 = vector.broadcast %c32_i32 : i32 to vector<128x128xi32>
    %22 = arith.cmpi eq, %10, %21 : vector<128x128xi32>
    %23 = arith.ori %17, %22 : vector<128x128xi1>
    %c47_i32 = arith.constant 47 : i32
    %24 = vector.broadcast %c47_i32 : i32 to vector<128x128xi32>
    %25 = arith.cmpi eq, %10, %24 : vector<128x128xi32>
    %26 = arith.ori %20, %25 : vector<128x128xi1>
    %c48_i32 = arith.constant 48 : i32
    %27 = vector.broadcast %c48_i32 : i32 to vector<128x128xi32>
    %28 = arith.cmpi eq, %10, %27 : vector<128x128xi32>
    %29 = arith.ori %23, %28 : vector<128x128xi1>
    %c63_i32 = arith.constant 63 : i32
    %30 = vector.broadcast %c63_i32 : i32 to vector<128x128xi32>
    %31 = arith.cmpi eq, %10, %30 : vector<128x128xi32>
    %32 = arith.ori %26, %31 : vector<128x128xi1>
    %c64_i32 = arith.constant 64 : i32
    %33 = vector.broadcast %c64_i32 : i32 to vector<128x128xi32>
    %34 = arith.cmpi eq, %10, %33 : vector<128x128xi32>
    %35 = arith.ori %29, %34 : vector<128x128xi1>
    %c79_i32 = arith.constant 79 : i32
    %36 = vector.broadcast %c79_i32 : i32 to vector<128x128xi32>
    %37 = arith.cmpi eq, %10, %36 : vector<128x128xi32>
    %38 = arith.ori %32, %37 : vector<128x128xi1>
    %c80_i32 = arith.constant 80 : i32
    %39 = vector.broadcast %c80_i32 : i32 to vector<128x128xi32>
    %40 = arith.cmpi eq, %10, %39 : vector<128x128xi32>
    %41 = arith.ori %35, %40 : vector<128x128xi1>
    %c95_i32 = arith.constant 95 : i32
    %42 = vector.broadcast %c95_i32 : i32 to vector<128x128xi32>
    %43 = arith.cmpi eq, %10, %42 : vector<128x128xi32>
    %44 = arith.ori %38, %43 : vector<128x128xi1>
    %c96_i32 = arith.constant 96 : i32
    %45 = vector.broadcast %c96_i32 : i32 to vector<128x128xi32>
    %46 = arith.cmpi eq, %10, %45 : vector<128x128xi32>
    %47 = arith.ori %41, %46 : vector<128x128xi1>
    %c111_i32 = arith.constant 111 : i32
    %48 = vector.broadcast %c111_i32 : i32 to vector<128x128xi32>
    %49 = arith.cmpi eq, %10, %48 : vector<128x128xi32>
    %50 = arith.ori %44, %49 : vector<128x128xi1>
    %c112_i32 = arith.constant 112 : i32
    %51 = vector.broadcast %c112_i32 : i32 to vector<128x128xi32>
    %52 = arith.cmpi eq, %10, %51 : vector<128x128xi32>
    %53 = arith.ori %47, %52 : vector<128x128xi1>
    %c127_i32 = arith.constant 127 : i32
    %54 = vector.broadcast %c127_i32 : i32 to vector<128x128xi32>
    %55 = arith.cmpi eq, %10, %54 : vector<128x128xi32>
    %56 = arith.ori %50, %55 : vector<128x128xi1>
    %cst_6 = arith.constant 0.000000e+00 : f32
    %57 = vector.broadcast %cst_6 : f32 to vector<128x128xf32>
    %c1_i32 = arith.constant 1 : i32
    %58 = tpu.dynamic_rotate %8 by %c1_i32 dim 0 : vector<128x128xf32>, i32 -> vector<128x128xf32>
    %59 = arith.select %53, %57, %58 : vector<128x128xi1>, vector<128x128xf32>
    %c127_i32_7 = arith.constant 127 : i32
    %60 = tpu.dynamic_rotate %8 by %c127_i32_7 dim 0 : vector<128x128xf32>, i32 -> vector<128x128xf32>
    %61 = arith.select %56, %57, %60 : vector<128x128xi1>, vector<128x128xf32>
    %62 = tpu.concatenate %59, %8, %61 in 1 : vector<128x128xf32>, vector<128x128xf32>, vector<128x128xf32> -> vector<128x384xf32>
    %c0_8 = arith.constant 0 : index
    %c0_9 = arith.constant 0 : index
    %63 = vector.load %arg4[%c0_8, %c0_9] : memref<384x128xf32, #tpu.memory_space<vmem>>, vector<384x128xf32>
    %cst_10 = arith.constant dense<0.000000e+00> : vector<128x128xf32>
    %64 = tpu.matmul %62, %63, %cst_10 {dimension_numbers = #tpu.dot_dimension_numbers<[1], [0], [0], [1], [0, 0, 1, 1], [], []>} : vector<128x384xf32>, vector<384x128xf32>, vector<128x128xf32> -> vector<128x128xf32>
    %c0_11 = arith.constant 0 : index
    %c0_12 = arith.constant 0 : index
    %65 = vector.load %arg5[%c0_11, %c0_12] : memref<1x128xf32, #tpu.memory_space<vmem>>, vector<1x128xf32>
    %66 = vector.broadcast %65 : vector<1x128xf32> to vector<128x128xf32>
    %67 = arith.addf %64, %66 : vector<128x128xf32>
    %68 = arith.addf %67, %9 : vector<128x128xf32>
    %cst_13 = arith.constant 0.000000e+00 : f32
    %69 = vector.broadcast %cst_13 : f32 to vector<128x128xf32>
    %70 = arith.maximumf %68, %69 : vector<128x128xf32>
    %c0_14 = arith.constant 0 : index
    %c0_15 = arith.constant 0 : index
    %71 = vector.load %arg6[%c0_14, %c0_15] : memref<128x128xf32, #tpu.memory_space<vmem>>, vector<128x128xf32>
    tpu.vector_store %arg6[%c0_14, %c0_15], %70 {strides = array<i32>} : memref<128x128xf32, #tpu.memory_space<vmem>>, vector<128x128xf32>,
    return
  }
  func.func @transform_0(%arg0: i32) -> (i32, i32) {
    %c0_i32 = arith.constant 0 : i32
    %c0_i32_0 = arith.constant 0 : i32
    return %arg0, %c0_i32 : i32, i32
  }
  func.func @transform_1(%arg0: i32) -> (i32, i32) {
    %c0_i32 = arith.constant 0 : i32
    %c0_i32_0 = arith.constant 0 : i32
    %c0_i32_1 = arith.constant 0 : i32
    return %c0_i32, %c0_i32_0 : i32, i32
  }
  func.func @transform_2(%arg0: i32) -> (i32, i32) {
    %c0_i32 = arith.constant 0 : i32
    %c0_i32_0 = arith.constant 0 : i32
    %c0_i32_1 = arith.constant 0 : i32
    return %c0_i32, %c0_i32_0 : i32, i32
  }
  func.func @transform_3(%arg0: i32) -> (i32, i32) {
    %c0_i32 = arith.constant 0 : i32
    %c0_i32_0 = arith.constant 0 : i32
    %c0_i32_1 = arith.constant 0 : i32
    return %c0_i32, %c0_i32_0 : i32, i32
  }
  func.func @transform_4(%arg0: i32) -> (i32, i32) {
    %c0_i32 = arith.constant 0 : i32
    %c0_i32_0 = arith.constant 0 : i32
    %c0_i32_1 = arith.constant 0 : i32
    return %c0_i32, %c0_i32_0 : i32, i32
  }
  func.func @transform_5(%arg0: i32) -> (i32, i32) {
    %c0_i32 = arith.constant 0 : i32
    %c0_i32_0 = arith.constant 0 : i32
    return %arg0, %c0_i32 : i32, i32
  }
}

</mosaic_0001>

<llo_original>
// kernel: tpu_custom_call.1
$region0: #{tpu_custom_call.1}
  #allocation0 [shape = 'u32[]', space=smem, size = 0x4, offset = 0x4, fixed_abs, tag = 'smem constant byte address 0x4 - core index']
  #allocation1 [shape = 'u32[144,128]{1,0:T(1,128)}', space=vmem, size = 0x12000, scoped, tag = 'internal scratch']
  %s0 = inlined_call_operand.vmem [shape: f32[256,192], index: 0, kind: input, shape index: {}]
  %s1 = inlined_call_operand.vmem [shape: f32[192,256], index: 1, kind: input, shape index: {}]
  %s2 = inlined_call_operand.vmem [shape: f32[1,256], index: 2, kind: input, shape index: {}]
  %s3 = inlined_call_operand.vmem [shape: f32[384,128], index: 3, kind: input, shape index: {}]
  %s4 = inlined_call_operand.vmem [shape: f32[1,128], index: 4, kind: input, shape index: {}]
  %s5 = inlined_call_operand.hbm [shape: f32[256,128], index: 5, kind: output, shape index: {}]
  %s6 = sld [smem:[#allocation0]]
  $region53: #{tpu_custom_call.1} parent=0
    _
  %s8 = ssub.s32 1, %s6
  %s9 = scalar_select 0, %s8, %s6
  $region1: #{tpu_custom_call.1} parent=0
    #allocation2 [shape = 'u8[131072]{0}', space=vmem, size = 0x20000, scoped, tag = 'output window, operand 0']
    #allocation3 [shape = 's32[2]{0}', space=sflag, size = 0x8, scoped, tag = 'scoped memory for tpu_custom_call.1']
    %10 = vsyncpa [#allocation3], 0
    %s11 = scalar_lea.sflag [#allocation3], 1
    %12 = vsyncpa %s11, 0
    loop: start=0, step=1, limit=4
    $region2: #{tpu_custom_call.1} parent=1 // loop_pre_header
      _
    $region3: #{tpu_custom_call.1} parent=1 // loop_header
      %s14 = sphi 0, %s18
      %p15 = scmp.ge.s32.totalorder %s14, 4
      %s24 = sphi 0, %s26
      %s27 = sphi 0, %s24
      %s28 = sphi 0, %s27
      %s44 = sphi 0, %s28
      %s48 = sphi 0, %s48
      %s50 = sphi 0, %s48
      %s51 = sphi 0, %s50
      %s65 = sphi 0, %s51
      %s69 = sphi 0, %s69
      %s71 = sphi 0, %s69
      %s72 = sphi 0, %s71
      %s86 = sphi 0, %s72
      %s90 = sphi 0, %s90
      %s92 = sphi 0, %s90
      %s93 = sphi 0, %s92
      %s107 = sphi 0, %s93
      %s111 = sphi 0, %s111
      %s113 = sphi 0, %s111
      %s114 = sphi 0, %s113
      %s128 = sphi 0, %s114
      %s134 = sphi 0, %s136
      %s137 = sphi 0, %s134
      %s138 = sphi 0, %s137
      %s154 = sphi 0, %s138
    $region4: #{tpu_custom_call.1} parent=1 // loop_header_branch
      %17 = sbr.rel (%p15) target = $region8
    $region5: #{tpu_custom_call.1} parent=1 // loop_body
      %s19 = ssub.s32 %s14, 1
      %s20 = ssub.s32 %s14, 2
      %s21 = sadd.s32 %s14, 1
      %s22 = ssub.s32 %s14, %s21
      %p23 = scmp.eq.s32.totalorder %s22, 0
      %s25 = sadd.s32 %s24, 1
      %s26 = scalar_select %p23, %s24, %s25
      %p29 = pneg %p23
      %p30 = scmp.eq.s32.totalorder %s14, 1
      %p31 = por %p29, %p30
      %p32 = scmp.ne.s32.totalorder %s24, %s27
      %p33 = scmp.eq.s32.totalorder %s14, 0
      %p34 = por %p32, %p33
      %p35 = scmp.ne.s32.totalorder %s24, %s27
      %p36 = scmp.eq.s32.totalorder %s19, 1
      %p37 = por %p35, %p36
      %p38 = scmp.ne.s32.totalorder %s27, %s28
      %p39 = scmp.eq.s32.totalorder %s19, 0
      %p40 = por %p38, %p39
      %p41 = scmp.ne.s32.totalorder %s27, %s28
      %p42 = scmp.eq.s32.totalorder %s20, 1
      %p43 = por %p41, %p42
      %p45 = scmp.ne.s32.totalorder %s28, %s44
      %p46 = scmp.eq.s32.totalorder %s20, 0
      %p47 = por %p45, %p46
      %s49 = sadd.s32 %s48, 1
      %p52 = scmp.eq.s32.totalorder %s14, 1
      %p53 = scmp.ne.s32.totalorder %s48, %s50
      %p54 = scmp.eq.s32.totalorder %s14, 0
      %p55 = por %p53, %p54
      %p56 = scmp.ne.s32.totalorder %s48, %s50
      %p57 = scmp.eq.s32.totalorder %s19, 1
      %p58 = por %p56, %p57
      %p59 = scmp.ne.s32.totalorder %s50, %s51
      %p60 = scmp.eq.s32.totalorder %s19, 0
      %p61 = por %p59, %p60
      %p62 = scmp.ne.s32.totalorder %s50, %s51
      %p63 = scmp.eq.s32.totalorder %s20, 1
      %p64 = por %p62, %p63
      %p66 = scmp.ne.s32.totalorder %s51, %s65
      %p67 = scmp.eq.s32.totalorder %s20, 0
      %p68 = por %p66, %p67
      %s70 = sadd.s32 %s69, 1
      %p73 = scmp.eq.s32.totalorder %s14, 1
      %p74 = scmp.ne.s32.totalorder %s69, %s71
      %p75 = scmp.eq.s32.totalorder %s14, 0
      %p76 = por %p74, %p75
      %p77 = scmp.ne.s32.totalorder %s69, %s71
      %p78 = scmp.eq.s32.totalorder %s19, 1
      %p79 = por %p77, %p78
      %p80 = scmp.ne.s32.totalorder %s71, %s72
      %p81 = scmp.eq.s32.totalorder %s19, 0
      %p82 = por %p80, %p81
      %p83 = scmp.ne.s32.totalorder %s71, %s72
      %p84 = scmp.eq.s32.totalorder %s20, 1
      %p85 = por %p83, %p84
      %p87 = scmp.ne.s32.totalorder %s72, %s86
      %p88 = scmp.eq.s32.totalorder %s20, 0
      %p89 = por %p87, %p88
      %s91 = sadd.s32 %s90, 1
      %p94 = scmp.eq.s32.totalorder %s14, 1
      %p95 = scmp.ne.s32.totalorder %s90, %s92
      %p96 = scmp.eq.s32.totalorder %s14, 0
      %p97 = por %p95, %p96
      %p98 = scmp.ne.s32.totalorder %s90, %s92
      %p99 = scmp.eq.s32.totalorder %s19, 1
      %p100 = por %p98, %p99
      %p101 = scmp.ne.s32.totalorder %s92, %s93
      %p102 = scmp.eq.s32.totalorder %s19, 0
      %p103 = por %p101, %p102
      %p104 = scmp.ne.s32.totalorder %s92, %s93
      %p105 = scmp.eq.s32.totalorder %s20, 1
      %p106 = por %p104, %p105
      %p108 = scmp.ne.s32.totalorder %s93, %s107
      %p109 = scmp.eq.s32.totalorder %s20, 0
      %p110 = por %p108, %p109
      %s112 = sadd.s32 %s111, 1
      %p115 = scmp.eq.s32.totalorder %s14, 1
      %p116 = scmp.ne.s32.totalorder %s111, %s113
      %p117 = scmp.eq.s32.totalorder %s14, 0
      %p118 = por %p116, %p117
      %p119 = scmp.ne.s32.totalorder %s111, %s113
      %p120 = scmp.eq.s32.totalorder %s19, 1
      %p121 = por %p119, %p120
      %p122 = scmp.ne.s32.totalorder %s113, %s114
      %p123 = scmp.eq.s32.totalorder %s19, 0
      %p124 = por %p122, %p123
      %p125 = scmp.ne.s32.totalorder %s113, %s114
      %p126 = scmp.eq.s32.totalorder %s20, 1
      %p127 = por %p125, %p126
      %p129 = scmp.ne.s32.totalorder %s114, %s128
      %p130 = scmp.eq.s32.totalorder %s20, 0
      %p131 = por %p129, %p130
      %s132 = ssub.s32 %s14, %s21
      %p133 = scmp.eq.s32.totalorder %s132, 0
      %s135 = sadd.s32 %s134, 1
      %s136 = scalar_select %p133, %s134, %s135
      %p139 = pneg %p133
      %p140 = scmp.eq.s32.totalorder %s14, 1
      %p141 = por %p139, %p140
      %p142 = scmp.ne.s32.totalorder %s134, %s137
      %p143 = scmp.eq.s32.totalorder %s14, 0
      %p144 = por %p142, %p143
      %p145 = scmp.ne.s32.totalorder %s134, %s137
      %p146 = scmp.eq.s32.totalorder %s19, 1
      %p147 = por %p145, %p146
      %p148 = scmp.ne.s32.totalorder %s137, %s138
      %p149 = scmp.eq.s32.totalorder %s19, 0
      %p150 = por %p148, %p149
      %p151 = scmp.ne.s32.totalorder %s137, %s138
      %p152 = scmp.eq.s32.totalorder %s20, 1
      %p153 = por %p151, %p152
      %p155 = scmp.ne.s32.totalorder %s138, %s154
      %p156 = scmp.eq.s32.totalorder %s20, 0
      %p157 = por %p155, %p156
      %p158 = scmp.le.s32.totalorder 1, %s14
      %p159 = scmp.lt.s32.totalorder %s14, 3
      %p160 = pnand %p158, %p159
      %p161 = pneg %p160
      // Predicated region
      $region9: #{tpu_custom_call.1} parent=5 // pred_check
        _
      $region10: #{tpu_custom_call.1} parent=5 // pred_check_branch
        %163 = sbr.rel (%p160) target = $region12
      $region11: #{tpu_custom_call.1} parent=5 // pred_region
        %s164 = ssub.s32 %s14, 1
        // Predicated region
        $region13: #{tpu_custom_call.1} parent=11 // pred_check
          %p165 = pneg %p61
        $region14: #{tpu_custom_call.1} parent=11 // pred_check_branch
          %167 = sbr.rel (%p165) target = $region16
        $region15: #{tpu_custom_call.1} parent=11 // pred_region
          _
        $region16: #{tpu_custom_call.1} parent=11 // pred_fallthru
          _
        // Predicated region
        $region17: #{tpu_custom_call.1} parent=11 // pred_check
          %p168 = pneg %p82
        $region18: #{tpu_custom_call.1} parent=11 // pred_check_branch
          %170 = sbr.rel (%p168) target = $region20
        $region19: #{tpu_custom_call.1} parent=11 // pred_region
          _
        $region20: #{tpu_custom_call.1} parent=11 // pred_fallthru
          _
        // Predicated region
        $region21: #{tpu_custom_call.1} parent=11 // pred_check
          %p171 = pneg %p103
        $region22: #{tpu_custom_call.1} parent=11 // pred_check_branch
          %173 = sbr.rel (%p171) target = $region24
        $region23: #{tpu_custom_call.1} parent=11 // pred_region
          _
        $region24: #{tpu_custom_call.1} parent=11 // pred_fallthru
          _
        // Predicated region
        $region25: #{tpu_custom_call.1} parent=11 // pred_check
          %p174 = pneg %p124
        $region26: #{tpu_custom_call.1} parent=11 // pred_check_branch
          %176 = sbr.rel (%p174) target = $region28
        $region27: #{tpu_custom_call.1} parent=11 // pred_region
          _
        $region28: #{tpu_custom_call.1} parent=11 // pred_fallthru
          _
      $region12: #{tpu_custom_call.1} parent=5 // pred_fallthru
        _
      %p177 = scmp.lt.s32.totalorder %s14, 2
      // Predicated region
      $region29: #{tpu_custom_call.1} parent=5 // pred_check
        %p178 = pneg %p177
      $region30: #{tpu_custom_call.1} parent=5 // pred_check_branch
        %180 = sbr.rel (%p178) target = $region32
      $region31: #{tpu_custom_call.1} parent=5 // pred_region
        // Predicated region
        $region33: #{tpu_custom_call.1} parent=31 // pred_check
          %p181 = pneg %p34
        $region34: #{tpu_custom_call.1} parent=31 // pred_check_branch
          %183 = sbr.rel (%p181) target = $region36
        $region35: #{tpu_custom_call.1} parent=31 // pred_region
          %s184 = smul.u32 16, %s14
          %p185 = scmp.lt.s32.totalorder %s184, 31
          %s186 = scalar_select %p185, %s184, 31
          %s187 = smul.addr %s186, 2
          %s188 = smul.addr %s187, 8
          %s189 = scalar_lea.vmem %s0, %s188
          %s190 = smul.u32 16, %s14
        $region36: #{tpu_custom_call.1} parent=31 // pred_fallthru
          _
      $region32: #{tpu_custom_call.1} parent=5 // pred_fallthru
        _
      %p191 = scmp.le.s32.totalorder 1, %s14
      %p192 = scmp.lt.s32.totalorder %s14, 3
      %p193 = pnand %p191, %p192
      %p194 = pneg %p193
      // Predicated region
      $region37: #{tpu_custom_call.1} parent=5 // pred_check
        _
      $region38: #{tpu_custom_call.1} parent=5 // pred_check_branch
        %196 = sbr.rel (%p193) target = $region40
      $region39: #{tpu_custom_call.1} parent=5 // pred_region
        %s197 = ssub.s32 %s14, 1
        %s198 = smul.u32 16, %s19
        %p199 = scmp.lt.s32.totalorder %s198, 31
        %s200 = scalar_select %p199, %s198, 31
        %s201 = smul.addr %s200, 2
        %s202 = smul.addr %s201, 8
        %s203 = scalar_lea.vmem %s0, %s202
        %p204 = pneg %p40
        %p205 = pneg %p37
        %p206 = pneg %p61
        %p207 = pneg %p58
        %p208 = pneg %p82
        %p209 = pneg %p79
        %p210 = pneg %p103
        %p211 = pneg %p100
        %p212 = pneg %p124
        %p213 = pneg %p121
        %p214 = pneg %p150
        %p215 = pneg %p147
        %s216 = sand.u32 %s137, 1
        %s217 = scalar_lea.sflag [#allocation3], %s216
        %s218 = sand.u32 %s137, 1
        %s219 = smul.addr %s218, 128
        %s220 = scalar_lea.vmem [#allocation2], %s219
        %s221 = smul.u32 16, %s19
        %p222 = scmp.lt.s32.totalorder %s221, 31
        %s223 = scalar_select %p222, %s221, 31
        %s224 = smul.addr %s223, 2
        %s225 = smul.addr %s224, 8
        %s226 = scalar_lea.vmem %s0, %s225
        %s227 = smul.u32 16, %s19
        %s228 = smul.u32 16, %s19
        %v229 = vld [vmem:[%s226] sm:$0xff]
        %v230 = vld [vmem:[%s226 + $0x8] sm:$0xff]
        %v231 = vld [vmem:[%s226 + $0x10] sm:$0xff]
        %v232 = vld [vmem:[%s226 + $0x18] sm:$0xff]
        %v233 = vld [vmem:[%s226 + $0x20] sm:$0xff]
        %v234 = vld [vmem:[%s226 + $0x28] sm:$0xff]
        %v235 = vld [vmem:[%s226 + $0x30] sm:$0xff]
        %v236 = vld [vmem:[%s226 + $0x38] sm:$0xff]
        %v237 = vld [vmem:[%s226 + $0x40] sm:$0xff]
        %v238 = vld [vmem:[%s226 + $0x48] sm:$0xff]
        %v239 = vld [vmem:[%s226 + $0x50] sm:$0xff]
        %v240 = vld [vmem:[%s226 + $0x58] sm:$0xff]
        %v241 = vld [vmem:[%s226 + $0x60] sm:$0xff]
        %v242 = vld [vmem:[%s226 + $0x68] sm:$0xff]
        %v243 = vld [vmem:[%s226 + $0x70] sm:$0xff]
        %v244 = vld [vmem:[%s226 + $0x78] sm:$0xff]
        %v245 = vld [vmem:[%s226 + $0x80] sm:$0xff]
        %v246 = vld [vmem:[%s226 + $0x88] sm:$0xff]
        %v247 = vld [vmem:[%s226 + $0x90] sm:$0xff]
        %v248 = vld [vmem:[%s226 + $0x98] sm:$0xff]
        %v249 = vld [vmem:[%s226 + $0xa0] sm:$0xff]
        %v250 = vld [vmem:[%s226 + $0xa8] sm:$0xff]
        %v251 = vld [vmem:[%s226 + $0xb0] sm:$0xff]
        %v252 = vld [vmem:[%s226 + $0xb8] sm:$0xff]
        %v253 = vld [vmem:[%s226 + $0xc0] sm:$0xff]
        %v254 = vld [vmem:[%s226 + $0xc8] sm:$0xff]
        %v255 = vld [vmem:[%s226 + $0xd0] sm:$0xff]
        %v256 = vld [vmem:[%s226 + $0xd8] sm:$0xff]
        %v257 = vld [vmem:[%s226 + $0xe0] sm:$0xff]
        %v258 = vld [vmem:[%s226 + $0xe8] sm:$0xff]
        %v259 = vld [vmem:[%s226 + $0xf0] sm:$0xff]
        %v260 = vld [vmem:[%s226 + $0xf8] sm:$0xff]
        %v261 = vld [vmem:[%s1] sm:$0xff]
        %v262 = vld [vmem:[%s1 + $0x8] sm:$0xff]
        %v263 = vld [vmem:[%s1 + $0x10] sm:$0xff]
        %v264 = vld [vmem:[%s1 + $0x18] sm:$0xff]
        %v265 = vld [vmem:[%s1 + $0x20] sm:$0xff]
        %v266 = vld [vmem:[%s1 + $0x28] sm:$0xff]
        %v267 = vld [vmem:[%s1 + $0x30] sm:$0xff]
        %v268 = vld [vmem:[%s1 + $0x38] sm:$0xff]
        %v269 = vld [vmem:[%s1 + $0x40] sm:$0xff]
        %v270 = vld [vmem:[%s1 + $0x48] sm:$0xff]
        %v271 = vld [vmem:[%s1 + $0x50] sm:$0xff]
        %v272 = vld [vmem:[%s1 + $0x58] sm:$0xff]
        %v273 = vld [vmem:[%s1 + $0x60] sm:$0xff]
        %v274 = vld [vmem:[%s1 + $0x68] sm:$0xff]
        %v275 = vld [vmem:[%s1 + $0x70] sm:$0xff]
        %v276 = vld [vmem:[%s1 + $0x78] sm:$0xff]
        %v277 = vld [vmem:[%s1 + $0x80] sm:$0xff]
        %v278 = vld [vmem:[%s1 + $0x88] sm:$0xff]
        %v279 = vld [vmem:[%s1 + $0x90] sm:$0xff]
        %v280 = vld [vmem:[%s1 + $0x98] sm:$0xff]
        %v281 = vld [vmem:[%s1 + $0xa0] sm:$0xff]
        %v282 = vld [vmem:[%s1 + $0xa8] sm:$0xff]
        %v283 = vld [vmem:[%s1 + $0xb0] sm:$0xff]
        %v284 = vld [vmem:[%s1 + $0xb8] sm:$0xff]
        %v285 = vld [vmem:[%s1 + $0xc0] sm:$0xff]
        %v286 = vld [vmem:[%s1 + $0xc8] sm:$0xff]
        %v287 = vld [vmem:[%s1 + $0xd0] sm:$0xff]
        %v288 = vld [vmem:[%s1 + $0xd8] sm:$0xff]
        %v289 = vld [vmem:[%s1 + $0xe0] sm:$0xff]
        %v290 = vld [vmem:[%s1 + $0xe8] sm:$0xff]
        %v291 = vld [vmem:[%s1 + $0xf0] sm:$0xff]
        %v292 = vld [vmem:[%s1 + $0xf8] sm:$0xff]
        %v293 = vld [vmem:[%s1 + $0x100] sm:$0xff]
        %v294 = vld [vmem:[%s1 + $0x108] sm:$0xff]
        %v295 = vld [vmem:[%s1 + $0x110] sm:$0xff]
        %v296 = vld [vmem:[%s1 + $0x118] sm:$0xff]
        %v297 = vld [vmem:[%s1 + $0x120] sm:$0xff]
        %v298 = vld [vmem:[%s1 + $0x128] sm:$0xff]
        %v299 = vld [vmem:[%s1 + $0x130] sm:$0xff]
        %v300 = vld [vmem:[%s1 + $0x138] sm:$0xff]
        %v301 = vld [vmem:[%s1 + $0x140] sm:$0xff]
        %v302 = vld [vmem:[%s1 + $0x148] sm:$0xff]
        %v303 = vld [vmem:[%s1 + $0x150] sm:$0xff]
        %v304 = vld [vmem:[%s1 + $0x158] sm:$0xff]
        %v305 = vld [vmem:[%s1 + $0x160] sm:$0xff]
        %v306 = vld [vmem:[%s1 + $0x168] sm:$0xff]
        %v307 = vld [vmem:[%s1 + $0x170] sm:$0xff]
        %v308 = vld [vmem:[%s1 + $0x178] sm:$0xff]
        %v309 = vld [vmem:[%s2] sm:$0x3]
        %v311 = vlaneseq
        %v312 = vshrl.u32 %v311, 7
        %v313 = vsub.s32 0, %v312
        %v314 = vrot.slane %v309, %v313
        %v315 = vlaneseq
        %v316 = vshrl.u32 %v315, 7
        %v317 = vsub.s32 1, %v316
        %v318 = vrot.slane %v309, %v317
        %vm321 = vcmask 523264
        %v323 = vsel %vm321, %v230, 0
        %v326 = vsel %vm321, %v232, 0
        %v329 = vsel %vm321, %v234, 0
        %v332 = vsel %vm321, %v236, 0
        %v335 = vsel %vm321, %v238, 0
        %v338 = vsel %vm321, %v240, 0
        %v341 = vsel %vm321, %v242, 0
        %v344 = vsel %vm321, %v244, 0
        %v347 = vsel %vm321, %v246, 0
        %v350 = vsel %vm321, %v248, 0
        %v353 = vsel %vm321, %v250, 0
        %v356 = vsel %vm321, %v252, 0
        %v359 = vsel %vm321, %v254, 0
        %v362 = vsel %vm321, %v256, 0
        %v365 = vsel %vm321, %v258, 0
        %v368 = vsel %vm321, %v260, 0
        %370 = vmatprep.subr.mxu0 %v292
        %371 = vmatpush1.msra.mxu0 %v291
        %372 = vmatprep.subr.mxu0 %v290
        %373 = vmatpush1.msra.mxu0 %v289
        %374 = vmatprep.subr.mxu0 %v288
        %375 = vmatpush1.msra.mxu0 %v287
        %376 = vmatprep.subr.mxu0 %v286
        %377 = vmatpush1.msra.mxu0 %v285
        %378 = vmatprep.subr.mxu0 %v284
        %379 = vmatpush1.msra.mxu0 %v283
        %380 = vmatprep.subr.mxu0 %v282
        %381 = vmatpush1.msra.mxu0 %v281
        %382 = vmatprep.subr.mxu0 %v280
        %383 = vmatpush1.msra.mxu0 %v279
        %384 = vmatprep.subr.mxu0 %v278
        %385 = vmatpush1.msra.mxu0 %v277
        %386 = vmatprep.subr.mxu0 %v276
        %387 = vmatpush1.msra.mxu0 %v275
        %388 = vmatprep.subr.mxu0 %v274
        %389 = vmatpush1.msra.mxu0 %v273
        %390 = vmatprep.subr.mxu0 %v272
        %391 = vmatpush1.msra.mxu0 %v271
        %392 = vmatprep.subr.mxu0 %v270
        %393 = vmatpush1.msra.mxu0 %v269
        %394 = vmatprep.subr.mxu0 %v268
        %395 = vmatpush1.msra.mxu0 %v267
        %396 = vmatprep.subr.mxu0 %v266
        %397 = vmatpush1.msra.mxu0 %v265
        %398 = vmatprep.subr.mxu0 %v264
        %399 = vmatpush1.msra.mxu0 %v263
        %400 = vmatprep.subr.mxu0 %v262
        %401 = vmatpush1.msra.mxu0 %v261
        %402 = vmatprep.subr.mxu0 0.0
        %403 = vmatpush2.msra.mxu0 0.0
        %404 = vmatprep.subr.mxu0 0.0
        %405 = vmatpush2.msra.mxu0 0.0
        %406 = vmatprep.subr.mxu0 0.0
        %407 = vmatpush2.msra.mxu0 0.0
        %408 = vmatprep.subr.mxu0 0.0
        %409 = vmatpush2.msra.mxu0 0.0
        %410 = vmatprep.subr.mxu0 0.0
        %411 = vmatpush2.msra.mxu0 0.0
        %412 = vmatprep.subr.mxu0 0.0
        %413 = vmatpush2.msra.mxu0 0.0
        %414 = vmatprep.subr.mxu0 0.0
        %415 = vmatpush2.msra.mxu0 0.0
        %416 = vmatprep.subr.mxu0 0.0
        %417 = vmatpush2.msra.mxu0 0.0
        %418 = vmatprep.subr.mxu0 %v308
        %419 = vmatpush2.msra.mxu0 %v307
        %420 = vmatprep.subr.mxu0 %v306
        %421 = vmatpush2.msra.mxu0 %v305
        %422 = vmatprep.subr.mxu0 %v304
        %423 = vmatpush2.msra.mxu0 %v303
        %424 = vmatprep.subr.mxu0 %v302
        %425 = vmatpush2.msra.mxu0 %v301
        %426 = vmatprep.subr.mxu0 %v300
        %427 = vmatpush2.msra.mxu0 %v299
        %428 = vmatprep.subr.mxu0 %v298
        %429 = vmatpush2.msra.mxu0 %v297
        %430 = vmatprep.subr.mxu0 %v296
        %431 = vmatpush2.msra.mxu0 %v295
        %432 = vmatprep.subr.mxu0 %v294
        %433 = vmatpush2.msra.mxu0 %v293
        %434 = vmatprep.mubr.f32.mxu0 %v323
        %435 = vmatmul.mubr.f32.gmra.mxu0 %v229
        %v436 = vpop.f32.mrf.mxu0
        %v437 = vadd.f32 %v314, %v436
        %v438 = vpop.f32.mrf.mxu0
        %v439 = vadd.f32 %v318, %v438
        %440 = vmatprep.mubr.f32.mxu0 %v326
        %441 = vmatmul.mubr.f32.gmra.mxu0 %v231
        %v442 = vpop.f32.mrf.mxu0
        %v443 = vadd.f32 %v314, %v442
        %v444 = vpop.f32.mrf.mxu0
        %v445 = vadd.f32 %v318, %v444
        %446 = vmatprep.mubr.f32.mxu0 %v329
        %447 = vmatmul.mubr.f32.gmra.mxu0 %v233
        %v448 = vpop.f32.mrf.mxu0
        %v449 = vadd.f32 %v314, %v448
        %v450 = vpop.f32.mrf.mxu0
        %v451 = vadd.f32 %v318, %v450
        %452 = vmatprep.mubr.f32.mxu0 %v332
        %453 = vmatmul.mubr.f32.gmra.mxu0 %v235
        %v454 = vpop.f32.mrf.mxu0
        %v455 = vadd.f32 %v314, %v454
        %v456 = vpop.f32.mrf.mxu0
        %v457 = vadd.f32 %v318, %v456
        %458 = vmatprep.mubr.f32.mxu0 %v335
        %459 = vmatmul.mubr.f32.gmra.mxu0 %v237
        %v460 = vpop.f32.mrf.mxu0
        %v461 = vadd.f32 %v314, %v460
        %v462 = vpop.f32.mrf.mxu0
        %v463 = vadd.f32 %v318, %v462
        %464 = vmatprep.mubr.f32.mxu0 %v338
        %465 = vmatmul.mubr.f32.gmra.mxu0 %v239
        %v466 = vpop.f32.mrf.mxu0
        %v467 = vadd.f32 %v314, %v466
        %v468 = vpop.f32.mrf.mxu0
        %v469 = vadd.f32 %v318, %v468
        %470 = vmatprep.mubr.f32.mxu0 %v341
        %471 = vmatmul.mubr.f32.gmra.mxu0 %v241
        %v472 = vpop.f32.mrf.mxu0
        %v473 = vadd.f32 %v314, %v472
        %v474 = vpop.f32.mrf.mxu0
        %v475 = vadd.f32 %v318, %v474
        %476 = vmatprep.mubr.f32.mxu0 %v344
        %477 = vmatmul.mubr.f32.gmra.mxu0 %v243
        %v478 = vpop.f32.mrf.mxu0
        %v479 = vadd.f32 %v314, %v478
        %v480 = vpop.f32.mrf.mxu0
        %v481 = vadd.f32 %v318, %v480
        %482 = vmatprep.mubr.f32.mxu0 %v347
        %483 = vmatmul.mubr.f32.gmra.mxu0 %v245
        %v484 = vpop.f32.mrf.mxu0
        %v485 = vadd.f32 %v314, %v484
        %v486 = vpop.f32.mrf.mxu0
        %v487 = vadd.f32 %v318, %v486
        %488 = vmatprep.mubr.f32.mxu0 %v350
        %489 = vmatmul.mubr.f32.gmra.mxu0 %v247
        %v490 = vpop.f32.mrf.mxu0
        %v491 = vadd.f32 %v314, %v490
        %v492 = vpop.f32.mrf.mxu0
        %v493 = vadd.f32 %v318, %v492
        %494 = vmatprep.mubr.f32.mxu0 %v353
        %495 = vmatmul.mubr.f32.gmra.mxu0 %v249
        %v496 = vpop.f32.mrf.mxu0
        %v497 = vadd.f32 %v314, %v496
        %v498 = vpop.f32.mrf.mxu0
        %v499 = vadd.f32 %v318, %v498
        %500 = vmatprep.mubr.f32.mxu0 %v356
        %501 = vmatmul.mubr.f32.gmra.mxu0 %v251
        %v502 = vpop.f32.mrf.mxu0
        %v503 = vadd.f32 %v314, %v502
        %v504 = vpop.f32.mrf.mxu0
        %v505 = vadd.f32 %v318, %v504
        %506 = vmatprep.mubr.f32.mxu0 %v359
        %507 = vmatmul.mubr.f32.gmra.mxu0 %v253
        %v508 = vpop.f32.mrf.mxu0
        %v509 = vadd.f32 %v314, %v508
        %v510 = vpop.f32.mrf.mxu0
        %v511 = vadd.f32 %v318, %v510
        %512 = vmatprep.mubr.f32.mxu0 %v362
        %513 = vmatmul.mubr.f32.gmra.mxu0 %v255
        %v514 = vpop.f32.mrf.mxu0
        %v515 = vadd.f32 %v314, %v514
        %v516 = vpop.f32.mrf.mxu0
        %v517 = vadd.f32 %v318, %v516
        %518 = vmatprep.mubr.f32.mxu0 %v365
        %519 = vmatmul.mubr.f32.gmra.mxu0 %v257
        %v520 = vpop.f32.mrf.mxu0
        %v521 = vadd.f32 %v314, %v520
        %v522 = vpop.f32.mrf.mxu0
        %v523 = vadd.f32 %v318, %v522
        %524 = vmatprep.mubr.f32.mxu0 %v368
        %525 = vmatmul.mubr.f32.gmra.mxu0 %v259
        %v526 = vpop.f32.mrf.mxu0
        %v527 = vadd.f32 %v314, %v526
        %v528 = vpop.f32.mrf.mxu0
        %v529 = vadd.f32 %v318, %v528
        %530 = vdwg.mxu0
        %v531 = vmax.f32 %v437, 0.0
        %v532 = vmax.f32 %v443, 0.0
        %v533 = vmax.f32 %v449, 0.0
        %v534 = vmax.f32 %v455, 0.0
        %v535 = vmax.f32 %v461, 0.0
        %v536 = vmax.f32 %v467, 0.0
        %v537 = vmax.f32 %v473, 0.0
        %v538 = vmax.f32 %v479, 0.0
        %v539 = vmax.f32 %v485, 0.0
        %v540 = vmax.f32 %v491, 0.0
        %v541 = vmax.f32 %v497, 0.0
        %v542 = vmax.f32 %v503, 0.0
        %v543 = vmax.f32 %v509, 0.0
        %v544 = vmax.f32 %v515, 0.0
        %v545 = vmax.f32 %v521, 0.0
        %v546 = vmax.f32 %v527, 0.0
        %v547 = vlaneseq
        %v548 = vshrl.u32 %v547, 7
        %v549 = vadd.s32 %v548, 8
        %v550 = vadd.s32 %v548, 16
        %v551 = vadd.s32 %v548, 24
        %v552 = vadd.s32 %v548, 32
        %v553 = vadd.s32 %v548, 40
        %v554 = vadd.s32 %v548, 48
        %v555 = vadd.s32 %v548, 56
        %v556 = vadd.s32 %v548, 64
        %v557 = vadd.s32 %v548, 72
        %v558 = vadd.s32 %v548, 80
        %v559 = vadd.s32 %v548, 88
        %v560 = vadd.s32 %v548, 96
        %v561 = vadd.s32 %v548, 104
        %v562 = vadd.s32 %v548, 112
        %v563 = vadd.s32 %v548, 120
        %vm564 = vcmp.eq.s32.totalorder %v548, 0
        %vm565 = vcmp.eq.s32.totalorder %v549, 0
        %vm566 = vcmp.eq.s32.totalorder %v550, 0
        %vm567 = vcmp.eq.s32.totalorder %v551, 0
        %vm568 = vcmp.eq.s32.totalorder %v552, 0
        %vm569 = vcmp.eq.s32.totalorder %v553, 0
        %vm570 = vcmp.eq.s32.totalorder %v554, 0
        %vm571 = vcmp.eq.s32.totalorder %v555, 0
        %vm572 = vcmp.eq.s32.totalorder %v556, 0
        %vm573 = vcmp.eq.s32.totalorder %v557, 0
        %vm574 = vcmp.eq.s32.totalorder %v558, 0
        %vm575 = vcmp.eq.s32.totalorder %v559, 0
        %vm576 = vcmp.eq.s32.totalorder %v560, 0
        %vm577 = vcmp.eq.s32.totalorder %v561, 0
        %vm578 = vcmp.eq.s32.totalorder %v562, 0
        %vm579 = vcmp.eq.s32.totalorder %v563, 0
        %vm580 = vcmp.eq.s32.totalorder %v548, 15
        %vm581 = vcmp.eq.s32.totalorder %v549, 15
        %vm582 = vcmp.eq.s32.totalorder %v550, 15
        %vm583 = vcmp.eq.s32.totalorder %v551, 15
        %vm584 = vcmp.eq.s32.totalorder %v552, 15
        %vm585 = vcmp.eq.s32.totalorder %v553, 15
        %vm586 = vcmp.eq.s32.totalorder %v554, 15
        %vm587 = vcmp.eq.s32.totalorder %v555, 15
        %vm588 = vcmp.eq.s32.totalorder %v556, 15
        %vm589 = vcmp.eq.s32.totalorder %v557, 15
        %vm590 = vcmp.eq.s32.totalorder %v558, 15
        %vm591 = vcmp.eq.s32.totalorder %v559, 15
        %vm592 = vcmp.eq.s32.totalorder %v560, 15
        %vm593 = vcmp.eq.s32.totalorder %v561, 15
        %vm594 = vcmp.eq.s32.totalorder %v562, 15
        %vm595 = vcmp.eq.s32.totalorder %v563, 15
        %vm596 = vcmp.eq.s32.totalorder %v548, 16
        %vm597 = vcmp.eq.s32.totalorder %v549, 16
        %vm598 = vcmp.eq.s32.totalorder %v550, 16
        %vm599 = vcmp.eq.s32.totalorder %v551, 16
        %vm600 = vcmp.eq.s32.totalorder %v552, 16
        %vm601 = vcmp.eq.s32.totalorder %v553, 16
        %vm602 = vcmp.eq.s32.totalorder %v554, 16
        %vm603 = vcmp.eq.s32.totalorder %v555, 16
        %vm604 = vcmp.eq.s32.totalorder %v556, 16
        %vm605 = vcmp.eq.s32.totalorder %v557, 16
        %vm606 = vcmp.eq.s32.totalorder %v558, 16
        %vm607 = vcmp.eq.s32.totalorder %v559, 16
        %vm608 = vcmp.eq.s32.totalorder %v560, 16
        %vm609 = vcmp.eq.s32.totalorder %v561, 16
        %vm610 = vcmp.eq.s32.totalorder %v562, 16
        %vm611 = vcmp.eq.s32.totalorder %v563, 16
        %vm612 = vmor %vm564, %vm596
        %vm613 = vmor %vm565, %vm597
        %vm614 = vmor %vm566, %vm598
        %vm615 = vmor %vm567, %vm599
        %vm616 = vmor %vm568, %vm600
        %vm617 = vmor %vm569, %vm601
        %vm618 = vmor %vm570, %vm602
        %vm619 = vmor %vm571, %vm603
        %vm620 = vmor %vm572, %vm604
        %vm621 = vmor %vm573, %vm605
        %vm622 = vmor %vm574, %vm606
        %vm623 = vmor %vm575, %vm607
        %vm624 = vmor %vm576, %vm608
        %vm625 = vmor %vm577, %vm609
        %vm626 = vmor %vm578, %vm610
        %vm627 = vmor %vm579, %vm611
        %vm628 = vcmp.eq.s32.totalorder %v548, 31
        %vm629 = vcmp.eq.s32.totalorder %v549, 31
        %vm630 = vcmp.eq.s32.totalorder %v550, 31
        %vm631 = vcmp.eq.s32.totalorder %v551, 31
        %vm632 = vcmp.eq.s32.totalorder %v552, 31
        %vm633 = vcmp.eq.s32.totalorder %v553, 31
        %vm634 = vcmp.eq.s32.totalorder %v554, 31
        %vm635 = vcmp.eq.s32.totalorder %v555, 31
        %vm636 = vcmp.eq.s32.totalorder %v556, 31
        %vm637 = vcmp.eq.s32.totalorder %v557, 31
        %vm638 = vcmp.eq.s32.totalorder %v558, 31
        %vm639 = vcmp.eq.s32.totalorder %v559, 31
        %vm640 = vcmp.eq.s32.totalorder %v560, 31
        %vm641 = vcmp.eq.s32.totalorder %v561, 31
        %vm642 = vcmp.eq.s32.totalorder %v562, 31
        %vm643 = vcmp.eq.s32.totalorder %v563, 31
        %vm644 = vmor %vm580, %vm628
        %vm645 = vmor %vm581, %vm629
        %vm646 = vmor %vm582, %vm630
        %vm647 = vmor %vm583, %vm631
        %vm648 = vmor %vm584, %vm632
        %vm649 = vmor %vm585, %vm633
        %vm650 = vmor %vm586, %vm634
        %vm651 = vmor %vm587, %vm635
        %vm652 = vmor %vm588, %vm636
        %vm653 = vmor %vm589, %vm637
        %vm654 = vmor %vm590, %vm638
        %vm655 = vmor %vm591, %vm639
        %vm656 = vmor %vm592, %vm640
        %vm657 = vmor %vm593, %vm641
        %vm658 = vmor %vm594, %vm642
        %vm659 = vmor %vm595, %vm643
        %vm660 = vcmp.eq.s32.totalorder %v548, 32
        %vm661 = vcmp.eq.s32.totalorder %v549, 32
        %vm662 = vcmp.eq.s32.totalorder %v550, 32
        %vm663 = vcmp.eq.s32.totalorder %v551, 32
        %vm664 = vcmp.eq.s32.totalorder %v552, 32
        %vm665 = vcmp.eq.s32.totalorder %v553, 32
        %vm666 = vcmp.eq.s32.totalorder %v554, 32
        %vm667 = vcmp.eq.s32.totalorder %v555, 32
        %vm668 = vcmp.eq.s32.totalorder %v556, 32
        %vm669 = vcmp.eq.s32.totalorder %v557, 32
        %vm670 = vcmp.eq.s32.totalorder %v558, 32
        %vm671 = vcmp.eq.s32.totalorder %v559, 32
        %vm672 = vcmp.eq.s32.totalorder %v560, 32
        %vm673 = vcmp.eq.s32.totalorder %v561, 32
        %vm674 = vcmp.eq.s32.totalorder %v562, 32
        %vm675 = vcmp.eq.s32.totalorder %v563, 32
        %vm676 = vmor %vm612, %vm660
        %vm677 = vmor %vm613, %vm661
        %vm678 = vmor %vm614, %vm662
        %vm679 = vmor %vm615, %vm663
        %vm680 = vmor %vm616, %vm664
        %vm681 = vmor %vm617, %vm665
        %vm682 = vmor %vm618, %vm666
        %vm683 = vmor %vm619, %vm667
        %vm684 = vmor %vm620, %vm668
        %vm685 = vmor %vm621, %vm669
        %vm686 = vmor %vm622, %vm670
        %vm687 = vmor %vm623, %vm671
        %vm688 = vmor %vm624, %vm672
        %vm689 = vmor %vm625, %vm673
        %vm690 = vmor %vm626, %vm674
        %vm691 = vmor %vm627, %vm675
        %vm692 = vcmp.eq.s32.totalorder %v548, 47
        %vm693 = vcmp.eq.s32.totalorder %v549, 47
        %vm694 = vcmp.eq.s32.totalorder %v550, 47
        %vm695 = vcmp.eq.s32.totalorder %v551, 47
        %vm696 = vcmp.eq.s32.totalorder %v552, 47
        %vm697 = vcmp.eq.s32.totalorder %v553, 47
        %vm698 = vcmp.eq.s32.totalorder %v554, 47
        %vm699 = vcmp.eq.s32.totalorder %v555, 47
        %vm700 = vcmp.eq.s32.totalorder %v556, 47
        %vm701 = vcmp.eq.s32.totalorder %v557, 47
        %vm702 = vcmp.eq.s32.totalorder %v558, 47
        %vm703 = vcmp.eq.s32.totalorder %v559, 47
        %vm704 = vcmp.eq.s32.totalorder %v560, 47
        %vm705 = vcmp.eq.s32.totalorder %v561, 47
        %vm706 = vcmp.eq.s32.totalorder %v562, 47
        %vm707 = vcmp.eq.s32.totalorder %v563, 47
        %vm708 = vmor %vm644, %vm692
        %vm709 = vmor %vm645, %vm693
        %vm710 = vmor %vm646, %vm694
        %vm711 = vmor %vm647, %vm695
        %vm712 = vmor %vm648, %vm696
        %vm713 = vmor %vm649, %vm697
        %vm714 = vmor %vm650, %vm698
        %vm715 = vmor %vm651, %vm699
        %vm716 = vmor %vm652, %vm700
        %vm717 = vmor %vm653, %vm701
        %vm718 = vmor %vm654, %vm702
        %vm719 = vmor %vm655, %vm703
        %vm720 = vmor %vm656, %vm704
        %vm721 = vmor %vm657, %vm705
        %vm722 = vmor %vm658, %vm706
        %vm723 = vmor %vm659, %vm707
        %vm724 = vcmp.eq.s32.totalorder %v548, 48
        %vm725 = vcmp.eq.s32.totalorder %v549, 48
        %vm726 = vcmp.eq.s32.totalorder %v550, 48
        %vm727 = vcmp.eq.s32.totalorder %v551, 48
        %vm728 = vcmp.eq.s32.totalorder %v552, 48
        %vm729 = vcmp.eq.s32.totalorder %v553, 48
        %vm730 = vcmp.eq.s32.totalorder %v554, 48
        %vm731 = vcmp.eq.s32.totalorder %v555, 48
        %vm732 = vcmp.eq.s32.totalorder %v556, 48
        %vm733 = vcmp.eq.s32.totalorder %v557, 48
        %vm734 = vcmp.eq.s32.totalorder %v558, 48
        %vm735 = vcmp.eq.s32.totalorder %v559, 48
        %vm736 = vcmp.eq.s32.totalorder %v560, 48
        %vm737 = vcmp.eq.s32.totalorder %v561, 48
        %vm738 = vcmp.eq.s32.totalorder %v562, 48
        %vm739 = vcmp.eq.s32.totalorder %v563, 48
        %vm740 = vmor %vm676, %vm724
        %vm741 = vmor %vm677, %vm725
        %vm742 = vmor %vm678, %vm726
        %vm743 = vmor %vm679, %vm727
        %vm744 = vmor %vm680, %vm728
        %vm745 = vmor %vm681, %vm729
        %vm746 = vmor %vm682, %vm730
        %vm747 = vmor %vm683, %vm731
        %vm748 = vmor %vm684, %vm732
        %vm749 = vmor %vm685, %vm733
        %vm750 = vmor %vm686, %vm734
        %vm751 = vmor %vm687, %vm735
        %vm752 = vmor %vm688, %vm736
        %vm753 = vmor %vm689, %vm737
        %vm754 = vmor %vm690, %vm738
        %vm755 = vmor %vm691, %vm739
        %vm756 = vcmp.eq.s32.totalorder %v548, 63
        %vm757 = vcmp.eq.s32.totalorder %v549, 63
        %vm758 = vcmp.eq.s32.totalorder %v550, 63
        %vm759 = vcmp.eq.s32.totalorder %v551, 63
        %vm760 = vcmp.eq.s32.totalorder %v552, 63
        %vm761 = vcmp.eq.s32.totalorder %v553, 63
        %vm762 = vcmp.eq.s32.totalorder %v554, 63
        %vm763 = vcmp.eq.s32.totalorder %v555, 63
        %vm764 = vcmp.eq.s32.totalorder %v556, 63
        %vm765 = vcmp.eq.s32.totalorder %v557, 63
        %vm766 = vcmp.eq.s32.totalorder %v558, 63
        %vm767 = vcmp.eq.s32.totalorder %v559, 63
        %vm768 = vcmp.eq.s32.totalorder %v560, 63
        %vm769 = vcmp.eq.s32.totalorder %v561, 63
        %vm770 = vcmp.eq.s32.totalorder %v562, 63
        %vm771 = vcmp.eq.s32.totalorder %v563, 63
        %vm772 = vmor %vm708, %vm756
        %vm773 = vmor %vm709, %vm757
        %vm774 = vmor %vm710, %vm758
        %vm775 = vmor %vm711, %vm759
        %vm776 = vmor %vm712, %vm760
        %vm777 = vmor %vm713, %vm761
        %vm778 = vmor %vm714, %vm762
        %vm779 = vmor %vm715, %vm763
        %vm780 = vmor %vm716, %vm764
        %vm781 = vmor %vm717, %vm765
        %vm782 = vmor %vm718, %vm766
        %vm783 = vmor %vm719, %vm767
        %vm784 = vmor %vm720, %vm768
        %vm785 = vmor %vm721, %vm769
        %vm786 = vmor %vm722, %vm770
        %vm787 = vmor %vm723, %vm771
        %vm788 = vcmp.eq.s32.totalorder %v548, 64
        %vm789 = vcmp.eq.s32.totalorder %v549, 64
        %vm790 = vcmp.eq.s32.totalorder %v550, 64
        %vm791 = vcmp.eq.s32.totalorder %v551, 64
        %vm792 = vcmp.eq.s32.totalorder %v552, 64
        %vm793 = vcmp.eq.s32.totalorder %v553, 64
        %vm794 = vcmp.eq.s32.totalorder %v554, 64
        %vm795 = vcmp.eq.s32.totalorder %v555, 64
        %vm796 = vcmp.eq.s32.totalorder %v556, 64
        %vm797 = vcmp.eq.s32.totalorder %v557, 64
        %vm798 = vcmp.eq.s32.totalorder %v558, 64
        %vm799 = vcmp.eq.s32.totalorder %v559, 64
        %vm800 = vcmp.eq.s32.totalorder %v560, 64
        %vm801 = vcmp.eq.s32.totalorder %v561, 64
        %vm802 = vcmp.eq.s32.totalorder %v562, 64
        %vm803 = vcmp.eq.s32.totalorder %v563, 64
        %vm804 = vmor %vm740, %vm788
        %vm805 = vmor %vm741, %vm789
        %vm806 = vmor %vm742, %vm790
        %vm807 = vmor %vm743, %vm791
        %vm808 = vmor %vm744, %vm792
        %vm809 = vmor %vm745, %vm793
        %vm810 = vmor %vm746, %vm794
        %vm811 = vmor %vm747, %vm795
        %vm812 = vmor %vm748, %vm796
        %vm813 = vmor %vm749, %vm797
        %vm814 = vmor %vm750, %vm798
        %vm815 = vmor %vm751, %vm799
        %vm816 = vmor %vm752, %vm800
        %vm817 = vmor %vm753, %vm801
        %vm818 = vmor %vm754, %vm802
        %vm819 = vmor %vm755, %vm803
        %vm820 = vcmp.eq.s32.totalorder %v548, 79
        %vm821 = vcmp.eq.s32.totalorder %v549, 79
        %vm822 = vcmp.eq.s32.totalorder %v550, 79
        %vm823 = vcmp.eq.s32.totalorder %v551, 79
        %vm824 = vcmp.eq.s32.totalorder %v552, 79
        %vm825 = vcmp.eq.s32.totalorder %v553, 79
        %vm826 = vcmp.eq.s32.totalorder %v554, 79
        %vm827 = vcmp.eq.s32.totalorder %v555, 79
        %vm828 = vcmp.eq.s32.totalorder %v556, 79
        %vm829 = vcmp.eq.s32.totalorder %v557, 79
        %vm830 = vcmp.eq.s32.totalorder %v558, 79
        %vm831 = vcmp.eq.s32.totalorder %v559, 79
        %vm832 = vcmp.eq.s32.totalorder %v560, 79
        %vm833 = vcmp.eq.s32.totalorder %v561, 79
        %vm834 = vcmp.eq.s32.totalorder %v562, 79
        %vm835 = vcmp.eq.s32.totalorder %v563, 79
        %vm836 = vmor %vm772, %vm820
        %vm837 = vmor %vm773, %vm821
        %vm838 = vmor %vm774, %vm822
        %vm839 = vmor %vm775, %vm823
        %vm840 = vmor %vm776, %vm824
        %vm841 = vmor %vm777, %vm825
        %vm842 = vmor %vm778, %vm826
        %vm843 = vmor %vm779, %vm827
        %vm844 = vmor %vm780, %vm828
        %vm845 = vmor %vm781, %vm829
        %vm846 = vmor %vm782, %vm830
        %vm847 = vmor %vm783, %vm831
        %vm848 = vmor %vm784, %vm832
        %vm849 = vmor %vm785, %vm833
        %vm850 = vmor %vm786, %vm834
        %vm851 = vmor %vm787, %vm835
        %vm852 = vcmp.eq.s32.totalorder %v548, 80
        %vm853 = vcmp.eq.s32.totalorder %v549, 80
        %vm854 = vcmp.eq.s32.totalorder %v550, 80
        %vm855 = vcmp.eq.s32.totalorder %v551, 80
        %vm856 = vcmp.eq.s32.totalorder %v552, 80
        %vm857 = vcmp.eq.s32.totalorder %v553, 80
        %vm858 = vcmp.eq.s32.totalorder %v554, 80
        %vm859 = vcmp.eq.s32.totalorder %v555, 80
        %vm860 = vcmp.eq.s32.totalorder %v556, 80
        %vm861 = vcmp.eq.s32.totalorder %v557, 80
        %vm862 = vcmp.eq.s32.totalorder %v558, 80
        %vm863 = vcmp.eq.s32.totalorder %v559, 80
        %vm864 = vcmp.eq.s32.totalorder %v560, 80
        %vm865 = vcmp.eq.s32.totalorder %v561, 80
        %vm866 = vcmp.eq.s32.totalorder %v562, 80
        %vm867 = vcmp.eq.s32.totalorder %v563, 80
        %vm868 = vmor %vm804, %vm852
        %vm869 = vmor %vm805, %vm853
        %vm870 = vmor %vm806, %vm854
        %vm871 = vmor %vm807, %vm855
        %vm872 = vmor %vm808, %vm856
        %vm873 = vmor %vm809, %vm857
        %vm874 = vmor %vm810, %vm858
        %vm875 = vmor %vm811, %vm859
        %vm876 = vmor %vm812, %vm860
        %vm877 = vmor %vm813, %vm861
        %vm878 = vmor %vm814, %vm862
        %vm879 = vmor %vm815, %vm863
        %vm880 = vmor %vm816, %vm864
        %vm881 = vmor %vm817, %vm865
        %vm882 = vmor %vm818, %vm866
        %vm883 = vmor %vm819, %vm867
        %vm884 = vcmp.eq.s32.totalorder %v548, 95
        %vm885 = vcmp.eq.s32.totalorder %v549, 95
        %vm886 = vcmp.eq.s32.totalorder %v550, 95
        %vm887 = vcmp.eq.s32.totalorder %v551, 95
        %vm888 = vcmp.eq.s32.totalorder %v552, 95
        %vm889 = vcmp.eq.s32.totalorder %v553, 95
        %vm890 = vcmp.eq.s32.totalorder %v554, 95
        %vm891 = vcmp.eq.s32.totalorder %v555, 95
        %vm892 = vcmp.eq.s32.totalorder %v556, 95
        %vm893 = vcmp.eq.s32.totalorder %v557, 95
        %vm894 = vcmp.eq.s32.totalorder %v558, 95
        %vm895 = vcmp.eq.s32.totalorder %v559, 95
        %vm896 = vcmp.eq.s32.totalorder %v560, 95
        %vm897 = vcmp.eq.s32.totalorder %v561, 95
        %vm898 = vcmp.eq.s32.totalorder %v562, 95
        %vm899 = vcmp.eq.s32.totalorder %v563, 95
        %vm900 = vmor %vm836, %vm884
        %vm901 = vmor %vm837, %vm885
        %vm902 = vmor %vm838, %vm886
        %vm903 = vmor %vm839, %vm887
        %vm904 = vmor %vm840, %vm888
        %vm905 = vmor %vm841, %vm889
        %vm906 = vmor %vm842, %vm890
        %vm907 = vmor %vm843, %vm891
        %vm908 = vmor %vm844, %vm892
        %vm909 = vmor %vm845, %vm893
        %vm910 = vmor %vm846, %vm894
        %vm911 = vmor %vm847, %vm895
        %vm912 = vmor %vm848, %vm896
        %vm913 = vmor %vm849, %vm897
        %vm914 = vmor %vm850, %vm898
        %vm915 = vmor %vm851, %vm899
        %vm916 = vcmp.eq.s32.totalorder %v548, 96
        %vm917 = vcmp.eq.s32.totalorder %v549, 96
        %vm918 = vcmp.eq.s32.totalorder %v550, 96
        %vm919 = vcmp.eq.s32.totalorder %v551, 96
        %vm920 = vcmp.eq.s32.totalorder %v552, 96
        %vm921 = vcmp.eq.s32.totalorder %v553, 96
        %vm922 = vcmp.eq.s32.totalorder %v554, 96
        %vm923 = vcmp.eq.s32.totalorder %v555, 96
        %vm924 = vcmp.eq.s32.totalorder %v556, 96
        %vm925 = vcmp.eq.s32.totalorder %v557, 96
        %vm926 = vcmp.eq.s32.totalorder %v558, 96
        %vm927 = vcmp.eq.s32.totalorder %v559, 96
        %vm928 = vcmp.eq.s32.totalorder %v560, 96
        %vm929 = vcmp.eq.s32.totalorder %v561, 96
        %vm930 = vcmp.eq.s32.totalorder %v562, 96
        %vm931 = vcmp.eq.s32.totalorder %v563, 96
        %vm932 = vmor %vm868, %vm916
        %vm933 = vmor %vm869, %vm917
        %vm934 = vmor %vm870, %vm918
        %vm935 = vmor %vm871, %vm919
        %vm936 = vmor %vm872, %vm920
        %vm937 = vmor %vm873, %vm921
        %vm938 = vmor %vm874, %vm922
        %vm939 = vmor %vm875, %vm923
        %vm940 = vmor %vm876, %vm924
        %vm941 = vmor %vm877, %vm925
        %vm942 = vmor %vm878, %vm926
        %vm943 = vmor %vm879, %vm927
        %vm944 = vmor %vm880, %vm928
        %vm945 = vmor %vm881, %vm929
        %vm946 = vmor %vm882, %vm930
        %vm947 = vmor %vm883, %vm931
        %vm948 = vcmp.eq.s32.totalorder %v548, 111
        %vm949 = vcmp.eq.s32.totalorder %v549, 111
        %vm950 = vcmp.eq.s32.totalorder %v550, 111
        %vm951 = vcmp.eq.s32.totalorder %v551, 111
        %vm952 = vcmp.eq.s32.totalorder %v552, 111
        %vm953 = vcmp.eq.s32.totalorder %v553, 111
        %vm954 = vcmp.eq.s32.totalorder %v554, 111
        %vm955 = vcmp.eq.s32.totalorder %v555, 111
        %vm956 = vcmp.eq.s32.totalorder %v556, 111
        %vm957 = vcmp.eq.s32.totalorder %v557, 111
        %vm958 = vcmp.eq.s32.totalorder %v558, 111
        %vm959 = vcmp.eq.s32.totalorder %v559, 111
        %vm960 = vcmp.eq.s32.totalorder %v560, 111
        %vm961 = vcmp.eq.s32.totalorder %v561, 111
        %vm962 = vcmp.eq.s32.totalorder %v562, 111
        %vm963 = vcmp.eq.s32.totalorder %v563, 111
        %vm964 = vmor %vm900, %vm948
        %vm965 = vmor %vm901, %vm949
        %vm966 = vmor %vm902, %vm950
        %vm967 = vmor %vm903, %vm951
        %vm968 = vmor %vm904, %vm952
        %vm969 = vmor %vm905, %vm953
        %vm970 = vmor %vm906, %vm954
        %vm971 = vmor %vm907, %vm955
        %vm972 = vmor %vm908, %vm956
        %vm973 = vmor %vm909, %vm957
        %vm974 = vmor %vm910, %vm958
        %vm975 = vmor %vm911, %vm959
        %vm976 = vmor %vm912, %vm960
        %vm977 = vmor %vm913, %vm961
        %vm978 = vmor %vm914, %vm962
        %vm979 = vmor %vm915, %vm963
        %vm980 = vcmp.eq.s32.totalorder %v548, 112
        %vm981 = vcmp.eq.s32.totalorder %v549, 112
        %vm982 = vcmp.eq.s32.totalorder %v550, 112
        %vm983 = vcmp.eq.s32.totalorder %v551, 112
        %vm984 = vcmp.eq.s32.totalorder %v552, 112
        %vm985 = vcmp.eq.s32.totalorder %v553, 112
        %vm986 = vcmp.eq.s32.totalorder %v554, 112
        %vm987 = vcmp.eq.s32.totalorder %v555, 112
        %vm988 = vcmp.eq.s32.totalorder %v556, 112
        %vm989 = vcmp.eq.s32.totalorder %v557, 112
        %vm990 = vcmp.eq.s32.totalorder %v558, 112
        %vm991 = vcmp.eq.s32.totalorder %v559, 112
        %vm992 = vcmp.eq.s32.totalorder %v560, 112
        %vm993 = vcmp.eq.s32.totalorder %v561, 112
        %vm994 = vcmp.eq.s32.totalorder %v562, 112
        %vm995 = vcmp.eq.s32.totalorder %v563, 112
        %vm996 = vmor %vm932, %vm980
        %vm997 = vmor %vm933, %vm981
        %vm998 = vmor %vm934, %vm982
        %vm999 = vmor %vm935, %vm983
        %vm1000 = vmor %vm936, %vm984
        %vm1001 = vmor %vm937, %vm985
        %vm1002 = vmor %vm938, %vm986
        %vm1003 = vmor %vm939, %vm987
        %vm1004 = vmor %vm940, %vm988
        %vm1005 = vmor %vm941, %vm989
        %vm1006 = vmor %vm942, %vm990
        %vm1007 = vmor %vm943, %vm991
        %vm1008 = vmor %vm944, %vm992
        %vm1009 = vmor %vm945, %vm993
        %vm1010 = vmor %vm946, %vm994
        %vm1011 = vmor %vm947, %vm995
        %vm1012 = vcmp.eq.s32.totalorder %v548, 127
        %vm1013 = vcmp.eq.s32.totalorder %v549, 127
        %vm1014 = vcmp.eq.s32.totalorder %v550, 127
        %vm1015 = vcmp.eq.s32.totalorder %v551, 127
        %vm1016 = vcmp.eq.s32.totalorder %v552, 127
        %vm1017 = vcmp.eq.s32.totalorder %v553, 127
        %vm1018 = vcmp.eq.s32.totalorder %v554, 127
        %vm1019 = vcmp.eq.s32.totalorder %v555, 127
        %vm1020 = vcmp.eq.s32.totalorder %v556, 127
        %vm1021 = vcmp.eq.s32.totalorder %v557, 127
        %vm1022 = vcmp.eq.s32.totalorder %v558, 127
        %vm1023 = vcmp.eq.s32.totalorder %v559, 127
        %vm1024 = vcmp.eq.s32.totalorder %v560, 127
        %vm1025 = vcmp.eq.s32.totalorder %v561, 127
        %vm1026 = vcmp.eq.s32.totalorder %v562, 127
        %vm1027 = vcmp.eq.s32.totalorder %v563, 127
        %vm1028 = vmor %vm964, %vm1012
        %vm1029 = vmor %vm965, %vm1013
        %vm1030 = vmor %vm966, %vm1014
        %vm1031 = vmor %vm967, %vm1015
        %vm1032 = vmor %vm968, %vm1016
        %vm1033 = vmor %vm969, %vm1017
        %vm1034 = vmor %vm970, %vm1018
        %vm1035 = vmor %vm971, %vm1019
        %vm1036 = vmor %vm972, %vm1020
        %vm1037 = vmor %vm973, %vm1021
        %vm1038 = vmor %vm974, %vm1022
        %vm1039 = vmor %vm975, %vm1023
        %vm1040 = vmor %vm976, %vm1024
        %vm1041 = vmor %vm977, %vm1025
        %vm1042 = vmor %vm978, %vm1026
        %vm1043 = vmor %vm979, %vm1027
        %v1044 = vrot.slane %v531, 7
        %v1045 = vrot.slane %v532, 7
        %v1046 = vrot.slane %v533, 7
        %v1047 = vrot.slane %v534, 7
        %v1048 = vrot.slane %v535, 7
        %v1049 = vrot.slane %v536, 7
        %v1050 = vrot.slane %v537, 7
        %v1051 = vrot.slane %v538, 7
        %v1052 = vrot.slane %v539, 7
        %v1053 = vrot.slane %v540, 7
        %v1054 = vrot.slane %v541, 7
        %v1055 = vrot.slane %v542, 7
        %v1056 = vrot.slane %v543, 7
        %v1057 = vrot.slane %v544, 7
        %v1058 = vrot.slane %v545, 7
        %v1059 = vrot.slane %v546, 7
        %vm1060 = vcmp.lt.s32.totalorder %v548, 1
        %v1061 = vsel %vm1060, %v1058, %v1059
        %v1062 = vsel %vm1060, %v1057, %v1058
        %v1063 = vsel %vm1060, %v1056, %v1057
        %v1064 = vsel %vm1060, %v1055, %v1056
        %v1065 = vsel %vm1060, %v1054, %v1055
        %v1066 = vsel %vm1060, %v1053, %v1054
        %v1067 = vsel %vm1060, %v1052, %v1053
        %v1068 = vsel %vm1060, %v1051, %v1052
        %v1069 = vsel %vm1060, %v1050, %v1051
        %v1070 = vsel %vm1060, %v1049, %v1050
        %v1071 = vsel %vm1060, %v1048, %v1049
        %v1072 = vsel %vm1060, %v1047, %v1048
        %v1073 = vsel %vm1060, %v1046, %v1047
        %v1074 = vsel %vm1060, %v1045, %v1046
        %v1075 = vsel %vm1060, %v1044, %v1045
        %v1076 = vsel %vm1060, %v1059, %v1044
        %v1077 = vsel %vm996, 0.0, %v1076
        %v1078 = vsel %vm997, 0.0, %v1075
        %v1079 = vsel %vm998, 0.0, %v1074
        %v1080 = vsel %vm999, 0.0, %v1073
        %v1081 = vsel %vm1000, 0.0, %v1072
        %v1082 = vsel %vm1001, 0.0, %v1071
        %v1083 = vsel %vm1002, 0.0, %v1070
        %v1084 = vsel %vm1003, 0.0, %v1069
        %v1085 = vsel %vm1004, 0.0, %v1068
        %v1086 = vsel %vm1005, 0.0, %v1067
        %v1087 = vsel %vm1006, 0.0, %v1066
        %v1088 = vsel %vm1007, 0.0, %v1065
        %v1089 = vsel %vm1008, 0.0, %v1064
        %v1090 = vsel %vm1009, 0.0, %v1063
        %v1091 = vsel %vm1010, 0.0, %v1062
        %v1092 = vsel %vm1011, 0.0, %v1061
        %v1093 = vrot.slane %v531, 1
        %v1094 = vrot.slane %v532, 1
        %v1095 = vrot.slane %v533, 1
        %v1096 = vrot.slane %v534, 1
        %v1097 = vrot.slane %v535, 1
        %v1098 = vrot.slane %v536, 1
        %v1099 = vrot.slane %v537, 1
        %v1100 = vrot.slane %v538, 1
        %v1101 = vrot.slane %v539, 1
        %v1102 = vrot.slane %v540, 1
        %v1103 = vrot.slane %v541, 1
        %v1104 = vrot.slane %v542, 1
        %v1105 = vrot.slane %v543, 1
        %v1106 = vrot.slane %v544, 1
        %v1107 = vrot.slane %v545, 1
        %v1108 = vrot.slane %v546, 1
        %vm1109 = vcmp.lt.s32.totalorder %v548, 7
        %v1110 = vsel %vm1109, %v1107, %v1108
        %v1111 = vsel %vm1109, %v1106, %v1107
        %v1112 = vsel %vm1109, %v1105, %v1106
        %v1113 = vsel %vm1109, %v1104, %v1105
        %v1114 = vsel %vm1109, %v1103, %v1104
        %v1115 = vsel %vm1109, %v1102, %v1103
        %v1116 = vsel %vm1109, %v1101, %v1102
        %v1117 = vsel %vm1109, %v1100, %v1101
        %v1118 = vsel %vm1109, %v1099, %v1100
        %v1119 = vsel %vm1109, %v1098, %v1099
        %v1120 = vsel %vm1109, %v1097, %v1098
        %v1121 = vsel %vm1109, %v1096, %v1097
        %v1122 = vsel %vm1109, %v1095, %v1096
        %v1123 = vsel %vm1109, %v1094, %v1095
        %v1124 = vsel %vm1109, %v1093, %v1094
        %v1125 = vsel %vm1109, %v1108, %v1093
        %v1126 = vsel %vm1028, 0.0, %v1124
        %v1127 = vsel %vm1029, 0.0, %v1123
        %v1128 = vsel %vm1030, 0.0, %v1122
        %v1129 = vsel %vm1031, 0.0, %v1121
        %v1130 = vsel %vm1032, 0.0, %v1120
        %v1131 = vsel %vm1033, 0.0, %v1119
        %v1132 = vsel %vm1034, 0.0, %v1118
        %v1133 = vsel %vm1035, 0.0, %v1117
        %v1134 = vsel %vm1036, 0.0, %v1116
        %v1135 = vsel %vm1037, 0.0, %v1115
        %v1136 = vsel %vm1038, 0.0, %v1114
        %v1137 = vsel %vm1039, 0.0, %v1113
        %v1138 = vsel %vm1040, 0.0, %v1112
        %v1139 = vsel %vm1041, 0.0, %v1111
        %v1140 = vsel %vm1042, 0.0, %v1110
        %v1141 = vsel %vm1043, 0.0, %v1125
        %v1142 = vld [vmem:[%s3] sm:$0xff]
        %v1143 = vld [vmem:[%s3 + $0x8] sm:$0xff]
        %v1144 = vld [vmem:[%s3 + $0x10] sm:$0xff]
        %v1145 = vld [vmem:[%s3 + $0x18] sm:$0xff]
        %v1146 = vld [vmem:[%s3 + $0x20] sm:$0xff]
        %v1147 = vld [vmem:[%s3 + $0x28] sm:$0xff]
        %v1148 = vld [vmem:[%s3 + $0x30] sm:$0xff]
        %v1149 = vld [vmem:[%s3 + $0x38] sm:$0xff]
        %v1150 = vld [vmem:[%s3 + $0x40] sm:$0xff]
        %v1151 = vld [vmem:[%s3 + $0x48] sm:$0xff]
        %v1152 = vld [vmem:[%s3 + $0x50] sm:$0xff]
        %v1153 = vld [vmem:[%s3 + $0x58] sm:$0xff]
        %v1154 = vld [vmem:[%s3 + $0x60] sm:$0xff]
        %v1155 = vld [vmem:[%s3 + $0x68] sm:$0xff]
        %v1156 = vld [vmem:[%s3 + $0x70] sm:$0xff]
        %v1157 = vld [vmem:[%s3 + $0x78] sm:$0xff]
        %v1158 = vld [vmem:[%s3 + $0x80] sm:$0xff]
        %v1159 = vld [vmem:[%s3 + $0x88] sm:$0xff]
        %v1160 = vld [vmem:[%s3 + $0x90] sm:$0xff]
        %v1161 = vld [vmem:[%s3 + $0x98] sm:$0xff]
        %v1162 = vld [vmem:[%s3 + $0xa0] sm:$0xff]
        %v1163 = vld [vmem:[%s3 + $0xa8] sm:$0xff]
        %v1164 = vld [vmem:[%s3 + $0xb0] sm:$0xff]
        %v1165 = vld [vmem:[%s3 + $0xb8] sm:$0xff]
        %v1166 = vld [vmem:[%s3 + $0xc0] sm:$0xff]
        %v1167 = vld [vmem:[%s3 + $0xc8] sm:$0xff]
        %v1168 = vld [vmem:[%s3 + $0xd0] sm:$0xff]
        %v1169 = vld [vmem:[%s3 + $0xd8] sm:$0xff]
        %v1170 = vld [vmem:[%s3 + $0xe0] sm:$0xff]
        %v1171 = vld [vmem:[%s3 + $0xe8] sm:$0xff]
        %v1172 = vld [vmem:[%s3 + $0xf0] sm:$0xff]
        %v1173 = vld [vmem:[%s3 + $0xf8] sm:$0xff]
        %v1174 = vld [vmem:[%s3 + $0x100] sm:$0xff]
        %v1175 = vld [vmem:[%s3 + $0x108] sm:$0xff]
        %v1176 = vld [vmem:[%s3 + $0x110] sm:$0xff]
        %v1177 = vld [vmem:[%s3 + $0x118] sm:$0xff]
        %v1178 = vld [vmem:[%s3 + $0x120] sm:$0xff]
        %v1179 = vld [vmem:[%s3 + $0x128] sm:$0xff]
        %v1180 = vld [vmem:[%s3 + $0x130] sm:$0xff]
        %v1181 = vld [vmem:[%s3 + $0x138] sm:$0xff]
        %v1182 = vld [vmem:[%s3 + $0x140] sm:$0xff]
        %v1183 = vld [vmem:[%s3 + $0x148] sm:$0xff]
        %v1184 = vld [vmem:[%s3 + $0x150] sm:$0xff]
        %v1185 = vld [vmem:[%s3 + $0x158] sm:$0xff]
        %v1186 = vld [vmem:[%s3 + $0x160] sm:$0xff]
        %v1187 = vld [vmem:[%s3 + $0x168] sm:$0xff]
        %v1188 = vld [vmem:[%s3 + $0x170] sm:$0xff]
        %v1189 = vld [vmem:[%s3 + $0x178] sm:$0xff]
        %v1190 = vld [vmem:[%s4] sm:$0x1]
        %v1192 = vlaneseq
        %v1193 = vshrl.u32 %v1192, 7
        %v1194 = vsub.s32 0, %v1193
        %v1195 = vrot.slane %v1190, %v1194
        %1197 = vmatprep.subr.mxu0 0.0
        %1198 = vmatpush1.msra.mxu0 %v1157
        %1199 = vmatprep.subr.mxu0 0.0
        %1200 = vmatpush1.msra.mxu0 %v1156
        %1201 = vmatprep.subr.mxu0 0.0
        %1202 = vmatpush1.msra.mxu0 %v1155
        %1203 = vmatprep.subr.mxu0 0.0
        %1204 = vmatpush1.msra.mxu0 %v1154
        %1205 = vmatprep.subr.mxu0 0.0
        %1206 = vmatpush1.msra.mxu0 %v1153
        %1207 = vmatprep.subr.mxu0 0.0
        %1208 = vmatpush1.msra.mxu0 %v1152
        %1209 = vmatprep.subr.mxu0 0.0
        %1210 = vmatpush1.msra.mxu0 %v1151
        %1211 = vmatprep.subr.mxu0 0.0
        %1212 = vmatpush1.msra.mxu0 %v1150
        %1213 = vmatprep.subr.mxu0 0.0
        %1214 = vmatpush1.msra.mxu0 %v1149
        %1215 = vmatprep.subr.mxu0 0.0
        %1216 = vmatpush1.msra.mxu0 %v1148
        %1217 = vmatprep.subr.mxu0 0.0
        %1218 = vmatpush1.msra.mxu0 %v1147
        %1219 = vmatprep.subr.mxu0 0.0
        %1220 = vmatpush1.msra.mxu0 %v1146
        %1221 = vmatprep.subr.mxu0 0.0
        %1222 = vmatpush1.msra.mxu0 %v1145
        %1223 = vmatprep.subr.mxu0 0.0
        %1224 = vmatpush1.msra.mxu0 %v1144
        %1225 = vmatprep.subr.mxu0 0.0
        %1226 = vmatpush1.msra.mxu0 %v1143
        %1227 = vmatprep.subr.mxu0 0.0
        %1228 = vmatpush1.msra.mxu0 %v1142
        %1229 = vmatprep.subr.mxu0 0.0
        %1230 = vmatpush2.msra.mxu0 %v1173
        %1231 = vmatprep.subr.mxu0 0.0
        %1232 = vmatpush2.msra.mxu0 %v1172
        %1233 = vmatprep.subr.mxu0 0.0
        %1234 = vmatpush2.msra.mxu0 %v1171
        %1235 = vmatprep.subr.mxu0 0.0
        %1236 = vmatpush2.msra.mxu0 %v1170
        %1237 = vmatprep.subr.mxu0 0.0
        %1238 = vmatpush2.msra.mxu0 %v1169
        %1239 = vmatprep.subr.mxu0 0.0
        %1240 = vmatpush2.msra.mxu0 %v1168
        %1241 = vmatprep.subr.mxu0 0.0
        %1242 = vmatpush2.msra.mxu0 %v1167
        %1243 = vmatprep.subr.mxu0 0.0
        %1244 = vmatpush2.msra.mxu0 %v1166
        %1245 = vmatprep.subr.mxu0 0.0
        %1246 = vmatpush2.msra.mxu0 %v1165
        %1247 = vmatprep.subr.mxu0 0.0
        %1248 = vmatpush2.msra.mxu0 %v1164
        %1249 = vmatprep.subr.mxu0 0.0
        %1250 = vmatpush2.msra.mxu0 %v1163
        %1251 = vmatprep.subr.mxu0 0.0
        %1252 = vmatpush2.msra.mxu0 %v1162
        %1253 = vmatprep.subr.mxu0 0.0
        %1254 = vmatpush2.msra.mxu0 %v1161
        %1255 = vmatprep.subr.mxu0 0.0
        %1256 = vmatpush2.msra.mxu0 %v1160
        %1257 = vmatprep.subr.mxu0 0.0
        %1258 = vmatpush2.msra.mxu0 %v1159
        %1259 = vmatprep.subr.mxu0 0.0
        %1260 = vmatpush2.msra.mxu0 %v1158
        %1261 = vmatprep.mubr.f32.mxu0 %v531
        %1262 = vmatmul.mubr.f32.gmra.mxu0 %v1077
        %v1263 = vpop.f32.mrf.mxu0
        %v1264 = vadd.f32 %v1195, %v1263
        %v1265 = vpop.f32.mrf.mxu0
        %1266 = vmatprep.mubr.f32.mxu0 %v532
        %1267 = vmatmul.mubr.f32.gmra.mxu0 %v1078
        %v1268 = vpop.f32.mrf.mxu0
        %v1269 = vadd.f32 %v1195, %v1268
        %v1270 = vpop.f32.mrf.mxu0
        %1271 = vmatprep.mubr.f32.mxu0 %v533
        %1272 = vmatmul.mubr.f32.gmra.mxu0 %v1079
        %v1273 = vpop.f32.mrf.mxu0
        %v1274 = vadd.f32 %v1195, %v1273
        %v1275 = vpop.f32.mrf.mxu0
        %1276 = vmatprep.mubr.f32.mxu0 %v534
        %1277 = vmatmul.mubr.f32.gmra.mxu0 %v1080
        %v1278 = vpop.f32.mrf.mxu0
        %v1279 = vadd.f32 %v1195, %v1278
        %v1280 = vpop.f32.mrf.mxu0
        %1281 = vmatprep.mubr.f32.mxu0 %v535
        %1282 = vmatmul.mubr.f32.gmra.mxu0 %v1081
        %v1283 = vpop.f32.mrf.mxu0
        %v1284 = vadd.f32 %v1195, %v1283
        %v1285 = vpop.f32.mrf.mxu0
        %1286 = vmatprep.mubr.f32.mxu0 %v536
        %1287 = vmatmul.mubr.f32.gmra.mxu0 %v1082
        %v1288 = vpop.f32.mrf.mxu0
        %v1289 = vadd.f32 %v1195, %v1288
        %v1290 = vpop.f32.mrf.mxu0
        %1291 = vmatprep.mubr.f32.mxu0 %v537
        %1292 = vmatmul.mubr.f32.gmra.mxu0 %v1083
        %v1293 = vpop.f32.mrf.mxu0
        %v1294 = vadd.f32 %v1195, %v1293
        %v1295 = vpop.f32.mrf.mxu0
        %1296 = vmatprep.mubr.f32.mxu0 %v538
        %1297 = vmatmul.mubr.f32.gmra.mxu0 %v1084
        %v1298 = vpop.f32.mrf.mxu0
        %v1299 = vadd.f32 %v1195, %v1298
        %v1300 = vpop.f32.mrf.mxu0
        %1301 = vmatprep.mubr.f32.mxu0 %v539
        %1302 = vmatmul.mubr.f32.gmra.mxu0 %v1085
        %v1303 = vpop.f32.mrf.mxu0
        %v1304 = vadd.f32 %v1195, %v1303
        %v1305 = vpop.f32.mrf.mxu0
        %1306 = vmatprep.mubr.f32.mxu0 %v540
        %1307 = vmatmul.mubr.f32.gmra.mxu0 %v1086
        %v1308 = vpop.f32.mrf.mxu0
        %v1309 = vadd.f32 %v1195, %v1308
        %v1310 = vpop.f32.mrf.mxu0
        %1311 = vmatprep.mubr.f32.mxu0 %v541
        %1312 = vmatmul.mubr.f32.gmra.mxu0 %v1087
        %v1313 = vpop.f32.mrf.mxu0
        %v1314 = vadd.f32 %v1195, %v1313
        %v1315 = vpop.f32.mrf.mxu0
        %1316 = vmatprep.mubr.f32.mxu0 %v542
        %1317 = vmatmul.mubr.f32.gmra.mxu0 %v1088
        %v1318 = vpop.f32.mrf.mxu0
        %v1319 = vadd.f32 %v1195, %v1318
        %v1320 = vpop.f32.mrf.mxu0
        %1321 = vmatprep.mubr.f32.mxu0 %v543
        %1322 = vmatmul.mubr.f32.gmra.mxu0 %v1089
        %v1323 = vpop.f32.mrf.mxu0
        %v1324 = vadd.f32 %v1195, %v1323
        %v1325 = vpop.f32.mrf.mxu0
        %1326 = vmatprep.mubr.f32.mxu0 %v544
        %1327 = vmatmul.mubr.f32.gmra.mxu0 %v1090
        %v1328 = vpop.f32.mrf.mxu0
        %v1329 = vadd.f32 %v1195, %v1328
        %v1330 = vpop.f32.mrf.mxu0
        %1331 = vmatprep.mubr.f32.mxu0 %v545
        %1332 = vmatmul.mubr.f32.gmra.mxu0 %v1091
        %v1333 = vpop.f32.mrf.mxu0
        %v1334 = vadd.f32 %v1195, %v1333
        %v1335 = vpop.f32.mrf.mxu0
        %1336 = vmatprep.mubr.f32.mxu0 %v546
        %1337 = vmatmul.mubr.f32.gmra.mxu0 %v1092
        %v1338 = vpop.f32.mrf.mxu0
        %v1339 = vadd.f32 %v1195, %v1338
        %v1340 = vpop.f32.mrf.mxu0
        %1341 = vdwg.mxu0
        %1342 = vmatprep.subr.mxu0 0.0
        %1343 = vmatpush1.msra.mxu0 %v1189
        %1344 = vmatprep.subr.mxu0 0.0
        %1345 = vmatpush1.msra.mxu0 %v1188
        %1346 = vmatprep.subr.mxu0 0.0
        %1347 = vmatpush1.msra.mxu0 %v1187
        %1348 = vmatprep.subr.mxu0 0.0
        %1349 = vmatpush1.msra.mxu0 %v1186
        %1350 = vmatprep.subr.mxu0 0.0
        %1351 = vmatpush1.msra.mxu0 %v1185
        %1352 = vmatprep.subr.mxu0 0.0
        %1353 = vmatpush1.msra.mxu0 %v1184
        %1354 = vmatprep.subr.mxu0 0.0
        %1355 = vmatpush1.msra.mxu0 %v1183
        %1356 = vmatprep.subr.mxu0 0.0
        %1357 = vmatpush1.msra.mxu0 %v1182
        %1358 = vmatprep.subr.mxu0 0.0
        %1359 = vmatpush1.msra.mxu0 %v1181
        %1360 = vmatprep.subr.mxu0 0.0
        %1361 = vmatpush1.msra.mxu0 %v1180
        %1362 = vmatprep.subr.mxu0 0.0
        %1363 = vmatpush1.msra.mxu0 %v1179
        %1364 = vmatprep.subr.mxu0 0.0
        %1365 = vmatpush1.msra.mxu0 %v1178
        %1366 = vmatprep.subr.mxu0 0.0
        %1367 = vmatpush1.msra.mxu0 %v1177
        %1368 = vmatprep.subr.mxu0 0.0
        %1369 = vmatpush1.msra.mxu0 %v1176
        %1370 = vmatprep.subr.mxu0 0.0
        %1371 = vmatpush1.msra.mxu0 %v1175
        %1372 = vmatprep.subr.mxu0 0.0
        %1373 = vmatpush1.msra.mxu0 %v1174
        %1374 = vmatprep.subr.mxu0 0.0
        %1375 = vmatpush2.msra.mxu0 0.0
        %1376 = vmatprep.subr.mxu0 0.0
        %1377 = vmatpush2.msra.mxu0 0.0
        %1378 = vmatprep.subr.mxu0 0.0
        %1379 = vmatpush2.msra.mxu0 0.0
        %1380 = vmatprep.subr.mxu0 0.0
        %1381 = vmatpush2.msra.mxu0 0.0
        %1382 = vmatprep.subr.mxu0 0.0
        %1383 = vmatpush2.msra.mxu0 0.0
        %1384 = vmatprep.subr.mxu0 0.0
        %1385 = vmatpush2.msra.mxu0 0.0
        %1386 = vmatprep.subr.mxu0 0.0
        %1387 = vmatpush2.msra.mxu0 0.0
        %1388 = vmatprep.subr.mxu0 0.0
        %1389 = vmatpush2.msra.mxu0 0.0
        %1390 = vmatprep.subr.mxu0 0.0
        %1391 = vmatpush2.msra.mxu0 0.0
        %1392 = vmatprep.subr.mxu0 0.0
        %1393 = vmatpush2.msra.mxu0 0.0
        %1394 = vmatprep.subr.mxu0 0.0
        %1395 = vmatpush2.msra.mxu0 0.0
        %1396 = vmatprep.subr.mxu0 0.0
        %1397 = vmatpush2.msra.mxu0 0.0
        %1398 = vmatprep.subr.mxu0 0.0
        %1399 = vmatpush2.msra.mxu0 0.0
        %1400 = vmatprep.subr.mxu0 0.0
        %1401 = vmatpush2.msra.mxu0 0.0
        %1402 = vmatprep.subr.mxu0 0.0
        %1403 = vmatpush2.msra.mxu0 0.0
        %1404 = vmatprep.subr.mxu0 0.0
        %1405 = vmatpush2.msra.mxu0 0.0
        %1406 = vmatprep.mubr.f32.mxu0 0.0
        %1407 = vmatmul.mubr.f32.gmra.mxu0 %v1126
        %v1408 = vpop.f32.mrf.mxu0
        %v1409 = vadd.f32 %v1264, %v1408
        %v1410 = vpop.f32.mrf.mxu0
        %1411 = vmatprep.mubr.f32.mxu0 0.0
        %1412 = vmatmul.mubr.f32.gmra.mxu0 %v1127
        %v1413 = vpop.f32.mrf.mxu0
        %v1414 = vadd.f32 %v1269, %v1413
        %v1415 = vpop.f32.mrf.mxu0
        %1416 = vmatprep.mubr.f32.mxu0 0.0
        %1417 = vmatmul.mubr.f32.gmra.mxu0 %v1128
        %v1418 = vpop.f32.mrf.mxu0
        %v1419 = vadd.f32 %v1274, %v1418
        %v1420 = vpop.f32.mrf.mxu0
        %1421 = vmatprep.mubr.f32.mxu0 0.0
        %1422 = vmatmul.mubr.f32.gmra.mxu0 %v1129
        %v1423 = vpop.f32.mrf.mxu0
        %v1424 = vadd.f32 %v1279, %v1423
        %v1425 = vpop.f32.mrf.mxu0
        %1426 = vmatprep.mubr.f32.mxu0 0.0
        %1427 = vmatmul.mubr.f32.gmra.mxu0 %v1130
        %v1428 = vpop.f32.mrf.mxu0
        %v1429 = vadd.f32 %v1284, %v1428
        %v1430 = vpop.f32.mrf.mxu0
        %1431 = vmatprep.mubr.f32.mxu0 0.0
        %1432 = vmatmul.mubr.f32.gmra.mxu0 %v1131
        %v1433 = vpop.f32.mrf.mxu0
        %v1434 = vadd.f32 %v1289, %v1433
        %v1435 = vpop.f32.mrf.mxu0
        %1436 = vmatprep.mubr.f32.mxu0 0.0
        %1437 = vmatmul.mubr.f32.gmra.mxu0 %v1132
        %v1438 = vpop.f32.mrf.mxu0
        %v1439 = vadd.f32 %v1294, %v1438
        %v1440 = vpop.f32.mrf.mxu0
        %1441 = vmatprep.mubr.f32.mxu0 0.0
        %1442 = vmatmul.mubr.f32.gmra.mxu0 %v1133
        %v1443 = vpop.f32.mrf.mxu0
        %v1444 = vadd.f32 %v1299, %v1443
        %v1445 = vpop.f32.mrf.mxu0
        %1446 = vmatprep.mubr.f32.mxu0 0.0
        %1447 = vmatmul.mubr.f32.gmra.mxu0 %v1134
        %v1448 = vpop.f32.mrf.mxu0
        %v1449 = vadd.f32 %v1304, %v1448
        %v1450 = vpop.f32.mrf.mxu0
        %1451 = vmatprep.mubr.f32.mxu0 0.0
        %1452 = vmatmul.mubr.f32.gmra.mxu0 %v1135
        %v1453 = vpop.f32.mrf.mxu0
        %v1454 = vadd.f32 %v1309, %v1453
        %v1455 = vpop.f32.mrf.mxu0
        %1456 = vmatprep.mubr.f32.mxu0 0.0
        %1457 = vmatmul.mubr.f32.gmra.mxu0 %v1136
        %v1458 = vpop.f32.mrf.mxu0
        %v1459 = vadd.f32 %v1314, %v1458
        %v1460 = vpop.f32.mrf.mxu0
        %1461 = vmatprep.mubr.f32.mxu0 0.0
        %1462 = vmatmul.mubr.f32.gmra.mxu0 %v1137
        %v1463 = vpop.f32.mrf.mxu0
        %v1464 = vadd.f32 %v1319, %v1463
        %v1465 = vpop.f32.mrf.mxu0
        %1466 = vmatprep.mubr.f32.mxu0 0.0
        %1467 = vmatmul.mubr.f32.gmra.mxu0 %v1138
        %v1468 = vpop.f32.mrf.mxu0
        %v1469 = vadd.f32 %v1324, %v1468
        %v1470 = vpop.f32.mrf.mxu0
        %1471 = vmatprep.mubr.f32.mxu0 0.0
        %1472 = vmatmul.mubr.f32.gmra.mxu0 %v1139
        %v1473 = vpop.f32.mrf.mxu0
        %v1474 = vadd.f32 %v1329, %v1473
        %v1475 = vpop.f32.mrf.mxu0
        %1476 = vmatprep.mubr.f32.mxu0 0.0
        %1477 = vmatmul.mubr.f32.gmra.mxu0 %v1140
        %v1478 = vpop.f32.mrf.mxu0
        %v1479 = vadd.f32 %v1334, %v1478
        %v1480 = vpop.f32.mrf.mxu0
        %1481 = vmatprep.mubr.f32.mxu0 0.0
        %1482 = vmatmul.mubr.f32.gmra.mxu0 %v1141
        %v1483 = vpop.f32.mrf.mxu0
        %v1484 = vadd.f32 %v1339, %v1483
        %v1485 = vpop.f32.mrf.mxu0
        %1486 = vdwg.mxu0
        %v1487 = vadd.f32 %v1409, %v439
        %v1488 = vadd.f32 %v1414, %v445
        %v1489 = vadd.f32 %v1419, %v451
        %v1490 = vadd.f32 %v1424, %v457
        %v1491 = vadd.f32 %v1429, %v463
        %v1492 = vadd.f32 %v1434, %v469
        %v1493 = vadd.f32 %v1439, %v475
        %v1494 = vadd.f32 %v1444, %v481
        %v1495 = vadd.f32 %v1449, %v487
        %v1496 = vadd.f32 %v1454, %v493
        %v1497 = vadd.f32 %v1459, %v499
        %v1498 = vadd.f32 %v1464, %v505
        %v1499 = vadd.f32 %v1469, %v511
        %v1500 = vadd.f32 %v1474, %v517
        %v1501 = vadd.f32 %v1479, %v523
        %v1502 = vadd.f32 %v1484, %v529
        %v1503 = vmax.f32 %v1487, 0.0
        %v1504 = vmax.f32 %v1488, 0.0
        %v1505 = vmax.f32 %v1489, 0.0
        %v1506 = vmax.f32 %v1490, 0.0
        %v1507 = vmax.f32 %v1491, 0.0
        %v1508 = vmax.f32 %v1492, 0.0
        %v1509 = vmax.f32 %v1493, 0.0
        %v1510 = vmax.f32 %v1494, 0.0
        %v1511 = vmax.f32 %v1495, 0.0
        %v1512 = vmax.f32 %v1496, 0.0
        %v1513 = vmax.f32 %v1497, 0.0
        %v1514 = vmax.f32 %v1498, 0.0
        %v1515 = vmax.f32 %v1499, 0.0
        %v1516 = vmax.f32 %v1500, 0.0
        %v1517 = vmax.f32 %v1501, 0.0
        %v1518 = vmax.f32 %v1502, 0.0
        %1519 = vst [vmem:[%s220] sm:$0xff] %v1503
        %1520 = vst [vmem:[%s220 + $0x8] sm:$0xff] %v1504
        %1521 = vst [vmem:[%s220 + $0x10] sm:$0xff] %v1505
        %1522 = vst [vmem:[%s220 + $0x18] sm:$0xff] %v1506
        %1523 = vst [vmem:[%s220 + $0x20] sm:$0xff] %v1507
        %1524 = vst [vmem:[%s220 + $0x28] sm:$0xff] %v1508
        %1525 = vst [vmem:[%s220 + $0x30] sm:$0xff] %v1509
        %1526 = vst [vmem:[%s220 + $0x38] sm:$0xff] %v1510
        %1527 = vst [vmem:[%s220 + $0x40] sm:$0xff] %v1511
        %1528 = vst [vmem:[%s220 + $0x48] sm:$0xff] %v1512
        %1529 = vst [vmem:[%s220 + $0x50] sm:$0xff] %v1513
        %1530 = vst [vmem:[%s220 + $0x58] sm:$0xff] %v1514
        %1531 = vst [vmem:[%s220 + $0x60] sm:$0xff] %v1515
        %1532 = vst [vmem:[%s220 + $0x68] sm:$0xff] %v1516
        %1533 = vst [vmem:[%s220 + $0x70] sm:$0xff] %v1517
        %1534 = vst [vmem:[%s220 + $0x78] sm:$0xff] %v1518
        %s1535 = sand.u32 %s137, 1
        %s1536 = scalar_lea.sflag [#allocation3], %s1535
        %s1537 = sand.u32 %s137, 1
        %s1538 = smul.addr %s1537, 128
        %s1539 = scalar_lea.vmem [#allocation2], %s1538
        // Predicated region
        $region41: #{tpu_custom_call.1} parent=39 // pred_check
          %p1540 = pneg %p147
        $region42: #{tpu_custom_call.1} parent=39 // pred_check_branch
          %1542 = sbr.rel (%p1540) target = $region44
        $region43: #{tpu_custom_call.1} parent=39 // pred_region
          %s1543 = smul.u32 16, %s19
          %s1545 = ssub.s32 2048, 2048
          %1546 = vsyncadd %s1536, %s1545
          %s1547 = smul.addr %s1543, 128
          %s1548 = scalar_lea.hbm %s5, %s1547
          %s1549 = sshll.u32 %s1539, 4
          %s1550 = int_to_ptr.vmem [resolvable:$true] %s1549
          %1555 = dma.vmem_to_hbm [thread:$0]  %s1550, 2048, %s1548, %s1536, 128, 128, 8
        $region44: #{tpu_custom_call.1} parent=39 // pred_fallthru
          _
      $region40: #{tpu_custom_call.1} parent=5 // pred_fallthru
        _
      %p1556 = scmp.le.s32.totalorder 2, %s14
      // Predicated region
      $region45: #{tpu_custom_call.1} parent=5 // pred_check
        %p1557 = pneg %p1556
      $region46: #{tpu_custom_call.1} parent=5 // pred_check_branch
        %1559 = sbr.rel (%p1557) target = $region48
      $region47: #{tpu_custom_call.1} parent=5 // pred_region
        %s1560 = ssub.s32 %s14, 2
        // Predicated region
        $region49: #{tpu_custom_call.1} parent=47 // pred_check
          %p1561 = pneg %p153
        $region50: #{tpu_custom_call.1} parent=47 // pred_check_branch
          %1563 = sbr.rel (%p1561) target = $region52
        $region51: #{tpu_custom_call.1} parent=47 // pred_region
          %s1564 = sand.u32 %s138, 1
          %s1565 = scalar_lea.sflag [#allocation3], %s1564
          %s1566 = sand.u32 %s138, 1
          %s1567 = smul.addr %s1566, 128
          %s1568 = scalar_lea.vmem [#allocation2], %s1567
          %1569 = dma.done %s1565, 2048
        $region52: #{tpu_custom_call.1} parent=47 // pred_fallthru
          _
      $region48: #{tpu_custom_call.1} parent=5 // pred_fallthru
        _
    $region6: #{tpu_custom_call.1} parent=1 // loop_footer
      %s18 = sadd.s32 1, %s14
    $region7: #{tpu_custom_call.1} parent=1 // loop_footer_branch
      %13 = sbr.rel target = $region3
    $region8: #{tpu_custom_call.1} parent=1 // loop_exit
      _
    %1570 = vsyncpa [#allocation3], 1
    %s1571 = scalar_lea.sflag [#allocation3], 1
    %1572 = vsyncpa %s1571, 1

// kernel: tpu_custom_call.1
$region0: #{tpu_custom_call.1}
  #allocation0 [shape = 'u32[]', space=smem, size = 0x4, offset = 0x4, fixed_abs, tag = 'smem constant byte address 0x4 - core index']
  #allocation1 [shape = 'u32[144,128]{1,0:T(1,128)}', space=vmem, size = 0x12000, scoped, tag = 'internal scratch']
  %s0 = inlined_call_operand.vmem [shape: f32[256,192], index: 0, kind: input, shape index: {}]
  %s1 = inlined_call_operand.vmem [shape: f32[192,256], index: 1, kind: input, shape index: {}]
  %s2 = inlined_call_operand.vmem [shape: f32[1,256], index: 2, kind: input, shape index: {}]
  %s3 = inlined_call_operand.vmem [shape: f32[384,128], index: 3, kind: input, shape index: {}]
  %s4 = inlined_call_operand.vmem [shape: f32[1,128], index: 4, kind: input, shape index: {}]
  %s5 = inlined_call_operand.hbm [shape: f32[256,128], index: 5, kind: output, shape index: {}]
  %s6 = sld [smem:[#allocation0]]
  $region53: #{tpu_custom_call.1} parent=0
    _
  %s8 = ssub.s32 1, %s6
  %s9 = scalar_select 0, %s8, %s6
  $region1: #{tpu_custom_call.1} parent=0
    #allocation2 [shape = 'u8[131072]{0}', space=vmem, size = 0x20000, scoped, tag = 'output window, operand 0']
    #allocation3 [shape = 's32[2]{0}', space=sflag, size = 0x8, scoped, tag = 'scoped memory for tpu_custom_call.1']
    %10 = vsyncpa [#allocation3], 0
    %s11 = scalar_lea.sflag [#allocation3], 1
    %12 = vsyncpa %s11, 0
    loop: start=0, step=1, limit=4
    $region2: #{tpu_custom_call.1} parent=1 // loop_pre_header
      _
    $region3: #{tpu_custom_call.1} parent=1 // loop_header
      %s14 = sphi 0, %s18
      %p15 = scmp.ge.s32.totalorder %s14, 4
      %s24 = sphi 0, %s26
      %s27 = sphi 0, %s24
      %s28 = sphi 0, %s27
      %s44 = sphi 0, %s28
      %s48 = sphi 0, %s48
      %s50 = sphi 0, %s48
      %s51 = sphi 0, %s50
      %s65 = sphi 0, %s51
      %s69 = sphi 0, %s69
      %s71 = sphi 0, %s69
      %s72 = sphi 0, %s71
      %s86 = sphi 0, %s72
      %s90 = sphi 0, %s90
      %s92 = sphi 0, %s90
      %s93 = sphi 0, %s92
      %s107 = sphi 0, %s93
      %s111 = sphi 0, %s111
      %s113 = sphi 0, %s111
      %s114 = sphi 0, %s113
      %s128 = sphi 0, %s114
      %s134 = sphi 0, %s136
      %s137 = sphi 0, %s134
      %s138 = sphi 0, %s137
      %s154 = sphi 0, %s138
    $region4: #{tpu_custom_call.1} parent=1 // loop_header_branch
      %17 = sbr.rel (%p15) target = $region8
    $region5: #{tpu_custom_call.1} parent=1 // loop_body
      %s19 = ssub.s32 %s14, 1
      %s20 = ssub.s32 %s14, 2
      %s21 = sadd.s32 %s14, 1
      %s22 = ssub.s32 %s14, %s21
      %p23 = scmp.eq.s32.totalorder %s22, 0
      %s25 = sadd.s32 %s24, 1
      %s26 = scalar_select %p23, %s24, %s25
      %p29 = pneg %p23
      %p30 = scmp.eq.s32.totalorder %s14, 1
      %p31 = por %p29, %p30
      %p32 = scmp.ne.s32.totalorder %s24, %s27
      %p33 = scmp.eq.s32.totalorder %s14, 0
      %p34 = por %p32, %p33
      %p35 = scmp.ne.s32.totalorder %s24, %s27
      %p36 = scmp.eq.s32.totalorder %s19, 1
      %p37 = por %p35, %p36
      %p38 = scmp.ne.s32.totalorder %s27, %s28
      %p39 = scmp.eq.s32.totalorder %s19, 0
      %p40 = por %p38, %p39
      %p41 = scmp.ne.s32.totalorder %s27, %s28
      %p42 = scmp.eq.s32.totalorder %s20, 1
      %p43 = por %p41, %p42
      %p45 = scmp.ne.s32.totalorder %s28, %s44
      %p46 = scmp.eq.s32.totalorder %s20, 0
      %p47 = por %p45, %p46
      %s49 = sadd.s32 %s48, 1
      %p52 = scmp.eq.s32.totalorder %s14, 1
      %p53 = scmp.ne.s32.totalorder %s48, %s50
      %p54 = scmp.eq.s32.totalorder %s14, 0
      %p55 = por %p53, %p54
      %p56 = scmp.ne.s32.totalorder %s48, %s50
      %p57 = scmp.eq.s32.totalorder %s19, 1
      %p58 = por %p56, %p57
      %p59 = scmp.ne.s32.totalorder %s50, %s51
      %p60 = scmp.eq.s32.totalorder %s19, 0
      %p61 = por %p59, %p60
      %p62 = scmp.ne.s32.totalorder %s50, %s51
      %p63 = scmp.eq.s32.totalorder %s20, 1
      %p64 = por %p62, %p63
      %p66 = scmp.ne.s32.totalorder %s51, %s65
      %p67 = scmp.eq.s32.totalorder %s20, 0
      %p68 = por %p66, %p67
      %s70 = sadd.s32 %s69, 1
      %p73 = scmp.eq.s32.totalorder %s14, 1
      %p74 = scmp.ne.s32.totalorder %s69, %s71
      %p75 = scmp.eq.s32.totalorder %s14, 0
      %p76 = por %p74, %p75
      %p77 = scmp.ne.s32.totalorder %s69, %s71
      %p78 = scmp.eq.s32.totalorder %s19, 1
      %p79 = por %p77, %p78
      %p80 = scmp.ne.s32.totalorder %s71, %s72
      %p81 = scmp.eq.s32.totalorder %s19, 0
      %p82 = por %p80, %p81
      %p83 = scmp.ne.s32.totalorder %s71, %s72
      %p84 = scmp.eq.s32.totalorder %s20, 1
      %p85 = por %p83, %p84
      %p87 = scmp.ne.s32.totalorder %s72, %s86
      %p88 = scmp.eq.s32.totalorder %s20, 0
      %p89 = por %p87, %p88
      %s91 = sadd.s32 %s90, 1
      %p94 = scmp.eq.s32.totalorder %s14, 1
      %p95 = scmp.ne.s32.totalorder %s90, %s92
      %p96 = scmp.eq.s32.totalorder %s14, 0
      %p97 = por %p95, %p96
      %p98 = scmp.ne.s32.totalorder %s90, %s92
      %p99 = scmp.eq.s32.totalorder %s19, 1
      %p100 = por %p98, %p99
      %p101 = scmp.ne.s32.totalorder %s92, %s93
      %p102 = scmp.eq.s32.totalorder %s19, 0
      %p103 = por %p101, %p102
      %p104 = scmp.ne.s32.totalorder %s92, %s93
      %p105 = scmp.eq.s32.totalorder %s20, 1
      %p106 = por %p104, %p105
      %p108 = scmp.ne.s32.totalorder %s93, %s107
      %p109 = scmp.eq.s32.totalorder %s20, 0
      %p110 = por %p108, %p109
      %s112 = sadd.s32 %s111, 1
      %p115 = scmp.eq.s32.totalorder %s14, 1
      %p116 = scmp.ne.s32.totalorder %s111, %s113
      %p117 = scmp.eq.s32.totalorder %s14, 0
      %p118 = por %p116, %p117
      %p119 = scmp.ne.s32.totalorder %s111, %s113
      %p120 = scmp.eq.s32.totalorder %s19, 1
      %p121 = por %p119, %p120
      %p122 = scmp.ne.s32.totalorder %s113, %s114
      %p123 = scmp.eq.s32.totalorder %s19, 0
      %p124 = por %p122, %p123
      %p125 = scmp.ne.s32.totalorder %s113, %s114
      %p126 = scmp.eq.s32.totalorder %s20, 1
      %p127 = por %p125, %p126
      %p129 = scmp.ne.s32.totalorder %s114, %s128
      %p130 = scmp.eq.s32.totalorder %s20, 0
      %p131 = por %p129, %p130
      %s132 = ssub.s32 %s14, %s21
      %p133 = scmp.eq.s32.totalorder %s132, 0
      %s135 = sadd.s32 %s134, 1
      %s136 = scalar_select %p133, %s134, %s135
      %p139 = pneg %p133
      %p140 = scmp.eq.s32.totalorder %s14, 1
      %p141 = por %p139, %p140
      %p142 = scmp.ne.s32.totalorder %s134, %s137
      %p143 = scmp.eq.s32.totalorder %s14, 0
      %p144 = por %p142, %p143
      %p145 = scmp.ne.s32.totalorder %s134, %s137
      %p146 = scmp.eq.s32.totalorder %s19, 1
      %p147 = por %p145, %p146
      %p148 = scmp.ne.s32.totalorder %s137, %s138
      %p149 = scmp.eq.s32.totalorder %s19, 0
      %p150 = por %p148, %p149
      %p151 = scmp.ne.s32.totalorder %s137, %s138
      %p152 = scmp.eq.s32.totalorder %s20, 1
      %p153 = por %p151, %p152
      %p155 = scmp.ne.s32.totalorder %s138, %s154
      %p156 = scmp.eq.s32.totalorder %s20, 0
      %p157 = por %p155, %p156
      %p158 = scmp.le.s32.totalorder 1, %s14
      %p159 = scmp.lt.s32.totalorder %s14, 3
      %p160 = pnand %p158, %p159
      %p161 = pneg %p160
      // Predicated region
      $region9: #{tpu_custom_call.1} parent=5 // pred_check
        _
      $region10: #{tpu_custom_call.1} parent=5 // pred_check_branch
        %163 = sbr.rel (%p160) target = $region12
      $region11: #{tpu_custom_call.1} parent=5 // pred_region
        %s164 = ssub.s32 %s14, 1
        // Predicated region
        $region13: #{tpu_custom_call.1} parent=11 // pred_check
          %p165 = pneg %p61
        $region14: #{tpu_custom_call.1} parent=11 // pred_check_branch
          %167 = sbr.rel (%p165) target = $region16
        $region15: #{tpu_custom_call.1} parent=11 // pred_region
          _
        $region16: #{tpu_custom_call.1} parent=11 // pred_fallthru
          _
        // Predicated region
        $region17: #{tpu_custom_call.1} parent=11 // pred_check
          %p168 = pneg %p82
        $region18: #{tpu_custom_call.1} parent=11 // pred_check_branch
          %170 = sbr.rel (%p168) target = $region20
        $region19: #{tpu_custom_call.1} parent=11 // pred_region
          _
        $region20: #{tpu_custom_call.1} parent=11 // pred_fallthru
          _
        // Predicated region
        $region21: #{tpu_custom_call.1} parent=11 // pred_check
          %p171 = pneg %p103
        $region22: #{tpu_custom_call.1} parent=11 // pred_check_branch
          %173 = sbr.rel (%p171) target = $region24
        $region23: #{tpu_custom_call.1} parent=11 // pred_region
          _
        $region24: #{tpu_custom_call.1} parent=11 // pred_fallthru
          _
        // Predicated region
        $region25: #{tpu_custom_call.1} parent=11 // pred_check
          %p174 = pneg %p124
        $region26: #{tpu_custom_call.1} parent=11 // pred_check_branch
          %176 = sbr.rel (%p174) target = $region28
        $region27: #{tpu_custom_call.1} parent=11 // pred_region
          _
        $region28: #{tpu_custom_call.1} parent=11 // pred_fallthru
          _
      $region12: #{tpu_custom_call.1} parent=5 // pred_fallthru
        _
      %p177 = scmp.lt.s32.totalorder %s14, 2
      // Predicated region
      $region29: #{tpu_custom_call.1} parent=5 // pred_check
        %p178 = pneg %p177
      $region30: #{tpu_custom_call.1} parent=5 // pred_check_branch
        %180 = sbr.rel (%p178) target = $region32
      $region31: #{tpu_custom_call.1} parent=5 // pred_region
        // Predicated region
        $region33: #{tpu_custom_call.1} parent=31 // pred_check
          %p181 = pneg %p34
        $region34: #{tpu_custom_call.1} parent=31 // pred_check_branch
          %183 = sbr.rel (%p181) target = $region36
        $region35: #{tpu_custom_call.1} parent=31 // pred_region
          %s184 = smul.u32 16, %s14
          %p185 = scmp.lt.s32.totalorder %s184, 31
          %s186 = scalar_select %p185, %s184, 31
          %s187 = smul.addr %s186, 2
          %s188 = smul.addr %s187, 8
          %s189 = scalar_lea.vmem %s0, %s188
          %s190 = smul.u32 16, %s14
        $region36: #{tpu_custom_call.1} parent=31 // pred_fallthru
          _
      $region32: #{tpu_custom_call.1} parent=5 // pred_fallthru
        _
      %p191 = scmp.le.s32.totalorder 1, %s14
      %p192 = scmp.lt.s32.totalorder %s14, 3
      %p193 = pnand %p191, %p192
      %p194 = pneg %p193
      // Predicated region
      $region37: #{tpu_custom_call.1} parent=5 // pred_check
        _
      $region38: #{tpu_custom_call.1} parent=5 // pred_check_branch
        %196 = sbr.rel (%p193) target = $region40
      $region39: #{tpu_custom_call.1} parent=5 // pred_region
        %s197 = ssub.s32 %s14, 1
        %s198 = smul.u32 16, %s19
        %p199 = scmp.lt.s32.totalorder %s198, 31
        %s200 = scalar_select %p199, %s198, 31
        %s201 = smul.addr %s200, 2
        %s202 = smul.addr %s201, 8
        %s203 = scalar_lea.vmem %s0, %s202
        %p204 = pneg %p40
        %p205 = pneg %p37
        %p206 = pneg %p61
        %p207 = pneg %p58
        %p208 = pneg %p82
        %p209 = pneg %p79
        %p210 = pneg %p103
        %p211 = pneg %p100
        %p212 = pneg %p124
        %p213 = pneg %p121
        %p214 = pneg %p150
        %p215 = pneg %p147
        %s216 = sand.u32 %s137, 1
        %s217 = scalar_lea.sflag [#allocation3], %s216
        %s218 = sand.u32 %s137, 1
        %s219 = smul.addr %s218, 128
        %s220 = scalar_lea.vmem [#allocation2], %s219
        %s221 = smul.u32 16, %s19
        %p222 = scmp.lt.s32.totalorder %s221, 31
        %s223 = scalar_select %p222, %s221, 31
        %s224 = smul.addr %s223, 2
        %s225 = smul.addr %s224, 8
        %s226 = scalar_lea.vmem %s0, %s225
        %s227 = smul.u32 16, %s19
        %s228 = smul.u32 16, %s19
        %v229 = vld [vmem:[%s226] sm:$0xff]
        %v230 = vld [vmem:[%s226 + $0x8] sm:$0xff]
        %v231 = vld [vmem:[%s226 + $0x10] sm:$0xff]
        %v232 = vld [vmem:[%s226 + $0x18] sm:$0xff]
        %v233 = vld [vmem:[%s226 + $0x20] sm:$0xff]
        %v234 = vld [vmem:[%s226 + $0x28] sm:$0xff]
        %v235 = vld [vmem:[%s226 + $0x30] sm:$0xff]
        %v236 = vld [vmem:[%s226 + $0x38] sm:$0xff]
        %v237 = vld [vmem:[%s226 + $0x40] sm:$0xff]
        %v238 = vld [vmem:[%s226 + $0x48] sm:$0xff]
        %v239 = vld [vmem:[%s226 + $0x50] sm:$0xff]
        %v240 = vld [vmem:[%s226 + $0x58] sm:$0xff]
        %v241 = vld [vmem:[%s226 + $0x60] sm:$0xff]
        %v242 = vld [vmem:[%s226 + $0x68] sm:$0xff]
        %v243 = vld [vmem:[%s226 + $0x70] sm:$0xff]
        %v244 = vld [vmem:[%s226 + $0x78] sm:$0xff]
        %v245 = vld [vmem:[%s226 + $0x80] sm:$0xff]
        %v246 = vld [vmem:[%s226 + $0x88] sm:$0xff]
        %v247 = vld [vmem:[%s226 + $0x90] sm:$0xff]
        %v248 = vld [vmem:[%s226 + $0x98] sm:$0xff]
        %v249 = vld [vmem:[%s226 + $0xa0] sm:$0xff]
        %v250 = vld [vmem:[%s226 + $0xa8] sm:$0xff]
        %v251 = vld [vmem:[%s226 + $0xb0] sm:$0xff]
        %v252 = vld [vmem:[%s226 + $0xb8] sm:$0xff]
        %v253 = vld [vmem:[%s226 + $0xc0] sm:$0xff]
        %v254 = vld [vmem:[%s226 + $0xc8] sm:$0xff]
        %v255 = vld [vmem:[%s226 + $0xd0] sm:$0xff]
        %v256 = vld [vmem:[%s226 + $0xd8] sm:$0xff]
        %v257 = vld [vmem:[%s226 + $0xe0] sm:$0xff]
        %v258 = vld [vmem:[%s226 + $0xe8] sm:$0xff]
        %v259 = vld [vmem:[%s226 + $0xf0] sm:$0xff]
        %v260 = vld [vmem:[%s226 + $0xf8] sm:$0xff]
        %v261 = vld [vmem:[%s1] sm:$0xff]
        %v262 = vld [vmem:[%s1 + $0x8] sm:$0xff]
        %v263 = vld [vmem:[%s1 + $0x10] sm:$0xff]
        %v264 = vld [vmem:[%s1 + $0x18] sm:$0xff]
        %v265 = vld [vmem:[%s1 + $0x20] sm:$0xff]
        %v266 = vld [vmem:[%s1 + $0x28] sm:$0xff]
        %v267 = vld [vmem:[%s1 + $0x30] sm:$0xff]
        %v268 = vld [vmem:[%s1 + $0x38] sm:$0xff]
        %v269 = vld [vmem:[%s1 + $0x40] sm:$0xff]
        %v270 = vld [vmem:[%s1 + $0x48] sm:$0xff]
        %v271 = vld [vmem:[%s1 + $0x50] sm:$0xff]
        %v272 = vld [vmem:[%s1 + $0x58] sm:$0xff]
        %v273 = vld [vmem:[%s1 + $0x60] sm:$0xff]
        %v274 = vld [vmem:[%s1 + $0x68] sm:$0xff]
        %v275 = vld [vmem:[%s1 + $0x70] sm:$0xff]
        %v276 = vld [vmem:[%s1 + $0x78] sm:$0xff]
        %v277 = vld [vmem:[%s1 + $0x80] sm:$0xff]
        %v278 = vld [vmem:[%s1 + $0x88] sm:$0xff]
        %v279 = vld [vmem:[%s1 + $0x90] sm:$0xff]
        %v280 = vld [vmem:[%s1 + $0x98] sm:$0xff]
        %v281 = vld [vmem:[%s1 + $0xa0] sm:$0xff]
        %v282 = vld [vmem:[%s1 + $0xa8] sm:$0xff]
        %v283 = vld [vmem:[%s1 + $0xb0] sm:$0xff]
        %v284 = vld [vmem:[%s1 + $0xb8] sm:$0xff]
        %v285 = vld [vmem:[%s1 + $0xc0] sm:$0xff]
        %v286 = vld [vmem:[%s1 + $0xc8] sm:$0xff]
        %v287 = vld [vmem:[%s1 + $0xd0] sm:$0xff]
        %v288 = vld [vmem:[%s1 + $0xd8] sm:$0xff]
        %v289 = vld [vmem:[%s1 + $0xe0] sm:$0xff]
        %v290 = vld [vmem:[%s1 + $0xe8] sm:$0xff]
        %v291 = vld [vmem:[%s1 + $0xf0] sm:$0xff]
        %v292 = vld [vmem:[%s1 + $0xf8] sm:$0xff]
        %v293 = vld [vmem:[%s1 + $0x100] sm:$0xff]
        %v294 = vld [vmem:[%s1 + $0x108] sm:$0xff]
        %v295 = vld [vmem:[%s1 + $0x110] sm:$0xff]
        %v296 = vld [vmem:[%s1 + $0x118] sm:$0xff]
        %v297 = vld [vmem:[%s1 + $0x120] sm:$0xff]
        %v298 = vld [vmem:[%s1 + $0x128] sm:$0xff]
        %v299 = vld [vmem:[%s1 + $0x130] sm:$0xff]
        %v300 = vld [vmem:[%s1 + $0x138] sm:$0xff]
        %v301 = vld [vmem:[%s1 + $0x140] sm:$0xff]
        %v302 = vld [vmem:[%s1 + $0x148] sm:$0xff]
        %v303 = vld [vmem:[%s1 + $0x150] sm:$0xff]
        %v304 = vld [vmem:[%s1 + $0x158] sm:$0xff]
        %v305 = vld [vmem:[%s1 + $0x160] sm:$0xff]
        %v306 = vld [vmem:[%s1 + $0x168] sm:$0xff]
        %v307 = vld [vmem:[%s1 + $0x170] sm:$0xff]
        %v308 = vld [vmem:[%s1 + $0x178] sm:$0xff]
        %v309 = vld [vmem:[%s2] sm:$0x3]
        %v311 = vlaneseq
        %v312 = vshrl.u32 %v311, 7
        %v313 = vsub.s32 0, %v312
        %v314 = vrot.slane %v309, %v313
        %v315 = vlaneseq
        %v316 = vshrl.u32 %v315, 7
        %v317 = vsub.s32 1, %v316
        %v318 = vrot.slane %v309, %v317
        %vm321 = vcmask 523264
        %v323 = vsel %vm321, %v230, 0
        %v326 = vsel %vm321, %v232, 0
        %v329 = vsel %vm321, %v234, 0
        %v332 = vsel %vm321, %v236, 0
        %v335 = vsel %vm321, %v238, 0
        %v338 = vsel %vm321, %v240, 0
        %v341 = vsel %vm321, %v242, 0
        %v344 = vsel %vm321, %v244, 0
        %v347 = vsel %vm321, %v246, 0
        %v350 = vsel %vm321, %v248, 0
        %v353 = vsel %vm321, %v250, 0
        %v356 = vsel %vm321, %v252, 0
        %v359 = vsel %vm321, %v254, 0
        %v362 = vsel %vm321, %v256, 0
        %v365 = vsel %vm321, %v258, 0
        %v368 = vsel %vm321, %v260, 0
        %370 = vmatprep.subr.mxu0 %v292
        %371 = vmatpush1.msra.mxu0 %v291
        %372 = vmatprep.subr.mxu0 %v290
        %373 = vmatpush1.msra.mxu0 %v289
        %374 = vmatprep.subr.mxu0 %v288
        %375 = vmatpush1.msra.mxu0 %v287
        %376 = vmatprep.subr.mxu0 %v286
        %377 = vmatpush1.msra.mxu0 %v285
        %378 = vmatprep.subr.mxu0 %v284
        %379 = vmatpush1.msra.mxu0 %v283
        %380 = vmatprep.subr.mxu0 %v282
        %381 = vmatpush1.msra.mxu0 %v281
        %382 = vmatprep.subr.mxu0 %v280
        %383 = vmatpush1.msra.mxu0 %v279
        %384 = vmatprep.subr.mxu0 %v278
        %385 = vmatpush1.msra.mxu0 %v277
        %386 = vmatprep.subr.mxu0 %v276
        %387 = vmatpush1.msra.mxu0 %v275
        %388 = vmatprep.subr.mxu0 %v274
        %389 = vmatpush1.msra.mxu0 %v273
        %390 = vmatprep.subr.mxu0 %v272
        %391 = vmatpush1.msra.mxu0 %v271
        %392 = vmatprep.subr.mxu0 %v270
        %393 = vmatpush1.msra.mxu0 %v269
        %394 = vmatprep.subr.mxu0 %v268
        %395 = vmatpush1.msra.mxu0 %v267
        %396 = vmatprep.subr.mxu0 %v266
        %397 = vmatpush1.msra.mxu0 %v265
        %398 = vmatprep.subr.mxu0 %v264
        %399 = vmatpush1.msra.mxu0 %v263
        %400 = vmatprep.subr.mxu0 %v262
        %401 = vmatpush1.msra.mxu0 %v261
        %402 = vmatprep.subr.mxu0 0.0
        %403 = vmatpush2.msra.mxu0 0.0
        %404 = vmatprep.subr.mxu0 0.0
        %405 = vmatpush2.msra.mxu0 0.0
        %406 = vmatprep.subr.mxu0 0.0
        %407 = vmatpush2.msra.mxu0 0.0
        %408 = vmatprep.subr.mxu0 0.0
        %409 = vmatpush2.msra.mxu0 0.0
        %410 = vmatprep.subr.mxu0 0.0
        %411 = vmatpush2.msra.mxu0 0.0
        %412 = vmatprep.subr.mxu0 0.0
        %413 = vmatpush2.msra.mxu0 0.0
        %414 = vmatprep.subr.mxu0 0.0
        %415 = vmatpush2.msra.mxu0 0.0
        %416 = vmatprep.subr.mxu0 0.0
        %417 = vmatpush2.msra.mxu0 0.0
        %418 = vmatprep.subr.mxu0 %v308
        %419 = vmatpush2.msra.mxu0 %v307
        %420 = vmatprep.subr.mxu0 %v306
        %421 = vmatpush2.msra.mxu0 %v305
        %422 = vmatprep.subr.mxu0 %v304
        %423 = vmatpush2.msra.mxu0 %v303
        %424 = vmatprep.subr.mxu0 %v302
        %425 = vmatpush2.msra.mxu0 %v301
        %426 = vmatprep.subr.mxu0 %v300
        %427 = vmatpush2.msra.mxu0 %v299
        %428 = vmatprep.subr.mxu0 %v298
        %429 = vmatpush2.msra.mxu0 %v297
        %430 = vmatprep.subr.mxu0 %v296
        %431 = vmatpush2.msra.mxu0 %v295
        %432 = vmatprep.subr.mxu0 %v294
        %433 = vmatpush2.msra.mxu0 %v293
        %434 = vmatprep.mubr.f32.mxu0 %v323
        %435 = vmatmul.mubr.f32.gmra.mxu0 %v229
        %v436 = vpop.f32.mrf.mxu0
        %v437 = vadd.f32 %v314, %v436
        %v438 = vpop.f32.mrf.mxu0
        %v439 = vadd.f32 %v318, %v438
        %440 = vmatprep.mubr.f32.mxu0 %v326
        %441 = vmatmul.mubr.f32.gmra.mxu0 %v231
        %v442 = vpop.f32.mrf.mxu0
        %v443 = vadd.f32 %v314, %v442
        %v444 = vpop.f32.mrf.mxu0
        %v445 = vadd.f32 %v318, %v444
        %446 = vmatprep.mubr.f32.mxu0 %v329
        %447 = vmatmul.mubr.f32.gmra.mxu0 %v233
        %v448 = vpop.f32.mrf.mxu0
        %v449 = vadd.f32 %v314, %v448
        %v450 = vpop.f32.mrf.mxu0
        %v451 = vadd.f32 %v318, %v450
        %452 = vmatprep.mubr.f32.mxu0 %v332
        %453 = vmatmul.mubr.f32.gmra.mxu0 %v235
        %v454 = vpop.f32.mrf.mxu0
        %v455 = vadd.f32 %v314, %v454
        %v456 = vpop.f32.mrf.mxu0
        %v457 = vadd.f32 %v318, %v456
        %458 = vmatprep.mubr.f32.mxu0 %v335
        %459 = vmatmul.mubr.f32.gmra.mxu0 %v237
        %v460 = vpop.f32.mrf.mxu0
        %v461 = vadd.f32 %v314, %v460
        %v462 = vpop.f32.mrf.mxu0
        %v463 = vadd.f32 %v318, %v462
        %464 = vmatprep.mubr.f32.mxu0 %v338
        %465 = vmatmul.mubr.f32.gmra.mxu0 %v239
        %v466 = vpop.f32.mrf.mxu0
        %v467 = vadd.f32 %v314, %v466
        %v468 = vpop.f32.mrf.mxu0
        %v469 = vadd.f32 %v318, %v468
        %470 = vmatprep.mubr.f32.mxu0 %v341
        %471 = vmatmul.mubr.f32.gmra.mxu0 %v241
        %v472 = vpop.f32.mrf.mxu0
        %v473 = vadd.f32 %v314, %v472
        %v474 = vpop.f32.mrf.mxu0
        %v475 = vadd.f32 %v318, %v474
        %476 = vmatprep.mubr.f32.mxu0 %v344
        %477 = vmatmul.mubr.f32.gmra.mxu0 %v243
        %v478 = vpop.f32.mrf.mxu0
        %v479 = vadd.f32 %v314, %v478
        %v480 = vpop.f32.mrf.mxu0
        %v481 = vadd.f32 %v318, %v480
        %482 = vmatprep.mubr.f32.mxu0 %v347
        %483 = vmatmul.mubr.f32.gmra.mxu0 %v245
        %v484 = vpop.f32.mrf.mxu0
        %v485 = vadd.f32 %v314, %v484
        %v486 = vpop.f32.mrf.mxu0
        %v487 = vadd.f32 %v318, %v486
        %488 = vmatprep.mubr.f32.mxu0 %v350
        %489 = vmatmul.mubr.f32.gmra.mxu0 %v247
        %v490 = vpop.f32.mrf.mxu0
        %v491 = vadd.f32 %v314, %v490
        %v492 = vpop.f32.mrf.mxu0
        %v493 = vadd.f32 %v318, %v492
        %494 = vmatprep.mubr.f32.mxu0 %v353
        %495 = vmatmul.mubr.f32.gmra.mxu0 %v249
        %v496 = vpop.f32.mrf.mxu0
        %v497 = vadd.f32 %v314, %v496
        %v498 = vpop.f32.mrf.mxu0
        %v499 = vadd.f32 %v318, %v498
        %500 = vmatprep.mubr.f32.mxu0 %v356
        %501 = vmatmul.mubr.f32.gmra.mxu0 %v251
        %v502 = vpop.f32.mrf.mxu0
        %v503 = vadd.f32 %v314, %v502
        %v504 = vpop.f32.mrf.mxu0
        %v505 = vadd.f32 %v318, %v504
        %506 = vmatprep.mubr.f32.mxu0 %v359
        %507 = vmatmul.mubr.f32.gmra.mxu0 %v253
        %v508 = vpop.f32.mrf.mxu0
        %v509 = vadd.f32 %v314, %v508
        %v510 = vpop.f32.mrf.mxu0
        %v511 = vadd.f32 %v318, %v510
        %512 = vmatprep.mubr.f32.mxu0 %v362
        %513 = vmatmul.mubr.f32.gmra.mxu0 %v255
        %v514 = vpop.f32.mrf.mxu0
        %v515 = vadd.f32 %v314, %v514
        %v516 = vpop.f32.mrf.mxu0
        %v517 = vadd.f32 %v318, %v516
        %518 = vmatprep.mubr.f32.mxu0 %v365
        %519 = vmatmul.mubr.f32.gmra.mxu0 %v257
        %v520 = vpop.f32.mrf.mxu0
        %v521 = vadd.f32 %v314, %v520
        %v522 = vpop.f32.mrf.mxu0
        %v523 = vadd.f32 %v318, %v522
        %524 = vmatprep.mubr.f32.mxu0 %v368
        %525 = vmatmul.mubr.f32.gmra.mxu0 %v259
        %v526 = vpop.f32.mrf.mxu0
        %v527 = vadd.f32 %v314, %v526
        %v528 = vpop.f32.mrf.mxu0
        %v529 = vadd.f32 %v318, %v528
        %530 = vdwg.mxu0
        %v531 = vmax.f32 %v437, 0.0
        %v532 = vmax.f32 %v443, 0.0
        %v533 = vmax.f32 %v449, 0.0
        %v534 = vmax.f32 %v455, 0.0
        %v535 = vmax.f32 %v461, 0.0
        %v536 = vmax.f32 %v467, 0.0
        %v537 = vmax.f32 %v473, 0.0
        %v538 = vmax.f32 %v479, 0.0
        %v539 = vmax.f32 %v485, 0.0
        %v540 = vmax.f32 %v491, 0.0
        %v541 = vmax.f32 %v497, 0.0
        %v542 = vmax.f32 %v503, 0.0
        %v543 = vmax.f32 %v509, 0.0
        %v544 = vmax.f32 %v515, 0.0
        %v545 = vmax.f32 %v521, 0.0
        %v546 = vmax.f32 %v527, 0.0
        %v547 = vlaneseq
        %v548 = vshrl.u32 %v547, 7
        %v549 = vadd.s32 %v548, 8
        %v550 = vadd.s32 %v548, 16
        %v551 = vadd.s32 %v548, 24
        %v552 = vadd.s32 %v548, 32
        %v553 = vadd.s32 %v548, 40
        %v554 = vadd.s32 %v548, 48
        %v555 = vadd.s32 %v548, 56
        %v556 = vadd.s32 %v548, 64
        %v557 = vadd.s32 %v548, 72
        %v558 = vadd.s32 %v548, 80
        %v559 = vadd.s32 %v548, 88
        %v560 = vadd.s32 %v548, 96
        %v561 = vadd.s32 %v548, 104
        %v562 = vadd.s32 %v548, 112
        %v563 = vadd.s32 %v548, 120
        %vm564 = vcmp.eq.s32.totalorder %v548, 0
        %vm565 = vcmp.eq.s32.totalorder %v549, 0
        %vm566 = vcmp.eq.s32.totalorder %v550, 0
        %vm567 = vcmp.eq.s32.totalorder %v551, 0
        %vm568 = vcmp.eq.s32.totalorder %v552, 0
        %vm569 = vcmp.eq.s32.totalorder %v553, 0
        %vm570 = vcmp.eq.s32.totalorder %v554, 0
        %vm571 = vcmp.eq.s32.totalorder %v555, 0
        %vm572 = vcmp.eq.s32.totalorder %v556, 0
        %vm573 = vcmp.eq.s32.totalorder %v557, 0
        %vm574 = vcmp.eq.s32.totalorder %v558, 0
        %vm575 = vcmp.eq.s32.totalorder %v559, 0
        %vm576 = vcmp.eq.s32.totalorder %v560, 0
        %vm577 = vcmp.eq.s32.totalorder %v561, 0
        %vm578 = vcmp.eq.s32.totalorder %v562, 0
        %vm579 = vcmp.eq.s32.totalorder %v563, 0
        %vm580 = vcmp.eq.s32.totalorder %v548, 15
        %vm581 = vcmp.eq.s32.totalorder %v549, 15
        %vm582 = vcmp.eq.s32.totalorder %v550, 15
        %vm583 = vcmp.eq.s32.totalorder %v551, 15
        %vm584 = vcmp.eq.s32.totalorder %v552, 15
        %vm585 = vcmp.eq.s32.totalorder %v553, 15
        %vm586 = vcmp.eq.s32.totalorder %v554, 15
        %vm587 = vcmp.eq.s32.totalorder %v555, 15
        %vm588 = vcmp.eq.s32.totalorder %v556, 15
        %vm589 = vcmp.eq.s32.totalorder %v557, 15
        %vm590 = vcmp.eq.s32.totalorder %v558, 15
        %vm591 = vcmp.eq.s32.totalorder %v559, 15
        %vm592 = vcmp.eq.s32.totalorder %v560, 15
        %vm593 = vcmp.eq.s32.totalorder %v561, 15
        %vm594 = vcmp.eq.s32.totalorder %v562, 15
        %vm595 = vcmp.eq.s32.totalorder %v563, 15
        %vm596 = vcmp.eq.s32.totalorder %v548, 16
        %vm597 = vcmp.eq.s32.totalorder %v549, 16
        %vm598 = vcmp.eq.s32.totalorder %v550, 16
        %vm599 = vcmp.eq.s32.totalorder %v551, 16
        %vm600 = vcmp.eq.s32.totalorder %v552, 16
        %vm601 = vcmp.eq.s32.totalorder %v553, 16
        %vm602 = vcmp.eq.s32.totalorder %v554, 16
        %vm603 = vcmp.eq.s32.totalorder %v555, 16
        %vm604 = vcmp.eq.s32.totalorder %v556, 16
        %vm605 = vcmp.eq.s32.totalorder %v557, 16
        %vm606 = vcmp.eq.s32.totalorder %v558, 16
        %vm607 = vcmp.eq.s32.totalorder %v559, 16
        %vm608 = vcmp.eq.s32.totalorder %v560, 16
        %vm609 = vcmp.eq.s32.totalorder %v561, 16
        %vm610 = vcmp.eq.s32.totalorder %v562, 16
        %vm611 = vcmp.eq.s32.totalorder %v563, 16
        %vm612 = vmor %vm564, %vm596
        %vm613 = vmor %vm565, %vm597
        %vm614 = vmor %vm566, %vm598
        %vm615 = vmor %vm567, %vm599
        %vm616 = vmor %vm568, %vm600
        %vm617 = vmor %vm569, %vm601
        %vm618 = vmor %vm570, %vm602
        %vm619 = vmor %vm571, %vm603
        %vm620 = vmor %vm572, %vm604
        %vm621 = vmor %vm573, %vm605
        %vm622 = vmor %vm574, %vm606
        %vm623 = vmor %vm575, %vm607
        %vm624 = vmor %vm576, %vm608
        %vm625 = vmor %vm577, %vm609
        %vm626 = vmor %vm578, %vm610
        %vm627 = vmor %vm579, %vm611
        %vm628 = vcmp.eq.s32.totalorder %v548, 31
        %vm629 = vcmp.eq.s32.totalorder %v549, 31
        %vm630 = vcmp.eq.s32.totalorder %v550, 31
        %vm631 = vcmp.eq.s32.totalorder %v551, 31
        %vm632 = vcmp.eq.s32.totalorder %v552, 31
        %vm633 = vcmp.eq.s32.totalorder %v553, 31
        %vm634 = vcmp.eq.s32.totalorder %v554, 31
        %vm635 = vcmp.eq.s32.totalorder %v555, 31
        %vm636 = vcmp.eq.s32.totalorder %v556, 31
        %vm637 = vcmp.eq.s32.totalorder %v557, 31
        %vm638 = vcmp.eq.s32.totalorder %v558, 31
        %vm639 = vcmp.eq.s32.totalorder %v559, 31
        %vm640 = vcmp.eq.s32.totalorder %v560, 31
        %vm641 = vcmp.eq.s32.totalorder %v561, 31
        %vm642 = vcmp.eq.s32.totalorder %v562, 31
        %vm643 = vcmp.eq.s32.totalorder %v563, 31
        %vm644 = vmor %vm580, %vm628
        %vm645 = vmor %vm581, %vm629
        %vm646 = vmor %vm582, %vm630
        %vm647 = vmor %vm583, %vm631
        %vm648 = vmor %vm584, %vm632
        %vm649 = vmor %vm585, %vm633
        %vm650 = vmor %vm586, %vm634
        %vm651 = vmor %vm587, %vm635
        %vm652 = vmor %vm588, %vm636
        %vm653 = vmor %vm589, %vm637
        %vm654 = vmor %vm590, %vm638
        %vm655 = vmor %vm591, %vm639
        %vm656 = vmor %vm592, %vm640
        %vm657 = vmor %vm593, %vm641
        %vm658 = vmor %vm594, %vm642
        %vm659 = vmor %vm595, %vm643
        %vm660 = vcmp.eq.s32.totalorder %v548, 32
        %vm661 = vcmp.eq.s32.totalorder %v549, 32
        %vm662 = vcmp.eq.s32.totalorder %v550, 32
        %vm663 = vcmp.eq.s32.totalorder %v551, 32
        %vm664 = vcmp.eq.s32.totalorder %v552, 32
        %vm665 = vcmp.eq.s32.totalorder %v553, 32
        %vm666 = vcmp.eq.s32.totalorder %v554, 32
        %vm667 = vcmp.eq.s32.totalorder %v555, 32
        %vm668 = vcmp.eq.s32.totalorder %v556, 32
        %vm669 = vcmp.eq.s32.totalorder %v557, 32
        %vm670 = vcmp.eq.s32.totalorder %v558, 32
        %vm671 = vcmp.eq.s32.totalorder %v559, 32
        %vm672 = vcmp.eq.s32.totalorder %v560, 32
        %vm673 = vcmp.eq.s32.totalorder %v561, 32
        %vm674 = vcmp.eq.s32.totalorder %v562, 32
        %vm675 = vcmp.eq.s32.totalorder %v563, 32
        %vm676 = vmor %vm612, %vm660
        %vm677 = vmor %vm613, %vm661
        %vm678 = vmor %vm614, %vm662
        %vm679 = vmor %vm615, %vm663
        %vm680 = vmor %vm616, %vm664
        %vm681 = vmor %vm617, %vm665
        %vm682 = vmor %vm618, %vm666
        %vm683 = vmor %vm619, %vm667
        %vm684 = vmor %vm620, %vm668
        %vm685 = vmor %vm621, %vm669
        %vm686 = vmor %vm622, %vm670
        %vm687 = vmor %vm623, %vm671
        %vm688 = vmor %vm624, %vm672
        %vm689 = vmor %vm625, %vm673
        %vm690 = vmor %vm626, %vm674
        %vm691 = vmor %vm627, %vm675
        %vm692 = vcmp.eq.s32.totalorder %v548, 47
        %vm693 = vcmp.eq.s32.totalorder %v549, 47
        %vm694 = vcmp.eq.s32.totalorder %v550, 47
        %vm695 = vcmp.eq.s32.totalorder %v551, 47
        %vm696 = vcmp.eq.s32.totalorder %v552, 47
        %vm697 = vcmp.eq.s32.totalorder %v553, 47
        %vm698 = vcmp.eq.s32.totalorder %v554, 47
        %vm699 = vcmp.eq.s32.totalorder %v555, 47
        %vm700 = vcmp.eq.s32.totalorder %v556, 47
        %vm701 = vcmp.eq.s32.totalorder %v557, 47
        %vm702 = vcmp.eq.s32.totalorder %v558, 47
        %vm703 = vcmp.eq.s32.totalorder %v559, 47
        %vm704 = vcmp.eq.s32.totalorder %v560, 47
        %vm705 = vcmp.eq.s32.totalorder %v561, 47
        %vm706 = vcmp.eq.s32.totalorder %v562, 47
        %vm707 = vcmp.eq.s32.totalorder %v563, 47
        %vm708 = vmor %vm644, %vm692
        %vm709 = vmor %vm645, %vm693
        %vm710 = vmor %vm646, %vm694
        %vm711 = vmor %vm647, %vm695
        %vm712 = vmor %vm648, %vm696
        %vm713 = vmor %vm649, %vm697
        %vm714 = vmor %vm650, %vm698
        %vm715 = vmor %vm651, %vm699
        %vm716 = vmor %vm652, %vm700
        %vm717 = vmor %vm653, %vm701
        %vm718 = vmor %vm654, %vm702
        %vm719 = vmor %vm655, %vm703
        %vm720 = vmor %vm656, %vm704
        %vm721 = vmor %vm657, %vm705
        %vm722 = vmor %vm658, %vm706
        %vm723 = vmor %vm659, %vm707
        %vm724 = vcmp.eq.s32.totalorder %v548, 48
        %vm725 = vcmp.eq.s32.totalorder %v549, 48
        %vm726 = vcmp.eq.s32.totalorder %v550, 48
        %vm727 = vcmp.eq.s32.totalorder %v551, 48
        %vm728 = vcmp.eq.s32.totalorder %v552, 48
        %vm729 = vcmp.eq.s32.totalorder %v553, 48
        %vm730 = vcmp.eq.s32.totalorder %v554, 48
        %vm731 = vcmp.eq.s32.totalorder %v555, 48
        %vm732 = vcmp.eq.s32.totalorder %v556, 48
        %vm733 = vcmp.eq.s32.totalorder %v557, 48
        %vm734 = vcmp.eq.s32.totalorder %v558, 48
        %vm735 = vcmp.eq.s32.totalorder %v559, 48
        %vm736 = vcmp.eq.s32.totalorder %v560, 48
        %vm737 = vcmp.eq.s32.totalorder %v561, 48
        %vm738 = vcmp.eq.s32.totalorder %v562, 48
        %vm739 = vcmp.eq.s32.totalorder %v563, 48
        %vm740 = vmor %vm676, %vm724
        %vm741 = vmor %vm677, %vm725
        %vm742 = vmor %vm678, %vm726
        %vm743 = vmor %vm679, %vm727
        %vm744 = vmor %vm680, %vm728
        %vm745 = vmor %vm681, %vm729
        %vm746 = vmor %vm682, %vm730
        %vm747 = vmor %vm683, %vm731
        %vm748 = vmor %vm684, %vm732
        %vm749 = vmor %vm685, %vm733
        %vm750 = vmor %vm686, %vm734
        %vm751 = vmor %vm687, %vm735
        %vm752 = vmor %vm688, %vm736
        %vm753 = vmor %vm689, %vm737
        %vm754 = vmor %vm690, %vm738
        %vm755 = vmor %vm691, %vm739
        %vm756 = vcmp.eq.s32.totalorder %v548, 63
        %vm757 = vcmp.eq.s32.totalorder %v549, 63
        %vm758 = vcmp.eq.s32.totalorder %v550, 63
        %vm759 = vcmp.eq.s32.totalorder %v551, 63
        %vm760 = vcmp.eq.s32.totalorder %v552, 63
        %vm761 = vcmp.eq.s32.totalorder %v553, 63
        %vm762 = vcmp.eq.s32.totalorder %v554, 63
        %vm763 = vcmp.eq.s32.totalorder %v555, 63
        %vm764 = vcmp.eq.s32.totalorder %v556, 63
        %vm765 = vcmp.eq.s32.totalorder %v557, 63
        %vm766 = vcmp.eq.s32.totalorder %v558, 63
        %vm767 = vcmp.eq.s32.totalorder %v559, 63
        %vm768 = vcmp.eq.s32.totalorder %v560, 63
        %vm769 = vcmp.eq.s32.totalorder %v561, 63
        %vm770 = vcmp.eq.s32.totalorder %v562, 63
        %vm771 = vcmp.eq.s32.totalorder %v563, 63
        %vm772 = vmor %vm708, %vm756
        %vm773 = vmor %vm709, %vm757
        %vm774 = vmor %vm710, %vm758
        %vm775 = vmor %vm711, %vm759
        %vm776 = vmor %vm712, %vm760
        %vm777 = vmor %vm713, %vm761
        %vm778 = vmor %vm714, %vm762
        %vm779 = vmor %vm715, %vm763
        %vm780 = vmor %vm716, %vm764
        %vm781 = vmor %vm717, %vm765
        %vm782 = vmor %vm718, %vm766
        %vm783 = vmor %vm719, %vm767
        %vm784 = vmor %vm720, %vm768
        %vm785 = vmor %vm721, %vm769
        %vm786 = vmor %vm722, %vm770
        %vm787 = vmor %vm723, %vm771
        %vm788 = vcmp.eq.s32.totalorder %v548, 64
        %vm789 = vcmp.eq.s32.totalorder %v549, 64
        %vm790 = vcmp.eq.s32.totalorder %v550, 64
        %vm791 = vcmp.eq.s32.totalorder %v551, 64
        %vm792 = vcmp.eq.s32.totalorder %v552, 64
        %vm793 = vcmp.eq.s32.totalorder %v553, 64
        %vm794 = vcmp.eq.s32.totalorder %v554, 64
        %vm795 = vcmp.eq.s32.totalorder %v555, 64
        %vm796 = vcmp.eq.s32.totalorder %v556, 64
        %vm797 = vcmp.eq.s32.totalorder %v557, 64
        %vm798 = vcmp.eq.s32.totalorder %v558, 64
        %vm799 = vcmp.eq.s32.totalorder %v559, 64
        %vm800 = vcmp.eq.s32.totalorder %v560, 64
        %vm801 = vcmp.eq.s32.totalorder %v561, 64
        %vm802 = vcmp.eq.s32.totalorder %v562, 64
        %vm803 = vcmp.eq.s32.totalorder %v563, 64
        %vm804 = vmor %vm740, %vm788
        %vm805 = vmor %vm741, %vm789
        %vm806 = vmor %vm742, %vm790
        %vm807 = vmor %vm743, %vm791
        %vm808 = vmor %vm744, %vm792
        %vm809 = vmor %vm745, %vm793
        %vm810 = vmor %vm746, %vm794
        %vm811 = vmor %vm747, %vm795
        %vm812 = vmor %vm748, %vm796
        %vm813 = vmor %vm749, %vm797
        %vm814 = vmor %vm750, %vm798
        %vm815 = vmor %vm751, %vm799
        %vm816 = vmor %vm752, %vm800
        %vm817 = vmor %vm753, %vm801
        %vm818 = vmor %vm754, %vm802
        %vm819 = vmor %vm755, %vm803
        %vm820 = vcmp.eq.s32.totalorder %v548, 79
        %vm821 = vcmp.eq.s32.totalorder %v549, 79
        %vm822 = vcmp.eq.s32.totalorder %v550, 79
        %vm823 = vcmp.eq.s32.totalorder %v551, 79
        %vm824 = vcmp.eq.s32.totalorder %v552, 79
        %vm825 = vcmp.eq.s32.totalorder %v553, 79
        %vm826 = vcmp.eq.s32.totalorder %v554, 79
        %vm827 = vcmp.eq.s32.totalorder %v555, 79
        %vm828 = vcmp.eq.s32.totalorder %v556, 79
        %vm829 = vcmp.eq.s32.totalorder %v557, 79
        %vm830 = vcmp.eq.s32.totalorder %v558, 79
        %vm831 = vcmp.eq.s32.totalorder %v559, 79
        %vm832 = vcmp.eq.s32.totalorder %v560, 79
        %vm833 = vcmp.eq.s32.totalorder %v561, 79
        %vm834 = vcmp.eq.s32.totalorder %v562, 79
        %vm835 = vcmp.eq.s32.totalorder %v563, 79
        %vm836 = vmor %vm772, %vm820
        %vm837 = vmor %vm773, %vm821
        %vm838 = vmor %vm774, %vm822
        %vm839 = vmor %vm775, %vm823
        %vm840 = vmor %vm776, %vm824
        %vm841 = vmor %vm777, %vm825
        %vm842 = vmor %vm778, %vm826
        %vm843 = vmor %vm779, %vm827
        %vm844 = vmor %vm780, %vm828
        %vm845 = vmor %vm781, %vm829
        %vm846 = vmor %vm782, %vm830
        %vm847 = vmor %vm783, %vm831
        %vm848 = vmor %vm784, %vm832
        %vm849 = vmor %vm785, %vm833
        %vm850 = vmor %vm786, %vm834
        %vm851 = vmor %vm787, %vm835
        %vm852 = vcmp.eq.s32.totalorder %v548, 80
        %vm853 = vcmp.eq.s32.totalorder %v549, 80
        %vm854 = vcmp.eq.s32.totalorder %v550, 80
        %vm855 = vcmp.eq.s32.totalorder %v551, 80
        %vm856 = vcmp.eq.s32.totalorder %v552, 80
        %vm857 = vcmp.eq.s32.totalorder %v553, 80
        %vm858 = vcmp.eq.s32.totalorder %v554, 80
        %vm859 = vcmp.eq.s32.totalorder %v555, 80
        %vm860 = vcmp.eq.s32.totalorder %v556, 80
        %vm861 = vcmp.eq.s32.totalorder %v557, 80
        %vm862 = vcmp.eq.s32.totalorder %v558, 80
        %vm863 = vcmp.eq.s32.totalorder %v559, 80
        %vm864 = vcmp.eq.s32.totalorder %v560, 80
        %vm865 = vcmp.eq.s32.totalorder %v561, 80
        %vm866 = vcmp.eq.s32.totalorder %v562, 80
        %vm867 = vcmp.eq.s32.totalorder %v563, 80
        %vm868 = vmor %vm804, %vm852
        %vm869 = vmor %vm805, %vm853
        %vm870 = vmor %vm806, %vm854
        %vm871 = vmor %vm807, %vm855
        %vm872 = vmor %vm808, %vm856
        %vm873 = vmor %vm809, %vm857
        %vm874 = vmor %vm810, %vm858
        %vm875 = vmor %vm811, %vm859
        %vm876 = vmor %vm812, %vm860
        %vm877 = vmor %vm813, %vm861
        %vm878 = vmor %vm814, %vm862
        %vm879 = vmor %vm815, %vm863
        %vm880 = vmor %vm816, %vm864
        %vm881 = vmor %vm817, %vm865
        %vm882 = vmor %vm818, %vm866
        %vm883 = vmor %vm819, %vm867
        %vm884 = vcmp.eq.s32.totalorder %v548, 95
        %vm885 = vcmp.eq.s32.totalorder %v549, 95
        %vm886 = vcmp.eq.s32.totalorder %v550, 95
        %vm887 = vcmp.eq.s32.totalorder %v551, 95
        %vm888 = vcmp.eq.s32.totalorder %v552, 95
        %vm889 = vcmp.eq.s32.totalorder %v553, 95
        %vm890 = vcmp.eq.s32.totalorder %v554, 95
        %vm891 = vcmp.eq.s32.totalorder %v555, 95
        %vm892 = vcmp.eq.s32.totalorder %v556, 95
        %vm893 = vcmp.eq.s32.totalorder %v557, 95
        %vm894 = vcmp.eq.s32.totalorder %v558, 95
        %vm895 = vcmp.eq.s32.totalorder %v559, 95
        %vm896 = vcmp.eq.s32.totalorder %v560, 95
        %vm897 = vcmp.eq.s32.totalorder %v561, 95
        %vm898 = vcmp.eq.s32.totalorder %v562, 95
        %vm899 = vcmp.eq.s32.totalorder %v563, 95
        %vm900 = vmor %vm836, %vm884
        %vm901 = vmor %vm837, %vm885
        %vm902 = vmor %vm838, %vm886
        %vm903 = vmor %vm839, %vm887
        %vm904 = vmor %vm840, %vm888
        %vm905 = vmor %vm841, %vm889
        %vm906 = vmor %vm842, %vm890
        %vm907 = vmor %vm843, %vm891
        %vm908 = vmor %vm844, %vm892
        %vm909 = vmor %vm845, %vm893
        %vm910 = vmor %vm846, %vm894
        %vm911 = vmor %vm847, %vm895
        %vm912 = vmor %vm848, %vm896
        %vm913 = vmor %vm849, %vm897
        %vm914 = vmor %vm850, %vm898
        %vm915 = vmor %vm851, %vm899
        %vm916 = vcmp.eq.s32.totalorder %v548, 96
        %vm917 = vcmp.eq.s32.totalorder %v549, 96
        %vm918 = vcmp.eq.s32.totalorder %v550, 96
        %vm919 = vcmp.eq.s32.totalorder %v551, 96
        %vm920 = vcmp.eq.s32.totalorder %v552, 96
        %vm921 = vcmp.eq.s32.totalorder %v553, 96
        %vm922 = vcmp.eq.s32.totalorder %v554, 96
        %vm923 = vcmp.eq.s32.totalorder %v555, 96
        %vm924 = vcmp.eq.s32.totalorder %v556, 96
        %vm925 = vcmp.eq.s32.totalorder %v557, 96
        %vm926 = vcmp.eq.s32.totalorder %v558, 96
        %vm927 = vcmp.eq.s32.totalorder %v559, 96
        %vm928 = vcmp.eq.s32.totalorder %v560, 96
        %vm929 = vcmp.eq.s32.totalorder %v561, 96
        %vm930 = vcmp.eq.s32.totalorder %v562, 96
        %vm931 = vcmp.eq.s32.totalorder %v563, 96
        %vm932 = vmor %vm868, %vm916
        %vm933 = vmor %vm869, %vm917
        %vm934 = vmor %vm870, %vm918
        %vm935 = vmor %vm871, %vm919
        %vm936 = vmor %vm872, %vm920
        %vm937 = vmor %vm873, %vm921
        %vm938 = vmor %vm874, %vm922
        %vm939 = vmor %vm875, %vm923
        %vm940 = vmor %vm876, %vm924
        %vm941 = vmor %vm877, %vm925
        %vm942 = vmor %vm878, %vm926
        %vm943 = vmor %vm879, %vm927
        %vm944 = vmor %vm880, %vm928
        %vm945 = vmor %vm881, %vm929
        %vm946 = vmor %vm882, %vm930
        %vm947 = vmor %vm883, %vm931
        %vm948 = vcmp.eq.s32.totalorder %v548, 111
        %vm949 = vcmp.eq.s32.totalorder %v549, 111
        %vm950 = vcmp.eq.s32.totalorder %v550, 111
        %vm951 = vcmp.eq.s32.totalorder %v551, 111
        %vm952 = vcmp.eq.s32.totalorder %v552, 111
        %vm953 = vcmp.eq.s32.totalorder %v553, 111
        %vm954 = vcmp.eq.s32.totalorder %v554, 111
        %vm955 = vcmp.eq.s32.totalorder %v555, 111
        %vm956 = vcmp.eq.s32.totalorder %v556, 111
        %vm957 = vcmp.eq.s32.totalorder %v557, 111
        %vm958 = vcmp.eq.s32.totalorder %v558, 111
        %vm959 = vcmp.eq.s32.totalorder %v559, 111
        %vm960 = vcmp.eq.s32.totalorder %v560, 111
        %vm961 = vcmp.eq.s32.totalorder %v561, 111
        %vm962 = vcmp.eq.s32.totalorder %v562, 111
        %vm963 = vcmp.eq.s32.totalorder %v563, 111
        %vm964 = vmor %vm900, %vm948
        %vm965 = vmor %vm901, %vm949
        %vm966 = vmor %vm902, %vm950
        %vm967 = vmor %vm903, %vm951
        %vm968 = vmor %vm904, %vm952
        %vm969 = vmor %vm905, %vm953
        %vm970 = vmor %vm906, %vm954
        %vm971 = vmor %vm907, %vm955
        %vm972 = vmor %vm908, %vm956
        %vm973 = vmor %vm909, %vm957
        %vm974 = vmor %vm910, %vm958
        %vm975 = vmor %vm911, %vm959
        %vm976 = vmor %vm912, %vm960
        %vm977 = vmor %vm913, %vm961
        %vm978 = vmor %vm914, %vm962
        %vm979 = vmor %vm915, %vm963
        %vm980 = vcmp.eq.s32.totalorder %v548, 112
        %vm981 = vcmp.eq.s32.totalorder %v549, 112
        %vm982 = vcmp.eq.s32.totalorder %v550, 112
        %vm983 = vcmp.eq.s32.totalorder %v551, 112
        %vm984 = vcmp.eq.s32.totalorder %v552, 112
        %vm985 = vcmp.eq.s32.totalorder %v553, 112
        %vm986 = vcmp.eq.s32.totalorder %v554, 112
        %vm987 = vcmp.eq.s32.totalorder %v555, 112
        %vm988 = vcmp.eq.s32.totalorder %v556, 112
        %vm989 = vcmp.eq.s32.totalorder %v557, 112
        %vm990 = vcmp.eq.s32.totalorder %v558, 112
        %vm991 = vcmp.eq.s32.totalorder %v559, 112
        %vm992 = vcmp.eq.s32.totalorder %v560, 112
        %vm993 = vcmp.eq.s32.totalorder %v561, 112
        %vm994 = vcmp.eq.s32.totalorder %v562, 112
        %vm995 = vcmp.eq.s32.totalorder %v563, 112
        %vm996 = vmor %vm932, %vm980
        %vm997 = vmor %vm933, %vm981
        %vm998 = vmor %vm934, %vm982
        %vm999 = vmor %vm935, %vm983
        %vm1000 = vmor %vm936, %vm984
        %vm1001 = vmor %vm937, %vm985
        %vm1002 = vmor %vm938, %vm986
        %vm1003 = vmor %vm939, %vm987
        %vm1004 = vmor %vm940, %vm988
        %vm1005 = vmor %vm941, %vm989
        %vm1006 = vmor %vm942, %vm990
        %vm1007 = vmor %vm943, %vm991
        %vm1008 = vmor %vm944, %vm992
        %vm1009 = vmor %vm945, %vm993
        %vm1010 = vmor %vm946, %vm994
        %vm1011 = vmor %vm947, %vm995
        %vm1012 = vcmp.eq.s32.totalorder %v548, 127
        %vm1013 = vcmp.eq.s32.totalorder %v549, 127
        %vm1014 = vcmp.eq.s32.totalorder %v550, 127
        %vm1015 = vcmp.eq.s32.totalorder %v551, 127
        %vm1016 = vcmp.eq.s32.totalorder %v552, 127
        %vm1017 = vcmp.eq.s32.totalorder %v553, 127
        %vm1018 = vcmp.eq.s32.totalorder %v554, 127
        %vm1019 = vcmp.eq.s32.totalorder %v555, 127
        %vm1020 = vcmp.eq.s32.totalorder %v556, 127
        %vm1021 = vcmp.eq.s32.totalorder %v557, 127
        %vm1022 = vcmp.eq.s32.totalorder %v558, 127
        %vm1023 = vcmp.eq.s32.totalorder %v559, 127
        %vm1024 = vcmp.eq.s32.totalorder %v560, 127
        %vm1025 = vcmp.eq.s32.totalorder %v561, 127
        %vm1026 = vcmp.eq.s32.totalorder %v562, 127
        %vm1027 = vcmp.eq.s32.totalorder %v563, 127
        %vm1028 = vmor %vm964, %vm1012
        %vm1029 = vmor %vm965, %vm1013
        %vm1030 = vmor %vm966, %vm1014
        %vm1031 = vmor %vm967, %vm1015
        %vm1032 = vmor %vm968, %vm1016
        %vm1033 = vmor %vm969, %vm1017
        %vm1034 = vmor %vm970, %vm1018
        %vm1035 = vmor %vm971, %vm1019
        %vm1036 = vmor %vm972, %vm1020
        %vm1037 = vmor %vm973, %vm1021
        %vm1038 = vmor %vm974, %vm1022
        %vm1039 = vmor %vm975, %vm1023
        %vm1040 = vmor %vm976, %vm1024
        %vm1041 = vmor %vm977, %vm1025
        %vm1042 = vmor %vm978, %vm1026
        %vm1043 = vmor %vm979, %vm1027
        %v1044 = vrot.slane %v531, 7
        %v1045 = vrot.slane %v532, 7
        %v1046 = vrot.slane %v533, 7
        %v1047 = vrot.slane %v534, 7
        %v1048 = vrot.slane %v535, 7
        %v1049 = vrot.slane %v536, 7
        %v1050 = vrot.slane %v537, 7
        %v1051 = vrot.slane %v538, 7
        %v1052 = vrot.slane %v539, 7
        %v1053 = vrot.slane %v540, 7
        %v1054 = vrot.slane %v541, 7
        %v1055 = vrot.slane %v542, 7
        %v1056 = vrot.slane %v543, 7
        %v1057 = vrot.slane %v544, 7
        %v1058 = vrot.slane %v545, 7
        %v1059 = vrot.slane %v546, 7
        %vm1060 = vcmp.lt.s32.totalorder %v548, 1
        %v1061 = vsel %vm1060, %v1058, %v1059
        %v1062 = vsel %vm1060, %v1057, %v1058
        %v1063 = vsel %vm1060, %v1056, %v1057
        %v1064 = vsel %vm1060, %v1055, %v1056
        %v1065 = vsel %vm1060, %v1054, %v1055
        %v1066 = vsel %vm1060, %v1053, %v1054
        %v1067 = vsel %vm1060, %v1052, %v1053
        %v1068 = vsel %vm1060, %v1051, %v1052
        %v1069 = vsel %vm1060, %v1050, %v1051
        %v1070 = vsel %vm1060, %v1049, %v1050
        %v1071 = vsel %vm1060, %v1048, %v1049
        %v1072 = vsel %vm1060, %v1047, %v1048
        %v1073 = vsel %vm1060, %v1046, %v1047
        %v1074 = vsel %vm1060, %v1045, %v1046
        %v1075 = vsel %vm1060, %v1044, %v1045
        %v1076 = vsel %vm1060, %v1059, %v1044
        %v1077 = vsel %vm996, 0.0, %v1076
        %v1078 = vsel %vm997, 0.0, %v1075
        %v1079 = vsel %vm998, 0.0, %v1074
        %v1080 = vsel %vm999, 0.0, %v1073
        %v1081 = vsel %vm1000, 0.0, %v1072
        %v1082 = vsel %vm1001, 0.0, %v1071
        %v1083 = vsel %vm1002, 0.0, %v1070
        %v1084 = vsel %vm1003, 0.0, %v1069
        %v1085 = vsel %vm1004, 0.0, %v1068
        %v1086 = vsel %vm1005, 0.0, %v1067
        %v1087 = vsel %vm1006, 0.0, %v1066
        %v1088 = vsel %vm1007, 0.0, %v1065
        %v1089 = vsel %vm1008, 0.0, %v1064
        %v1090 = vsel %vm1009, 0.0, %v1063
        %v1091 = vsel %vm1010, 0.0, %v1062
        %v1092 = vsel %vm1011, 0.0, %v1061
        %v1093 = vrot.slane %v531, 1
        %v1094 = vrot.slane %v532, 1
        %v1095 = vrot.slane %v533, 1
        %v1096 = vrot.slane %v534, 1
        %v1097 = vrot.slane %v535, 1
        %v1098 = vrot.slane %v536, 1
        %v1099 = vrot.slane %v537, 1
        %v1100 = vrot.slane %v538, 1
        %v1101 = vrot.slane %v539, 1
        %v1102 = vrot.slane %v540, 1
        %v1103 = vrot.slane %v541, 1
        %v1104 = vrot.slane %v542, 1
        %v1105 = vrot.slane %v543, 1
        %v1106 = vrot.slane %v544, 1
        %v1107 = vrot.slane %v545, 1
        %v1108 = vrot.slane %v546, 1
        %vm1109 = vcmp.lt.s32.totalorder %v548, 7
        %v1110 = vsel %vm1109, %v1107, %v1108
        %v1111 = vsel %vm1109, %v1106, %v1107
        %v1112 = vsel %vm1109, %v1105, %v1106
        %v1113 = vsel %vm1109, %v1104, %v1105
        %v1114 = vsel %vm1109, %v1103, %v1104
        %v1115 = vsel %vm1109, %v1102, %v1103
        %v1116 = vsel %vm1109, %v1101, %v1102
        %v1117 = vsel %vm1109, %v1100, %v1101
        %v1118 = vsel %vm1109, %v1099, %v1100
        %v1119 = vsel %vm1109, %v1098, %v1099
        %v1120 = vsel %vm1109, %v1097, %v1098
        %v1121 = vsel %vm1109, %v1096, %v1097
        %v1122 = vsel %vm1109, %v1095, %v1096
        %v1123 = vsel %vm1109, %v1094, %v1095
        %v1124 = vsel %vm1109, %v1093, %v1094
        %v1125 = vsel %vm1109, %v1108, %v1093
        %v1126 = vsel %vm1028, 0.0, %v1124
        %v1127 = vsel %vm1029, 0.0, %v1123
        %v1128 = vsel %vm1030, 0.0, %v1122
        %v1129 = vsel %vm1031, 0.0, %v1121
        %v1130 = vsel %vm1032, 0.0, %v1120
        %v1131 = vsel %vm1033, 0.0, %v1119
        %v1132 = vsel %vm1034, 0.0, %v1118
        %v1133 = vsel %vm1035, 0.0, %v1117
        %v1134 = vsel %vm1036, 0.0, %v1116
        %v1135 = vsel %vm1037, 0.0, %v1115
        %v1136 = vsel %vm1038, 0.0, %v1114
        %v1137 = vsel %vm1039, 0.0, %v1113
        %v1138 = vsel %vm1040, 0.0, %v1112
        %v1139 = vsel %vm1041, 0.0, %v1111
        %v1140 = vsel %vm1042, 0.0, %v1110
        %v1141 = vsel %vm1043, 0.0, %v1125
        %v1142 = vld [vmem:[%s3] sm:$0xff]
        %v1143 = vld [vmem:[%s3 + $0x8] sm:$0xff]
        %v1144 = vld [vmem:[%s3 + $0x10] sm:$0xff]
        %v1145 = vld [vmem:[%s3 + $0x18] sm:$0xff]
        %v1146 = vld [vmem:[%s3 + $0x20] sm:$0xff]
        %v1147 = vld [vmem:[%s3 + $0x28] sm:$0xff]
        %v1148 = vld [vmem:[%s3 + $0x30] sm:$0xff]
        %v1149 = vld [vmem:[%s3 + $0x38] sm:$0xff]
        %v1150 = vld [vmem:[%s3 + $0x40] sm:$0xff]
        %v1151 = vld [vmem:[%s3 + $0x48] sm:$0xff]
        %v1152 = vld [vmem:[%s3 + $0x50] sm:$0xff]
        %v1153 = vld [vmem:[%s3 + $0x58] sm:$0xff]
        %v1154 = vld [vmem:[%s3 + $0x60] sm:$0xff]
        %v1155 = vld [vmem:[%s3 + $0x68] sm:$0xff]
        %v1156 = vld [vmem:[%s3 + $0x70] sm:$0xff]
        %v1157 = vld [vmem:[%s3 + $0x78] sm:$0xff]
        %v1158 = vld [vmem:[%s3 + $0x80] sm:$0xff]
        %v1159 = vld [vmem:[%s3 + $0x88] sm:$0xff]
        %v1160 = vld [vmem:[%s3 + $0x90] sm:$0xff]
        %v1161 = vld [vmem:[%s3 + $0x98] sm:$0xff]
        %v1162 = vld [vmem:[%s3 + $0xa0] sm:$0xff]
        %v1163 = vld [vmem:[%s3 + $0xa8] sm:$0xff]
        %v1164 = vld [vmem:[%s3 + $0xb0] sm:$0xff]
        %v1165 = vld [vmem:[%s3 + $0xb8] sm:$0xff]
        %v1166 = vld [vmem:[%s3 + $0xc0] sm:$0xff]
        %v1167 = vld [vmem:[%s3 + $0xc8] sm:$0xff]
        %v1168 = vld [vmem:[%s3 + $0xd0] sm:$0xff]
        %v1169 = vld [vmem:[%s3 + $0xd8] sm:$0xff]
        %v1170 = vld [vmem:[%s3 + $0xe0] sm:$0xff]
        %v1171 = vld [vmem:[%s3 + $0xe8] sm:$0xff]
        %v1172 = vld [vmem:[%s3 + $0xf0] sm:$0xff]
        %v1173 = vld [vmem:[%s3 + $0xf8] sm:$0xff]
        %v1174 = vld [vmem:[%s3 + $0x100] sm:$0xff]
        %v1175 = vld [vmem:[%s3 + $0x108] sm:$0xff]
        %v1176 = vld [vmem:[%s3 + $0x110] sm:$0xff]
        %v1177 = vld [vmem:[%s3 + $0x118] sm:$0xff]
        %v1178 = vld [vmem:[%s3 + $0x120] sm:$0xff]
        %v1179 = vld [vmem:[%s3 + $0x128] sm:$0xff]
        %v1180 = vld [vmem:[%s3 + $0x130] sm:$0xff]
        %v1181 = vld [vmem:[%s3 + $0x138] sm:$0xff]
        %v1182 = vld [vmem:[%s3 + $0x140] sm:$0xff]
        %v1183 = vld [vmem:[%s3 + $0x148] sm:$0xff]
        %v1184 = vld [vmem:[%s3 + $0x150] sm:$0xff]
        %v1185 = vld [vmem:[%s3 + $0x158] sm:$0xff]
        %v1186 = vld [vmem:[%s3 + $0x160] sm:$0xff]
        %v1187 = vld [vmem:[%s3 + $0x168] sm:$0xff]
        %v1188 = vld [vmem:[%s3 + $0x170] sm:$0xff]
        %v1189 = vld [vmem:[%s3 + $0x178] sm:$0xff]
        %v1190 = vld [vmem:[%s4] sm:$0x1]
        %v1192 = vlaneseq
        %v1193 = vshrl.u32 %v1192, 7
        %v1194 = vsub.s32 0, %v1193
        %v1195 = vrot.slane %v1190, %v1194
        %1197 = vmatprep.subr.mxu0 0.0
        %1198 = vmatpush1.msra.mxu0 %v1157
        %1199 = vmatprep.subr.mxu0 0.0
        %1200 = vmatpush1.msra.mxu0 %v1156
        %1201 = vmatprep.subr.mxu0 0.0
        %1202 = vmatpush1.msra.mxu0 %v1155
        %1203 = vmatprep.subr.mxu0 0.0
        %1204 = vmatpush1.msra.mxu0 %v1154
        %1205 = vmatprep.subr.mxu0 0.0
        %1206 = vmatpush1.msra.mxu0 %v1153
        %1207 = vmatprep.subr.mxu0 0.0
        %1208 = vmatpush1.msra.mxu0 %v1152
        %1209 = vmatprep.subr.mxu0 0.0
        %1210 = vmatpush1.msra.mxu0 %v1151
        %1211 = vmatprep.subr.mxu0 0.0
        %1212 = vmatpush1.msra.mxu0 %v1150
        %1213 = vmatprep.subr.mxu0 0.0
        %1214 = vmatpush1.msra.mxu0 %v1149
        %1215 = vmatprep.subr.mxu0 0.0
        %1216 = vmatpush1.msra.mxu0 %v1148
        %1217 = vmatprep.subr.mxu0 0.0
        %1218 = vmatpush1.msra.mxu0 %v1147
        %1219 = vmatprep.subr.mxu0 0.0
        %1220 = vmatpush1.msra.mxu0 %v1146
        %1221 = vmatprep.subr.mxu0 0.0
        %1222 = vmatpush1.msra.mxu0 %v1145
        %1223 = vmatprep.subr.mxu0 0.0
        %1224 = vmatpush1.msra.mxu0 %v1144
        %1225 = vmatprep.subr.mxu0 0.0
        %1226 = vmatpush1.msra.mxu0 %v1143
        %1227 = vmatprep.subr.mxu0 0.0
        %1228 = vmatpush1.msra.mxu0 %v1142
        %1229 = vmatprep.subr.mxu0 0.0
        %1230 = vmatpush2.msra.mxu0 %v1173
        %1231 = vmatprep.subr.mxu0 0.0
        %1232 = vmatpush2.msra.mxu0 %v1172
        %1233 = vmatprep.subr.mxu0 0.0
        %1234 = vmatpush2.msra.mxu0 %v1171
        %1235 = vmatprep.subr.mxu0 0.0
        %1236 = vmatpush2.msra.mxu0 %v1170
        %1237 = vmatprep.subr.mxu0 0.0
        %1238 = vmatpush2.msra.mxu0 %v1169
        %1239 = vmatprep.subr.mxu0 0.0
        %1240 = vmatpush2.msra.mxu0 %v1168
        %1241 = vmatprep.subr.mxu0 0.0
        %1242 = vmatpush2.msra.mxu0 %v1167
        %1243 = vmatprep.subr.mxu0 0.0
        %1244 = vmatpush2.msra.mxu0 %v1166
        %1245 = vmatprep.subr.mxu0 0.0
        %1246 = vmatpush2.msra.mxu0 %v1165
        %1247 = vmatprep.subr.mxu0 0.0
        %1248 = vmatpush2.msra.mxu0 %v1164
        %1249 = vmatprep.subr.mxu0 0.0
        %1250 = vmatpush2.msra.mxu0 %v1163
        %1251 = vmatprep.subr.mxu0 0.0
        %1252 = vmatpush2.msra.mxu0 %v1162
        %1253 = vmatprep.subr.mxu0 0.0
        %1254 = vmatpush2.msra.mxu0 %v1161
        %1255 = vmatprep.subr.mxu0 0.0
        %1256 = vmatpush2.msra.mxu0 %v1160
        %1257 = vmatprep.subr.mxu0 0.0
        %1258 = vmatpush2.msra.mxu0 %v1159
        %1259 = vmatprep.subr.mxu0 0.0
        %1260 = vmatpush2.msra.mxu0 %v1158
        %1261 = vmatprep.mubr.f32.mxu0 %v531
        %1262 = vmatmul.mubr.f32.gmra.mxu0 %v1077
        %v1263 = vpop.f32.mrf.mxu0
        %v1264 = vadd.f32 %v1195, %v1263
        %v1265 = vpop.f32.mrf.mxu0
        %1266 = vmatprep.mubr.f32.mxu0 %v532
        %1267 = vmatmul.mubr.f32.gmra.mxu0 %v1078
        %v1268 = vpop.f32.mrf.mxu0
        %v1269 = vadd.f32 %v1195, %v1268
        %v1270 = vpop.f32.mrf.mxu0
        %1271 = vmatprep.mubr.f32.mxu0 %v533
        %1272 = vmatmul.mubr.f32.gmra.mxu0 %v1079
        %v1273 = vpop.f32.mrf.mxu0
        %v1274 = vadd.f32 %v1195, %v1273
        %v1275 = vpop.f32.mrf.mxu0
        %1276 = vmatprep.mubr.f32.mxu0 %v534
        %1277 = vmatmul.mubr.f32.gmra.mxu0 %v1080
        %v1278 = vpop.f32.mrf.mxu0
        %v1279 = vadd.f32 %v1195, %v1278
        %v1280 = vpop.f32.mrf.mxu0
        %1281 = vmatprep.mubr.f32.mxu0 %v535
        %1282 = vmatmul.mubr.f32.gmra.mxu0 %v1081
        %v1283 = vpop.f32.mrf.mxu0
        %v1284 = vadd.f32 %v1195, %v1283
        %v1285 = vpop.f32.mrf.mxu0
        %1286 = vmatprep.mubr.f32.mxu0 %v536
        %1287 = vmatmul.mubr.f32.gmra.mxu0 %v1082
        %v1288 = vpop.f32.mrf.mxu0
        %v1289 = vadd.f32 %v1195, %v1288
        %v1290 = vpop.f32.mrf.mxu0
        %1291 = vmatprep.mubr.f32.mxu0 %v537
        %1292 = vmatmul.mubr.f32.gmra.mxu0 %v1083
        %v1293 = vpop.f32.mrf.mxu0
        %v1294 = vadd.f32 %v1195, %v1293
        %v1295 = vpop.f32.mrf.mxu0
        %1296 = vmatprep.mubr.f32.mxu0 %v538
        %1297 = vmatmul.mubr.f32.gmra.mxu0 %v1084
        %v1298 = vpop.f32.mrf.mxu0
        %v1299 = vadd.f32 %v1195, %v1298
        %v1300 = vpop.f32.mrf.mxu0
        %1301 = vmatprep.mubr.f32.mxu0 %v539
        %1302 = vmatmul.mubr.f32.gmra.mxu0 %v1085
        %v1303 = vpop.f32.mrf.mxu0
        %v1304 = vadd.f32 %v1195, %v1303
        %v1305 = vpop.f32.mrf.mxu0
        %1306 = vmatprep.mubr.f32.mxu0 %v540
        %1307 = vmatmul.mubr.f32.gmra.mxu0 %v1086
        %v1308 = vpop.f32.mrf.mxu0
        %v1309 = vadd.f32 %v1195, %v1308
        %v1310 = vpop.f32.mrf.mxu0
        %1311 = vmatprep.mubr.f32.mxu0 %v541
        %1312 = vmatmul.mubr.f32.gmra.mxu0 %v1087
        %v1313 = vpop.f32.mrf.mxu0
        %v1314 = vadd.f32 %v1195, %v1313
        %v1315 = vpop.f32.mrf.mxu0
        %1316 = vmatprep.mubr.f32.mxu0 %v542
        %1317 = vmatmul.mubr.f32.gmra.mxu0 %v1088
        %v1318 = vpop.f32.mrf.mxu0
        %v1319 = vadd.f32 %v1195, %v1318
        %v1320 = vpop.f32.mrf.mxu0
        %1321 = vmatprep.mubr.f32.mxu0 %v543
        %1322 = vmatmul.mubr.f32.gmra.mxu0 %v1089
        %v1323 = vpop.f32.mrf.mxu0
        %v1324 = vadd.f32 %v1195, %v1323
        %v1325 = vpop.f32.mrf.mxu0
        %1326 = vmatprep.mubr.f32.mxu0 %v544
        %1327 = vmatmul.mubr.f32.gmra.mxu0 %v1090
        %v1328 = vpop.f32.mrf.mxu0
        %v1329 = vadd.f32 %v1195, %v1328
        %v1330 = vpop.f32.mrf.mxu0
        %1331 = vmatprep.mubr.f32.mxu0 %v545
        %1332 = vmatmul.mubr.f32.gmra.mxu0 %v1091
        %v1333 = vpop.f32.mrf.mxu0
        %v1334 = vadd.f32 %v1195, %v1333
        %v1335 = vpop.f32.mrf.mxu0
        %1336 = vmatprep.mubr.f32.mxu0 %v546
        %1337 = vmatmul.mubr.f32.gmra.mxu0 %v1092
        %v1338 = vpop.f32.mrf.mxu0
        %v1339 = vadd.f32 %v1195, %v1338
        %v1340 = vpop.f32.mrf.mxu0
        %1341 = vdwg.mxu0
        %1342 = vmatprep.subr.mxu0 0.0
        %1343 = vmatpush1.msra.mxu0 %v1189
        %1344 = vmatprep.subr.mxu0 0.0
        %1345 = vmatpush1.msra.mxu0 %v1188
        %1346 = vmatprep.subr.mxu0 0.0
        %1347 = vmatpush1.msra.mxu0 %v1187
        %1348 = vmatprep.subr.mxu0 0.0
        %1349 = vmatpush1.msra.mxu0 %v1186
        %1350 = vmatprep.subr.mxu0 0.0
        %1351 = vmatpush1.msra.mxu0 %v1185
        %1352 = vmatprep.subr.mxu0 0.0
        %1353 = vmatpush1.msra.mxu0 %v1184
        %1354 = vmatprep.subr.mxu0 0.0
        %1355 = vmatpush1.msra.mxu0 %v1183
        %1356 = vmatprep.subr.mxu0 0.0
        %1357 = vmatpush1.msra.mxu0 %v1182
        %1358 = vmatprep.subr.mxu0 0.0
        %1359 = vmatpush1.msra.mxu0 %v1181
        %1360 = vmatprep.subr.mxu0 0.0
        %1361 = vmatpush1.msra.mxu0 %v1180
        %1362 = vmatprep.subr.mxu0 0.0
        %1363 = vmatpush1.msra.mxu0 %v1179
        %1364 = vmatprep.subr.mxu0 0.0
        %1365 = vmatpush1.msra.mxu0 %v1178
        %1366 = vmatprep.subr.mxu0 0.0
        %1367 = vmatpush1.msra.mxu0 %v1177
        %1368 = vmatprep.subr.mxu0 0.0
        %1369 = vmatpush1.msra.mxu0 %v1176
        %1370 = vmatprep.subr.mxu0 0.0
        %1371 = vmatpush1.msra.mxu0 %v1175
        %1372 = vmatprep.subr.mxu0 0.0
        %1373 = vmatpush1.msra.mxu0 %v1174
        %1374 = vmatprep.subr.mxu0 0.0
        %1375 = vmatpush2.msra.mxu0 0.0
        %1376 = vmatprep.subr.mxu0 0.0
        %1377 = vmatpush2.msra.mxu0 0.0
        %1378 = vmatprep.subr.mxu0 0.0
        %1379 = vmatpush2.msra.mxu0 0.0
        %1380 = vmatprep.subr.mxu0 0.0
        %1381 = vmatpush2.msra.mxu0 0.0
        %1382 = vmatprep.subr.mxu0 0.0
        %1383 = vmatpush2.msra.mxu0 0.0
        %1384 = vmatprep.subr.mxu0 0.0
        %1385 = vmatpush2.msra.mxu0 0.0
        %1386 = vmatprep.subr.mxu0 0.0
        %1387 = vmatpush2.msra.mxu0 0.0
        %1388 = vmatprep.subr.mxu0 0.0
        %1389 = vmatpush2.msra.mxu0 0.0
        %1390 = vmatprep.subr.mxu0 0.0
        %1391 = vmatpush2.msra.mxu0 0.0
        %1392 = vmatprep.subr.mxu0 0.0
        %1393 = vmatpush2.msra.mxu0 0.0
        %1394 = vmatprep.subr.mxu0 0.0
        %1395 = vmatpush2.msra.mxu0 0.0
        %1396 = vmatprep.subr.mxu0 0.0
        %1397 = vmatpush2.msra.mxu0 0.0
        %1398 = vmatprep.subr.mxu0 0.0
        %1399 = vmatpush2.msra.mxu0 0.0
        %1400 = vmatprep.subr.mxu0 0.0
        %1401 = vmatpush2.msra.mxu0 0.0
        %1402 = vmatprep.subr.mxu0 0.0
        %1403 = vmatpush2.msra.mxu0 0.0
        %1404 = vmatprep.subr.mxu0 0.0
        %1405 = vmatpush2.msra.mxu0 0.0
        %1406 = vmatprep.mubr.f32.mxu0 0.0
        %1407 = vmatmul.mubr.f32.gmra.mxu0 %v1126
        %v1408 = vpop.f32.mrf.mxu0
        %v1409 = vadd.f32 %v1264, %v1408
        %v1410 = vpop.f32.mrf.mxu0
        %1411 = vmatprep.mubr.f32.mxu0 0.0
        %1412 = vmatmul.mubr.f32.gmra.mxu0 %v1127
        %v1413 = vpop.f32.mrf.mxu0
        %v1414 = vadd.f32 %v1269, %v1413
        %v1415 = vpop.f32.mrf.mxu0
        %1416 = vmatprep.mubr.f32.mxu0 0.0
        %1417 = vmatmul.mubr.f32.gmra.mxu0 %v1128
        %v1418 = vpop.f32.mrf.mxu0
        %v1419 = vadd.f32 %v1274, %v1418
        %v1420 = vpop.f32.mrf.mxu0
        %1421 = vmatprep.mubr.f32.mxu0 0.0
        %1422 = vmatmul.mubr.f32.gmra.mxu0 %v1129
        %v1423 = vpop.f32.mrf.mxu0
        %v1424 = vadd.f32 %v1279, %v1423
        %v1425 = vpop.f32.mrf.mxu0
        %1426 = vmatprep.mubr.f32.mxu0 0.0
        %1427 = vmatmul.mubr.f32.gmra.mxu0 %v1130
        %v1428 = vpop.f32.mrf.mxu0
        %v1429 = vadd.f32 %v1284, %v1428
        %v1430 = vpop.f32.mrf.mxu0
        %1431 = vmatprep.mubr.f32.mxu0 0.0
        %1432 = vmatmul.mubr.f32.gmra.mxu0 %v1131
        %v1433 = vpop.f32.mrf.mxu0
        %v1434 = vadd.f32 %v1289, %v1433
        %v1435 = vpop.f32.mrf.mxu0
        %1436 = vmatprep.mubr.f32.mxu0 0.0
        %1437 = vmatmul.mubr.f32.gmra.mxu0 %v1132
        %v1438 = vpop.f32.mrf.mxu0
        %v1439 = vadd.f32 %v1294, %v1438
        %v1440 = vpop.f32.mrf.mxu0
        %1441 = vmatprep.mubr.f32.mxu0 0.0
        %1442 = vmatmul.mubr.f32.gmra.mxu0 %v1133
        %v1443 = vpop.f32.mrf.mxu0
        %v1444 = vadd.f32 %v1299, %v1443
        %v1445 = vpop.f32.mrf.mxu0
        %1446 = vmatprep.mubr.f32.mxu0 0.0
        %1447 = vmatmul.mubr.f32.gmra.mxu0 %v1134
        %v1448 = vpop.f32.mrf.mxu0
        %v1449 = vadd.f32 %v1304, %v1448
        %v1450 = vpop.f32.mrf.mxu0
        %1451 = vmatprep.mubr.f32.mxu0 0.0
        %1452 = vmatmul.mubr.f32.gmra.mxu0 %v1135
        %v1453 = vpop.f32.mrf.mxu0
        %v1454 = vadd.f32 %v1309, %v1453
        %v1455 = vpop.f32.mrf.mxu0
        %1456 = vmatprep.mubr.f32.mxu0 0.0
        %1457 = vmatmul.mubr.f32.gmra.mxu0 %v1136
        %v1458 = vpop.f32.mrf.mxu0
        %v1459 = vadd.f32 %v1314, %v1458
        %v1460 = vpop.f32.mrf.mxu0
        %1461 = vmatprep.mubr.f32.mxu0 0.0
        %1462 = vmatmul.mubr.f32.gmra.mxu0 %v1137
        %v1463 = vpop.f32.mrf.mxu0
        %v1464 = vadd.f32 %v1319, %v1463
        %v1465 = vpop.f32.mrf.mxu0
        %1466 = vmatprep.mubr.f32.mxu0 0.0
        %1467 = vmatmul.mubr.f32.gmra.mxu0 %v1138
        %v1468 = vpop.f32.mrf.mxu0
        %v1469 = vadd.f32 %v1324, %v1468
        %v1470 = vpop.f32.mrf.mxu0
        %1471 = vmatprep.mubr.f32.mxu0 0.0
        %1472 = vmatmul.mubr.f32.gmra.mxu0 %v1139
        %v1473 = vpop.f32.mrf.mxu0
        %v1474 = vadd.f32 %v1329, %v1473
        %v1475 = vpop.f32.mrf.mxu0
        %1476 = vmatprep.mubr.f32.mxu0 0.0
        %1477 = vmatmul.mubr.f32.gmra.mxu0 %v1140
        %v1478 = vpop.f32.mrf.mxu0
        %v1479 = vadd.f32 %v1334, %v1478
        %v1480 = vpop.f32.mrf.mxu0
        %1481 = vmatprep.mubr.f32.mxu0 0.0
        %1482 = vmatmul.mubr.f32.gmra.mxu0 %v1141
        %v1483 = vpop.f32.mrf.mxu0
        %v1484 = vadd.f32 %v1339, %v1483
        %v1485 = vpop.f32.mrf.mxu0
        %1486 = vdwg.mxu0
        %v1487 = vadd.f32 %v1409, %v439
        %v1488 = vadd.f32 %v1414, %v445
        %v1489 = vadd.f32 %v1419, %v451
        %v1490 = vadd.f32 %v1424, %v457
        %v1491 = vadd.f32 %v1429, %v463
        %v1492 = vadd.f32 %v1434, %v469
        %v1493 = vadd.f32 %v1439, %v475
        %v1494 = vadd.f32 %v1444, %v481
        %v1495 = vadd.f32 %v1449, %v487
        %v1496 = vadd.f32 %v1454, %v493
        %v1497 = vadd.f32 %v1459, %v499
        %v1498 = vadd.f32 %v1464, %v505
        %v1499 = vadd.f32 %v1469, %v511
        %v1500 = vadd.f32 %v1474, %v517
        %v1501 = vadd.f32 %v1479, %v523
        %v1502 = vadd.f32 %v1484, %v529
        %v1503 = vmax.f32 %v1487, 0.0
        %v1504 = vmax.f32 %v1488, 0.0
        %v1505 = vmax.f32 %v1489, 0.0
        %v1506 = vmax.f32 %v1490, 0.0
        %v1507 = vmax.f32 %v1491, 0.0
        %v1508 = vmax.f32 %v1492, 0.0
        %v1509 = vmax.f32 %v1493, 0.0
        %v1510 = vmax.f32 %v1494, 0.0
        %v1511 = vmax.f32 %v1495, 0.0
        %v1512 = vmax.f32 %v1496, 0.0
        %v1513 = vmax.f32 %v1497, 0.0
        %v1514 = vmax.f32 %v1498, 0.0
        %v1515 = vmax.f32 %v1499, 0.0
        %v1516 = vmax.f32 %v1500, 0.0
        %v1517 = vmax.f32 %v1501, 0.0
        %v1518 = vmax.f32 %v1502, 0.0
        %1519 = vst [vmem:[%s220] sm:$0xff] %v1503
        %1520 = vst [vmem:[%s220 + $0x8] sm:$0xff] %v1504
        %1521 = vst [vmem:[%s220 + $0x10] sm:$0xff] %v1505
        %1522 = vst [vmem:[%s220 + $0x18] sm:$0xff] %v1506
        %1523 = vst [vmem:[%s220 + $0x20] sm:$0xff] %v1507
        %1524 = vst [vmem:[%s220 + $0x28] sm:$0xff] %v1508
        %1525 = vst [vmem:[%s220 + $0x30] sm:$0xff] %v1509
        %1526 = vst [vmem:[%s220 + $0x38] sm:$0xff] %v1510
        %1527 = vst [vmem:[%s220 + $0x40] sm:$0xff] %v1511
        %1528 = vst [vmem:[%s220 + $0x48] sm:$0xff] %v1512
        %1529 = vst [vmem:[%s220 + $0x50] sm:$0xff] %v1513
        %1530 = vst [vmem:[%s220 + $0x58] sm:$0xff] %v1514
        %1531 = vst [vmem:[%s220 + $0x60] sm:$0xff] %v1515
        %1532 = vst [vmem:[%s220 + $0x68] sm:$0xff] %v1516
        %1533 = vst [vmem:[%s220 + $0x70] sm:$0xff] %v1517
        %1534 = vst [vmem:[%s220 + $0x78] sm:$0xff] %v1518
        %s1535 = sand.u32 %s137, 1
        %s1536 = scalar_lea.sflag [#allocation3], %s1535
        %s1537 = sand.u32 %s137, 1
        %s1538 = smul.addr %s1537, 128
        %s1539 = scalar_lea.vmem [#allocation2], %s1538
        // Predicated region
        $region41: #{tpu_custom_call.1} parent=39 // pred_check
          %p1540 = pneg %p147
        $region42: #{tpu_custom_call.1} parent=39 // pred_check_branch
          %1542 = sbr.rel (%p1540) target = $region44
        $region43: #{tpu_custom_call.1} parent=39 // pred_region
          %s1543 = smul.u32 16, %s19
          %s1545 = ssub.s32 2048, 2048
          %1546 = vsyncadd %s1536, %s1545
          %s1547 = smul.addr %s1543, 128
          %s1548 = scalar_lea.hbm %s5, %s1547
          %s1549 = sshll.u32 %s1539, 4
          %s1550 = int_to_ptr.vmem [resolvable:$true] %s1549
          %1555 = dma.vmem_to_hbm [thread:$0]  %s1550, 2048, %s1548, %s1536, 128, 128, 8
        $region44: #{tpu_custom_call.1} parent=39 // pred_fallthru
          _
      $region40: #{tpu_custom_call.1} parent=5 // pred_fallthru
        _
      %p1556 = scmp.le.s32.totalorder 2, %s14
      // Predicated region
      $region45: #{tpu_custom_call.1} parent=5 // pred_check
        %p1557 = pneg %p1556
      $region46: #{tpu_custom_call.1} parent=5 // pred_check_branch
        %1559 = sbr.rel (%p1557) target = $region48
      $region47: #{tpu_custom_call.1} parent=5 // pred_region
        %s1560 = ssub.s32 %s14, 2
        // Predicated region
        $region49: #{tpu_custom_call.1} parent=47 // pred_check
          %p1561 = pneg %p153
        $region50: #{tpu_custom_call.1} parent=47 // pred_check_branch
          %1563 = sbr.rel (%p1561) target = $region52
        $region51: #{tpu_custom_call.1} parent=47 // pred_region
          %s1564 = sand.u32 %s138, 1
          %s1565 = scalar_lea.sflag [#allocation3], %s1564
          %s1566 = sand.u32 %s138, 1
          %s1567 = smul.addr %s1566, 128
          %s1568 = scalar_lea.vmem [#allocation2], %s1567
          %1569 = dma.done %s1565, 2048
        $region52: #{tpu_custom_call.1} parent=47 // pred_fallthru
          _
      $region48: #{tpu_custom_call.1} parent=5 // pred_fallthru
        _
    $region6: #{tpu_custom_call.1} parent=1 // loop_footer
      %s18 = sadd.s32 1, %s14
    $region7: #{tpu_custom_call.1} parent=1 // loop_footer_branch
      %13 = sbr.rel target = $region3
    $region8: #{tpu_custom_call.1} parent=1 // loop_exit
      _
    %1570 = vsyncpa [#allocation3], 1
    %s1571 = scalar_lea.sflag [#allocation3], 1
    %1572 = vsyncpa %s1571, 1

</llo_original>
